<compile_context>
chip_gen: v5e
topology: v5e:2x2
jax: 0.10.0
libtpu: 0.0.40
codegen_flags: <defaults>
</compile_context>

<pallas_src>
import math
import numpy as np

import jax
import jax.numpy as jnp
from jax import lax
from jax.experimental import pallas as pl
from jax.experimental.pallas import tpu as pltpu

FEATURE_DIM = 32


# --------------------------------------------------------------------------
# Parameter initialization (deterministic, synthetic), already branch-merged
# --------------------------------------------------------------------------
def _blockdiag(mats):
    rows = sum(a.shape[0] for a in mats)
    cols = sum(a.shape[1] for a in mats)
    out = jnp.zeros((rows, cols), jnp.float32)
    r = c = 0
    for a in mats:
        out = out.at[r:r + a.shape[0], c:c + a.shape[1]].set(a)
        r += a.shape[0]
        c += a.shape[1]
    return out


def init_params(key, m=7, n=7, in_mult=5, out_mult=2, heads=2):
    E = FEATURE_DIM
    H = m * m
    keys = iter(jax.random.split(key, 128))

    def rand(shape, s=0.05):
        return jax.random.normal(next(keys), shape, jnp.float32) * s

    def zeros(shape):
        return jnp.zeros(shape, jnp.float32)

    def mlp_w(dims):
        return [(rand((dims[i], dims[i + 1])), zeros((1, dims[i + 1])))
                for i in range(len(dims) - 1)]

    W = {}

    # --- SharedFeatureExtractor: (m + 8 ctx) -> [Linear128, LN, GELU] x4 -> Linear E
    w0, b0 = rand((m + 8, 128)), zeros((1, 128))
    W['sfe0_w'] = w0[:m]                 # context one-hot folded into a per-role bias
    W['sfe0_rb8'] = w0[m:] + b0          # (8, 128); expanded to (8B, 128) at build time
    W['sfe0_g'] = jnp.ones((1, 128), jnp.float32)
    W['sfe0_be'] = zeros((1, 128))
    for i in (1, 2, 3):
        W[f'sfe{i}_w'] = rand((128, 128))
        W[f'sfe{i}_b'] = zeros((1, 128))
        W[f'sfe{i}_g'] = jnp.ones((1, 128), jnp.float32)
        W[f'sfe{i}_be'] = zeros((1, 128))
    W['sfe4_w'] = rand((128, E))
    W['sfe4_b'] = zeros((1, E))

    # --- fusion attention: per-head Q/K/V/out projections merged into (E,E) mats
    for nm in ('q', 'k', 'v', 'o'):
        W[f'attn_w{nm}'] = rand((E, E))
        W[f'attn_b{nm}'] = zeros((1, E))

    # --- bb3d heads (x/z deep, y/wlh shallow); first layers merged, deep layers
    #     block-diagonal, final layers fused into (., m) residual projections.
    bx = mlp_w([E, 256, 128, 64, 1])
    bz = mlp_w([E, 256, 128, 64, 1])
    by = mlp_w([E, 128, 64, 1])
    bw = mlp_w([E, 128, 64, 3])
    W['bb_w1'] = jnp.concatenate([bx[0][0], bz[0][0], by[0][0], bw[0][0]], axis=1)
    W['bb_b1'] = jnp.concatenate([bx[0][1], bz[0][1], by[0][1], bw[0][1]], axis=1)
    W['bb_xz2_w'] = _blockdiag([bx[1][0], bz[1][0]])
    W['bb_xz2_b'] = jnp.concatenate([bx[1][1], bz[1][1]], axis=1)
    W['bb_xz3_w'] = _blockdiag([bx[2][0], bz[2][0]])
    W['bb_xz3_b'] = jnp.concatenate([bx[2][1], bz[2][1]], axis=1)
    W['bb_yw2_w'] = _blockdiag([by[1][0], bw[1][0]])
    W['bb_yw2_b'] = jnp.concatenate([by[1][1], bw[1][1]], axis=1)
    # residual slots [x, y, z, w, l, h, ry]; reference deliberately routes
    # bb3d['y'] -> state slot 0 and bb3d['x'] -> state slot 1 (kept here).
    fxz = jnp.zeros((128, m), jnp.float32)
    fxz = fxz.at[0:64, 1].set(bx[3][0][:, 0])      # deep 'x' branch -> slot 1
    fxz = fxz.at[64:128, 2].set(bz[3][0][:, 0])    # 'z' branch      -> slot 2
    W['bb_fxz7'] = fxz
    fyw = jnp.zeros((128, m), jnp.float32)
    fyw = fyw.at[0:64, 0].set(by[2][0][:, 0])      # shallow 'y'     -> slot 0
    fyw = fyw.at[64:128, 3:6].set(bw[2][0])        # 'wlh'           -> slots 3:5
    W['bb_fyw7'] = fyw
    rbias = jnp.zeros((1, m), jnp.float32)
    rbias = rbias.at[0, 0].set(by[2][1][0, 0])
    rbias = rbias.at[0, 1].set(bx[3][1][0, 0])
    rbias = rbias.at[0, 2].set(bz[3][1][0, 0])
    rbias = rbias.at[0, 3:6].set(bw[2][1][0, :])

    # --- ry branches (current / previous / residual) merged block-diagonally + ry_layer
    rc = mlp_w([1, 128, 64, E])
    rp = mlp_w([1, 128, 64, E])
    rr = mlp_w([1, 128, 64, E])
    W['ry_w1'] = _blockdiag([rc[0][0], rp[0][0], rr[0][0]])        # (3, 384)
    W['ry_b1'] = jnp.concatenate([rc[0][1], rp[0][1], rr[0][1]], axis=1)
    W['ry_w2'] = _blockdiag([rc[1][0], rp[1][0], rr[1][0]])        # (384, 192)
    W['ry_b2'] = jnp.concatenate([rc[1][1], rp[1][1], rr[1][1]], axis=1)
    W['ry_w3'] = _blockdiag([rc[2][0], rp[2][0], rr[2][0]])        # (192, 96)
    W['ry_b3'] = jnp.concatenate([rc[2][1], rp[2][1], rr[2][1]], axis=1)
    bn_scale = 1.0 / math.sqrt(1.0 + 1e-5)                         # eval BatchNorm folded
    W['ry_hw1'] = rand((3 * E, 128)) * bn_scale
    W['ry_hb1'] = zeros((1, 128))
    W['ry_hw2'] = rand((128, 64))
    W['ry_hb2'] = zeros((1, 64))
    hw3, hb3 = rand((64, 1)), zeros((1, 1))
    W['ry_f7'] = jnp.zeros((64, m), jnp.float32).at[:, 6].set(hw3[:, 0])
    W['resid_b'] = rbias.at[0, 6].set(hb3[0, 0])

    # --- Kalman-gain FC / GRU stack (GRU gates merged along output dim: [r|z|n])
    def add_gru(prefix, in_dims):
        for idx, d in enumerate(in_dims):
            W[f'{prefix}_wi{idx}'] = rand((d, 3 * H))
        W[f'{prefix}_wh'] = rand((H, 3 * H))
        W[f'{prefix}_bi'] = zeros((1, 3 * H))
        W[f'{prefix}_bh'] = zeros((1, 3 * H))

    add_gru('gru_q', [m * in_mult])                 # input: out_FC5 (35)
    add_gru('gru_sig', [H, m * in_mult])            # inputs: [h_Q (49), out_FC6 (35)]
    add_gru('gru_s', [n * n, 2 * n * in_mult])      # inputs: [out_FC1 (49), out_FC7 (70)]

    d_hid2 = (H + n * n) * out_mult
    d_out2 = n * m
    W['fc1_w'] = rand((H, n * n)); W['fc1_b'] = zeros((1, n * n))
    W['fc2_w1a'] = rand((H, d_hid2)); W['fc2_w1b'] = rand((n * n, d_hid2))
    W['fc2_b1'] = zeros((1, d_hid2))
    W['fc2_w2'] = rand((d_hid2, d_out2)); W['fc2_b2'] = zeros((1, d_out2))
    W['fc3_wa'] = rand((n * n, H)); W['fc3_wb'] = rand((d_out2, H)); W['fc3_b'] = zeros((1, H))
    W['fc4_wa'] = rand((H, H)); W['fc4_wb'] = rand((H, H)); W['fc4_b'] = zeros((1, H))
    W['fc5_w'] = rand((m, m * in_mult)); W['fc5_b'] = zeros((1, m * in_mult))
    W['fc6_w'] = rand((m, m * in_mult)); W['fc6_b'] = zeros((1, m * in_mult))
    W['fc7_wa'] = rand((n, 2 * n * in_mult)); W['fc7_wb'] = rand((n, 2 * n * in_mult))
    W['fc7_b'] = zeros((1, 2 * n * in_mult))

    # TODO(synk): p_cov_linear exists in the PyTorch module but is never used in
    # the forward pass, so it is omitted here.
    return {'weights': W,
            'uncertainty_scale': jnp.ones((1,), jnp.float32),
            'dims': dict(m=m, n=n, heads=heads)}


def init_state(key, P, B):
    """InitSequence + init_hidden_LKF (identity observation model, n == m)."""
    m, n = P['dims']['m'], P['dims']['n']
    M1_0 = jax.random.normal(key, (B, m), jnp.float32)
    prior_Q = (jnp.eye(m, dtype=jnp.float32) * 0.1).reshape(1, m * m)
    prior_Sigma = (jnp.eye(m, dtype=jnp.float32) * 0.1).reshape(1, m * m)
    prior_S = (jnp.eye(n, dtype=jnp.float32) * 0.1).reshape(1, n * n)
    return {'m1x_posterior': M1_0,
            'm1x_posterior_previous': M1_0 - 1e-6,
            'm1x_posterior_previous_previous': M1_0 - 2e-6,
            'm1x_prior_previous': M1_0 - 1e-6,
            'y_previous': M1_0,                       # h = identity
            'h_Q': jnp.tile(prior_Q, (B, 1)),
            'h_Sigma': jnp.tile(prior_Sigma, (B, 1)),
            'h_S': jnp.tile(prior_S, (B, 1))}


# --------------------------------------------------------------------------
# Weight packer: many small matrices -> a few lane-dense VMEM slabs
# --------------------------------------------------------------------------
class _Packer:
    def __init__(self):
        self._parts = {}
        self._cursor = {}
        self.offsets = {}     # name -> (slab_width, row_offset, rows, cols)

    def add(self, name, arr):
        arr = jnp.asarray(arr, jnp.float32)
        if arr.ndim == 1:
            arr = arr.reshape(1, -1)
        r, c = arr.shape
        width = max(128, ((c + 127) // 128) * 128)
        rows_pad = ((r + 7) // 8) * 8
        padded = jnp.zeros((rows_pad, width), jnp.float32).at[:r, :c].set(arr)
        self._parts.setdefault(width, [])
        self._cursor.setdefault(width, 0)
        self.offsets[name] = (width, self._cursor[width], r, c)
        self._parts[width].append(padded)
        self._cursor[width] += rows_pad

    def finalize(self):
        return {w: jnp.concatenate(parts, axis=0) for w, parts in self._parts.items()}


# --------------------------------------------------------------------------
# Fused T-step LKF forward (one pallas_call, grid over time, weights resident)
# --------------------------------------------------------------------------
def build_forward(P, B, T):
    dims = P['dims']
    m, n, heads = dims['m'], dims['n'], dims['heads']
    E = FEATURE_DIM
    assert E % heads == 0
    hd = E // heads
    R = 8 * B                   # 8 roles x batch, role-major rows
    H = m * m
    NG = 5                      # carried groups: x, x_prev, x_pp, x_prior_prev, y_prev
    OUTW = 256                  # lane-dense per-step output slab width
    used_w = 4 * m + 3 * H      # occupied output lanes

    sm_scale = 1.0 / math.sqrt(hd)
    gelu_c = math.sqrt(2.0 / math.pi)

    # ---------- trace-time constants (batch-dependent) ----------
    rows = np.arange(R)
    role = rows // B
    batch = rows % B
    # roles = SEL @ [x; x_prev; x_pp; x_prior_prev; y_prev] (linear role combinations)
    coeff = np.array([[1, 0, 0, 0, 0],      # x
                      [0, 1, 0, 0, 0],      # x_prev
                      [0, 0, 1, 0, 0],      # x_prev_prev
                      [1, -2, 1, 0, 0],     # second-order diff
                      [0, 0, 0, 1, 0],      # x_prior_prev
                      [1, -1, 0, 0, 0],     # residual
                      [0, 1, -1, 0, 0],     # residual_prev
                      [1, 0, 0, -1, 0]],    # residual (posterior - prior_prev)
                     np.float32)
    sel = np.zeros((R, NG * B), np.float32)
    for r_ in range(R):
        for g in range(NG):
            sel[r_, g * B + batch[r_]] = coeff[role[r_], g]
    attn_bias = np.where(batch[:, None] == batch[None, :], 0.0, -1e30).astype(np.float32)
    pool = (batch[None, :] == np.arange(B)[:, None]).astype(np.float32) / 8.0   # (B, R)
    tilemat = np.zeros((n, m * n), np.float32)      # dy[j] -> lane i*n + j
    for j in range(n):
        tilemat[j, np.arange(m) * n + j] = 1.0
    gsum = np.zeros((m * n, m), np.float32)         # sum each n-sized group -> row i
    for i in range(m):
        gsum[i * n:(i + 1) * n, i] = 1.0
    ry_sx = np.zeros((m, 3), np.float32)
    ry_sx[6, 0] = 1.0
    ry_sx[6, 2] = 1.0
    ry_sp = np.zeros((m, 3), np.float32)
    ry_sp[6, 1] = 1.0
    ry_sp[6, 2] = -1.0

    # ---------- pack every weight / constant into a few VMEM slabs ----------
    packer = _Packer()
    for name, arr in P['weights'].items():
        if name == 'sfe0_rb8':
            packer.add('sfe0_bias', jnp.repeat(arr, B, axis=0))     # (R, 128)
        else:
            packer.add(name, arr)
    packer.add('uscale', P['uncertainty_scale'].reshape(1, 1))
    for name, arr in (('sel', sel), ('attn_bias', attn_bias), ('pool', pool),
                      ('tilemat', tilemat), ('gsum', gsum),
                      ('ry_sx', ry_sx), ('ry_sp', ry_sp)):
        packer.add(name, jnp.asarray(arr))
    slabs = packer.finalize()
    offsets = packer.offsets
    slab_widths = sorted(slabs.keys())
    slab_list = [slabs[w] for w in slab_widths]
    n_slabs = len(slab_list)

    # ---------- the fused per-step kernel (grid axis = time) ----------
    def kernel(*refs):
        y_ref, xs0_ref, h0_ref = refs[:3]
        slab_ref = dict(zip(slab_widths, refs[3:3 + n_slabs]))
        out_ref = refs[3 + n_slabs]
        xs_scr = refs[3 + n_slabs + 1]
        h_scr = refs[3 + n_slabs + 2]

        def get(name):                      # static view into a packed slab (free)
            w, off, r, c = offsets[name]
            return slab_ref[w][off:off + r, 0:c]

        def dotf(a, b):
            return jnp.dot(a, b, preferred_element_type=jnp.float32)

        relu = lambda v: jnp.maximum(v, 0.0)

        t = pl.program_id(0)

        @pl.when(t == 0)
        def _():                            # load initial carried state into VMEM scratch
            xs_scr[...] = xs0_ref[...]
            h_scr[...] = h0_ref[...]

        xs = xs_scr[...]                    # (5B, m) carried state stack
        x = xs[0:B]
        x_prev = xs[B:2 * B]
        x_prior = xs[3 * B:4 * B]
        y_prev = xs[4 * B:5 * B]
        yv = y_ref[...]                     # (B, n) current observation
        hcat = h_scr[...]                   # (B, 3H) [h_Q | h_Sigma | h_S]
        hq_prev = hcat[:, 0:H]
        hsig_prev = hcat[:, H:2 * H]
        hs_prev = hcat[:, 2 * H:3 * H]

        # ---------------- step_prior ----------------
        roles = dotf(get('sel'), xs)                               # (R, m)

        def ln_gelu(v, g, be):
            mu = jnp.mean(v, axis=-1, keepdims=True)
            ms = jnp.mean(v * v, axis=-1, keepdims=True)
            v = (v - mu) * lax.rsqrt(ms - mu * mu + 1e-5) * g + be
            # TODO(synk): tanh-approx GELU (EUP); swap for exact erf if bit parity needed.
            return 0.5 * v * (1.0 + jnp.tanh(gelu_c * (v + 0.044715 * v * v * v)))

        h = dotf(roles, get('sfe0_w')) + get('sfe0_bias')          # ctx one-hot folded
        h = ln_gelu(h, get('sfe0_g'), get('sfe0_be'))
        for i in (1, 2, 3):
            h = dotf(h, get(f'sfe{i}_w')) + get(f'sfe{i}_b')
            h = ln_gelu(h, get(f'sfe{i}_g'), get(f'sfe{i}_be'))
        feats = dotf(h, get('sfe4_w')) + get('sfe4_b')             # (R, E)

        # fusion self-attention (merged head projections, block-diag batch mask)
        q_all = dotf(feats, get('attn_wq')) + get('attn_bq')
        k_all = dotf(feats, get('attn_wk')) + get('attn_bk')
        v_all = dotf(feats, get('attn_wv')) + get('attn_bv')
        wo = get('attn_wo')
        bias = get('attn_bias')
        attn = jnp.zeros((R, E), jnp.float32) + get('attn_bo')
        for hix in range(heads):
            lo, hi = hix * hd, (hix + 1) * hd
            q = q_all[:, lo:hi]
            k = k_all[:, lo:hi]
            v = v_all[:, lo:hi]
            s = lax.dot_general(q, k, (((1,), (1,)), ((), ())),
                                preferred_element_type=jnp.float32) * sm_scale + bias
            s = s - jnp.max(s, axis=-1, keepdims=True)
            p = jnp.exp(s)
            p = p * pl.reciprocal(jnp.sum(p, axis=-1, keepdims=True), approx=True)
            attn = attn + dotf(dotf(p, v), wo[lo:hi, :])
        fused = dotf(get('pool'), attn)                            # (B, E) mean over roles

        # bb3d heads
        h1 = relu(dotf(fused, get('bb_w1')) + get('bb_b1'))        # (B, 768)
        hxz = relu(dotf(h1[:, 0:512], get('bb_xz2_w')) + get('bb_xz2_b'))
        hxz = relu(dotf(hxz, get('bb_xz3_w')) + get('bb_xz3_b'))   # (B, 128) [x|z]
        hyw = relu(dotf(h1[:, 512:768], get('bb_yw2_w')) + get('bb_yw2_b'))  # (B,128) [y|wlh]

        # ry chain (inputs gathered via constant projections)
        ry_in = dotf(x, get('ry_sx')) + dotf(x_prev, get('ry_sp'))  # (B, 3)
        hr = relu(dotf(ry_in, get('ry_w1')) + get('ry_b1'))
        hr = relu(dotf(hr, get('ry_w2')) + get('ry_b2'))
        hr = relu(dotf(hr, get('ry_w3')) + get('ry_b3'))
        hr = relu(dotf(hr, get('ry_hw1')) + get('ry_hb1'))          # BatchNorm(eval) folded
        hr = relu(dotf(hr, get('ry_hw2')) + get('ry_hb2'))          # (B, 64)

        # residual via constant projections (no lane slicing / concat)
        resid = (dotf(hxz, get('bb_fxz7')) + dotf(hyw, get('bb_fyw7'))
                 + dotf(hr, get('ry_f7')) + get('resid_b'))         # (B, m)
        m1x_prior = x + resid
        m1y = m1x_prior

        # ---------------- step_KGain_est ----------------
        def l2n(v):
            nrm = jnp.sqrt(jnp.sum(v * v, axis=1, keepdims=True))
            return v / jnp.maximum(nrm, 1e-12)

        obs_diff = l2n(yv - y_prev)
        obs_innov_diff = l2n(yv - m1y)
        fw_evol_diff = l2n(x - x_prev)
        fw_update_diff = l2n(x - x_prior)

        def gru(gi, gh, hp):                 # merged [r|z|n] gate layout
            r = jax.nn.sigmoid(gi[:, 0:H] + gh[:, 0:H])
            z = jax.nn.sigmoid(gi[:, H:2 * H] + gh[:, H:2 * H])
            ng = jnp.tanh(gi[:, 2 * H:3 * H] + r * gh[:, 2 * H:3 * H])
            return (1.0 - z) * ng + z * hp

        out_fc5 = relu(dotf(fw_evol_diff, get('fc5_w')) + get('fc5_b'))
        h_q = gru(dotf(out_fc5, get('gru_q_wi0')) + get('gru_q_bi'),
                  dotf(hq_prev, get('gru_q_wh')) + get('gru_q_bh'), hq_prev)
        out_fc6 = relu(dotf(fw_update_diff, get('fc6_w')) + get('fc6_b'))
        h_sig = gru(dotf(h_q, get('gru_sig_wi0')) + dotf(out_fc6, get('gru_sig_wi1'))
                    + get('gru_sig_bi'),
                    dotf(hsig_prev, get('gru_sig_wh')) + get('gru_sig_bh'), hsig_prev)
        out_fc1 = relu(dotf(h_sig, get('fc1_w')) + get('fc1_b'))
        out_fc7 = relu(dotf(obs_diff, get('fc7_wa')) + dotf(obs_innov_diff, get('fc7_wb'))
                       + get('fc7_b'))
        h_s = gru(dotf(out_fc1, get('gru_s_wi0')) + dotf(out_fc7, get('gru_s_wi1'))
                  + get('gru_s_bi'),
                  dotf(hs_prev, get('gru_s_wh')) + get('gru_s_bh'), hs_prev)

        h2 = relu(dotf(h_sig, get('fc2_w1a')) + dotf(h_s, get('fc2_w1b')) + get('fc2_b1'))
        out_fc2 = relu(dotf(h2, get('fc2_w2')) + get('fc2_b2')) * get('uscale')
        out_fc3 = relu(dotf(h_s, get('fc3_wa')) + dotf(out_fc2, get('fc3_wb')) + get('fc3_b'))
        out_fc4 = relu(dotf(h_sig, get('fc4_wa')) + dotf(out_fc3, get('fc4_wb')) + get('fc4_b'))

        # ------ Kalman update: posterior = prior + view(out_fc2, (m, n)) @ dy ------
        # (row-major view: element i*n+j of out_fc2 is gain[i, j], same as torch .view)
        dy = yv - m1y
        dy_t = dotf(dy, get('tilemat'))
        inov = dotf(out_fc2 * dy_t, get('gsum'))          # (B, m)
        m1x_post = m1x_prior + inov

        # ------ single lane-dense output slab per step ------
        out_ref[:, 0:m] = m1x_post
        out_ref[:, m:2 * m] = m1x_prior
        out_ref[:, 2 * m:2 * m + H] = out_fc4             # Pcov / new h_Sigma
        out_ref[:, 2 * m + H:2 * m + 2 * H] = h_q
        out_ref[:, 2 * m + 2 * H:2 * m + 3 * H] = h_s
        out_ref[:, 2 * m + 3 * H:3 * m + 3 * H] = x       # -> next m1x_posterior_previous
        out_ref[:, 3 * m + 3 * H:4 * m + 3 * H] = x_prev  # -> next ..._previous_previous
        out_ref[:, used_w:OUTW] = jnp.zeros((B, OUTW - used_w), jnp.float32)

        # ------ carry recurrent state on-chip for the next time step ------
        xs_scr[...] = jnp.concatenate([m1x_post, x, x_prev, m1x_prior, yv], axis=0)
        h_scr[...] = jnp.concatenate([h_q, out_fc4, h_s], axis=1)

    slab_bytes = sum(int(np.prod(s.shape)) * 4 for s in slab_list)
    cost = pl.CostEstimate(
        flops=4_000_000 * T,
        transcendentals=12_000 * T,
        bytes_accessed=slab_bytes + T * B * (n + OUTW) * 4 + (NG * B * m + B * 3 * H) * 4)

    fused_call = pl.pallas_call(
        kernel,
        grid=(T,),
        in_specs=([pl.BlockSpec((None, B, n), lambda t: (t, 0, 0)),       # y_t
                   pl.BlockSpec((NG * B, m), lambda t: (0, 0)),           # initial state
                   pl.BlockSpec((B, 3 * H), lambda t: (0, 0))]            # initial GRU hiddens
                  + [pl.BlockSpec(s.shape, lambda t: (0, 0)) for s in slab_list]),
        out_specs=pl.BlockSpec((None, B, OUTW), lambda t: (t, 0, 0)),
        out_shape=jax.ShapeDtypeStruct((T, B, OUTW), jnp.float32),
        scratch_shapes=[pltpu.VMEM((NG * B, m), jnp.float32),
                        pltpu.VMEM((B, 3 * H), jnp.float32)],
        compiler_params=pltpu.CompilerParams(dimension_semantics=("arbitrary",)),
        cost_estimate=cost,
    )

    def forward(state, ys):
        """Run T fused LKF steps (ys: (T, B, n)); returns per-step outputs + new state."""
        xs0 = jnp.concatenate([state['m1x_posterior'],
                               state['m1x_posterior_previous'],
                               state['m1x_posterior_previous_previous'],
                               state['m1x_prior_previous'],
                               state['y_previous']], axis=0)               # (5B, m)
        h0 = jnp.concatenate([state['h_Q'], state['h_Sigma'], state['h_S']], axis=1)
        out = fused_call(ys, xs0, h0, *slab_list)                          # (T, B, 256)
        post = out[:, :, 0:m]
        prior = out[:, :, m:2 * m]
        pcov = out[:, :, 2 * m:2 * m + H]
        hq = out[:, :, 2 * m + H:2 * m + 2 * H]
        hs = out[:, :, 2 * m + 2 * H:2 * m + 3 * H]
        x_in = out[:, :, 2 * m + 3 * H:3 * m + 3 * H]
        xp_in = out[:, :, 3 * m + 3 * H:4 * m + 3 * H]
        last = T - 1
        new_state = {'m1x_posterior': post[last],
                     'm1x_posterior_previous': x_in[last],
                     'm1x_posterior_previous_previous': xp_in[last],
                     'm1x_prior_previous': prior[last],
                     'y_previous': ys[last],
                     'h_Q': hq[last], 'h_Sigma': pcov[last], 'h_S': hs[last]}
        predictions = post[..., None]          # (T, B, m, 1)
        state_priors = prior[..., None]        # (T, B, m, 1)
        Pcovs = pcov[:, None]                  # (T, 1, B, m*m) per-step (seq_len_input = 1)
        return predictions, state_priors, Pcovs, new_state

    return forward


# --------------------------------------------------------------------------
if __name__ == "__main__":
    key = jax.random.PRNGKey(0)
    k_params, k_state, k_y = jax.random.split(key, 3)

    B, m, n, T = 2, 7, 7, 4           # state (x, y, z, w, l, h, ry); identity obs model
    params = init_params(k_params, m=m, n=n, in_mult=5, out_mult=2, heads=2)
    state = init_state(k_state, params, B)
    ys = jax.random.normal(k_y, (T, B, n), jnp.float32)

    run = jax.jit(build_forward(params, B, T))

    preds, priors, pcovs, new_state = run(state, ys)
    jax.block_until_ready((preds, priors, pcovs))

    assert preds.shape == (T, B, m, 1)
    assert priors.shape == (T, B, m, 1)
    assert pcovs.shape == (T, 1, B, m * m)
    assert bool(jnp.all(jnp.isfinite(preds)))

    # second call continues from the carried filter state (recurrent round trip)
    preds2, _, _, _ = run(new_state, ys)
    jax.block_until_ready(preds2)
    assert bool(jnp.all(jnp.isfinite(preds2)))

    print("KERNEL_OK")
</pallas_src>

<mosaic_0001>
module attributes {stable_mosaic.version = 11 : i64} {
  func.func @kernel(%arg0: i32, %arg1: memref<1x2x7xf32, #tpu.memory_space<vmem>>, %arg2: memref<10x7xf32, #tpu.memory_space<vmem>>, %arg3: memref<2x147xf32, #tpu.memory_space<vmem>>, %arg4: memref<2784x128xf32, #tpu.memory_space<vmem>>, %arg5: memref<1512x256xf32, #tpu.memory_space<vmem>>, %arg6: memref<16x384xf32, #tpu.memory_space<vmem>>, %arg7: memref<40x768xf32, #tpu.memory_space<vmem>>, %arg8: memref<1x2x256xf32, #tpu.memory_space<vmem>>, %arg9: memref<10x7xf32, #tpu.memory_space<vmem>>, %arg10: memref<2x147xf32, #tpu.memory_space<vmem>>) attributes {dimension_semantics = [#tpu.dimension_semantics<arbitrary>], iteration_bounds = array<i64: 4>, scalar_prefetch = 0 : i64, scratch_operands = 2 : i64, tpu.core_type = #tpu.core_type<tc>, window_params = [{transform_indices = @transform_0, window_bounds = array<i64: 1, 2, 7>}, {pipeline_mode = #tpu.pipeline_mode<synchronous>, transform_indices = @transform_1, window_bounds = array<i64: 10, 7>}, {pipeline_mode = #tpu.pipeline_mode<synchronous>, transform_indices = @transform_2, window_bounds = array<i64: 2, 147>}, {pipeline_mode = #tpu.pipeline_mode<synchronous>, transform_indices = @transform_3, window_bounds = array<i64: 2784, 128>}, {pipeline_mode = #tpu.pipeline_mode<synchronous>, transform_indices = @transform_4, window_bounds = array<i64: 1512, 256>}, {pipeline_mode = #tpu.pipeline_mode<synchronous>, transform_indices = @transform_5, window_bounds = array<i64: 16, 384>}, {pipeline_mode = #tpu.pipeline_mode<synchronous>, transform_indices = @transform_6, window_bounds = array<i64: 40, 768>}, {transform_indices = @transform_7, window_bounds = array<i64: 1, 2, 256>}]} {
    %c0_i32 = arith.constant 0 : i32
    %0 = arith.cmpi eq, %arg0, %c0_i32 : i32
    %1 = arith.extui %0 : i1 to i32
    %c0_i32_0 = arith.constant 0 : i32
    %2 = arith.cmpi ne, %1, %c0_i32_0 : i32
    scf.if %2 {
      %c0_256 = arith.constant 0 : index
      %c0_257 = arith.constant 0 : index
      %592 = vector.load %arg2[%c0_256, %c0_257] : memref<10x7xf32, #tpu.memory_space<vmem>>, vector<10x7xf32>
      %c0_258 = arith.constant 0 : index
      %c0_259 = arith.constant 0 : index
      %593 = vector.load %arg9[%c0_258, %c0_259] : memref<10x7xf32, #tpu.memory_space<vmem>>, vector<10x7xf32>
      tpu.vector_store %arg9[%c0_258, %c0_259], %592 {strides = array<i32>} : memref<10x7xf32, #tpu.memory_space<vmem>>, vector<10x7xf32>,
      %c0_260 = arith.constant 0 : index
      %c0_261 = arith.constant 0 : index
      %594 = vector.load %arg3[%c0_260, %c0_261] : memref<2x147xf32, #tpu.memory_space<vmem>>, vector<2x147xf32>
      %c0_262 = arith.constant 0 : index
      %c0_263 = arith.constant 0 : index
      %595 = vector.load %arg10[%c0_262, %c0_263] : memref<2x147xf32, #tpu.memory_space<vmem>>, vector<2x147xf32>
      tpu.vector_store %arg10[%c0_262, %c0_263], %594 {strides = array<i32>} : memref<2x147xf32, #tpu.memory_space<vmem>>, vector<2x147xf32>,
    } else {
    }
    %c0 = arith.constant 0 : index
    %c0_1 = arith.constant 0 : index
    %3 = vector.load %arg9[%c0, %c0_1] : memref<10x7xf32, #tpu.memory_space<vmem>>, vector<10x7xf32>
    %4 = vector.extract_strided_slice %3 {offsets = [0, 0], sizes = [2, 7], strides = [1, 1]} : vector<10x7xf32> to vector<2x7xf32>
    %5 = vector.extract_strided_slice %3 {offsets = [2, 0], sizes = [2, 7], strides = [1, 1]} : vector<10x7xf32> to vector<2x7xf32>
    %6 = vector.extract_strided_slice %3 {offsets = [6, 0], sizes = [2, 7], strides = [1, 1]} : vector<10x7xf32> to vector<2x7xf32>
    %7 = vector.extract_strided_slice %3 {offsets = [8, 0], sizes = [2, 7], strides = [1, 1]} : vector<10x7xf32> to vector<2x7xf32>
    %c0_2 = arith.constant 0 : index
    %c0_3 = arith.constant 0 : index
    %c0_4 = arith.constant 0 : index
    %8 = vector.load %arg1[%c0_2, %c0_3, %c0_4] : memref<1x2x7xf32, #tpu.memory_space<vmem>>, vector<1x2x7xf32>
    %9 = vector.shape_cast %8 : vector<1x2x7xf32> to vector<2x7xf32>
    %c0_5 = arith.constant 0 : index
    %c0_6 = arith.constant 0 : index
    %10 = vector.load %arg10[%c0_5, %c0_6] : memref<2x147xf32, #tpu.memory_space<vmem>>, vector<2x147xf32>
    %11 = vector.extract_strided_slice %10 {offsets = [0, 0], sizes = [2, 49], strides = [1, 1]} : vector<2x147xf32> to vector<2x49xf32>
    %12 = vector.extract_strided_slice %10 {offsets = [0, 49], sizes = [2, 49], strides = [1, 1]} : vector<2x147xf32> to vector<2x49xf32>
    %13 = vector.extract_strided_slice %10 {offsets = [0, 98], sizes = [2, 49], strides = [1, 1]} : vector<2x147xf32> to vector<2x49xf32>
    %c2664 = arith.constant 2664 : index
    %c0_7 = arith.constant 0 : index
    %14 = vector.load %arg4[%c2664, %c0_7] : memref<2784x128xf32, #tpu.memory_space<vmem>>, vector<16x10xf32>
    %cst = arith.constant dense<0.000000e+00> : vector<16x7xf32>
    %15 = tpu.matmul %14, %3, %cst {dimension_numbers = #tpu.dot_dimension_numbers<[1], [0], [0], [1], [0, 0, 1, 1], [], []>} : vector<16x10xf32>, vector<10x7xf32>, vector<16x7xf32> -> vector<16x7xf32>
    %c0_8 = arith.constant 0 : index
    %c0_9 = arith.constant 0 : index
    %16 = vector.load %arg4[%c0_8, %c0_9] : memref<2784x128xf32, #tpu.memory_space<vmem>>, vector<7x128xf32>
    %cst_10 = arith.constant dense<0.000000e+00> : vector<16x128xf32>
    %17 = tpu.matmul %15, %16, %cst_10 {dimension_numbers = #tpu.dot_dimension_numbers<[1], [0], [0], [1], [0, 0, 1, 1], [], []>} : vector<16x7xf32>, vector<7x128xf32>, vector<16x128xf32> -> vector<16x128xf32>
    %c8 = arith.constant 8 : index
    %c0_11 = arith.constant 0 : index
    %18 = vector.load %arg4[%c8, %c0_11] : memref<2784x128xf32, #tpu.memory_space<vmem>>, vector<16x128xf32>
    %19 = arith.addf %17, %18 : vector<16x128xf32>
    %c24 = arith.constant 24 : index
    %c0_12 = arith.constant 0 : index
    %20 = vector.load %arg4[%c24, %c0_12] : memref<2784x128xf32, #tpu.memory_space<vmem>>, vector<1x128xf32>
    %c32 = arith.constant 32 : index
    %c0_13 = arith.constant 0 : index
    %21 = vector.load %arg4[%c32, %c0_13] : memref<2784x128xf32, #tpu.memory_space<vmem>>, vector<1x128xf32>
    %cst_14 = arith.constant dense<0.000000e+00> : vector<16xf32>
    %22 = vector.multi_reduction <add>, %19, %cst_14 [1] : vector<16x128xf32> to vector<16xf32>
    %23 = vector.shape_cast %22 : vector<16xf32> to vector<16x1xf32>
    %cst_15 = arith.constant 1.280000e+02 : f32
    %24 = vector.broadcast %cst_15 : f32 to vector<16x1xf32>
    %25 = arith.divf %23, %24 : vector<16x1xf32>
    %26 = arith.mulf %19, %19 : vector<16x128xf32>
    %cst_16 = arith.constant dense<0.000000e+00> : vector<16xf32>
    %27 = vector.multi_reduction <add>, %26, %cst_16 [1] : vector<16x128xf32> to vector<16xf32>
    %28 = vector.shape_cast %27 : vector<16xf32> to vector<16x1xf32>
    %cst_17 = arith.constant 1.280000e+02 : f32
    %29 = vector.broadcast %cst_17 : f32 to vector<16x1xf32>
    %30 = arith.divf %28, %29 : vector<16x1xf32>
    %31 = vector.broadcast %25 : vector<16x1xf32> to vector<16x128xf32>
    %32 = arith.subf %19, %31 : vector<16x128xf32>
    %33 = arith.mulf %25, %25 : vector<16x1xf32>
    %34 = arith.subf %30, %33 : vector<16x1xf32>
    %cst_18 = arith.constant 9.99999974E-6 : f32
    %35 = vector.broadcast %cst_18 : f32 to vector<16x1xf32>
    %36 = arith.addf %34, %35 : vector<16x1xf32>
    %37 = math.rsqrt %36 : vector<16x1xf32>
    %38 = vector.broadcast %37 : vector<16x1xf32> to vector<16x128xf32>
    %39 = arith.mulf %32, %38 : vector<16x128xf32>
    %40 = vector.broadcast %20 : vector<1x128xf32> to vector<16x128xf32>
    %41 = arith.mulf %39, %40 : vector<16x128xf32>
    %42 = vector.broadcast %21 : vector<1x128xf32> to vector<16x128xf32>
    %43 = arith.addf %41, %42 : vector<16x128xf32>
    %cst_19 = arith.constant 5.000000e-01 : f32
    %44 = vector.broadcast %cst_19 : f32 to vector<16x128xf32>
    %45 = arith.mulf %44, %43 : vector<16x128xf32>
    %cst_20 = arith.constant 4.471500e-02 : f32
    %46 = vector.broadcast %cst_20 : f32 to vector<16x128xf32>
    %47 = arith.mulf %46, %43 : vector<16x128xf32>
    %48 = arith.mulf %47, %43 : vector<16x128xf32>
    %49 = arith.mulf %48, %43 : vector<16x128xf32>
    %50 = arith.addf %43, %49 : vector<16x128xf32>
    %cst_21 = arith.constant 0.797884583 : f32
    %51 = vector.broadcast %cst_21 : f32 to vector<16x128xf32>
    %52 = arith.mulf %51, %50 : vector<16x128xf32>
    %53 = math.tanh %52 : vector<16x128xf32>
    %cst_22 = arith.constant 1.000000e+00 : f32
    %54 = vector.broadcast %cst_22 : f32 to vector<16x128xf32>
    %55 = arith.addf %54, %53 : vector<16x128xf32>
    %56 = arith.mulf %45, %55 : vector<16x128xf32>
    %c40 = arith.constant 40 : index
    %c0_23 = arith.constant 0 : index
    %57 = vector.load %arg4[%c40, %c0_23] : memref<2784x128xf32, #tpu.memory_space<vmem>>, vector<128x128xf32>
    %cst_24 = arith.constant dense<0.000000e+00> : vector<16x128xf32>
    %58 = tpu.matmul %56, %57, %cst_24 {dimension_numbers = #tpu.dot_dimension_numbers<[1], [0], [0], [1], [0, 0, 1, 1], [], []>} : vector<16x128xf32>, vector<128x128xf32>, vector<16x128xf32> -> vector<16x128xf32>
    %c168 = arith.constant 168 : index
    %c0_25 = arith.constant 0 : index
    %59 = vector.load %arg4[%c168, %c0_25] : memref<2784x128xf32, #tpu.memory_space<vmem>>, vector<1x128xf32>
    %60 = vector.broadcast %59 : vector<1x128xf32> to vector<16x128xf32>
    %61 = arith.addf %58, %60 : vector<16x128xf32>
    %c176 = arith.constant 176 : index
    %c0_26 = arith.constant 0 : index
    %62 = vector.load %arg4[%c176, %c0_26] : memref<2784x128xf32, #tpu.memory_space<vmem>>, vector<1x128xf32>
    %c184 = arith.constant 184 : index
    %c0_27 = arith.constant 0 : index
    %63 = vector.load %arg4[%c184, %c0_27] : memref<2784x128xf32, #tpu.memory_space<vmem>>, vector<1x128xf32>
    %cst_28 = arith.constant dense<0.000000e+00> : vector<16xf32>
    %64 = vector.multi_reduction <add>, %61, %cst_28 [1] : vector<16x128xf32> to vector<16xf32>
    %65 = vector.shape_cast %64 : vector<16xf32> to vector<16x1xf32>
    %cst_29 = arith.constant 1.280000e+02 : f32
    %66 = vector.broadcast %cst_29 : f32 to vector<16x1xf32>
    %67 = arith.divf %65, %66 : vector<16x1xf32>
    %68 = arith.mulf %61, %61 : vector<16x128xf32>
    %cst_30 = arith.constant dense<0.000000e+00> : vector<16xf32>
    %69 = vector.multi_reduction <add>, %68, %cst_30 [1] : vector<16x128xf32> to vector<16xf32>
    %70 = vector.shape_cast %69 : vector<16xf32> to vector<16x1xf32>
    %cst_31 = arith.constant 1.280000e+02 : f32
    %71 = vector.broadcast %cst_31 : f32 to vector<16x1xf32>
    %72 = arith.divf %70, %71 : vector<16x1xf32>
    %73 = vector.broadcast %67 : vector<16x1xf32> to vector<16x128xf32>
    %74 = arith.subf %61, %73 : vector<16x128xf32>
    %75 = arith.mulf %67, %67 : vector<16x1xf32>
    %76 = arith.subf %72, %75 : vector<16x1xf32>
    %cst_32 = arith.constant 9.99999974E-6 : f32
    %77 = vector.broadcast %cst_32 : f32 to vector<16x1xf32>
    %78 = arith.addf %76, %77 : vector<16x1xf32>
    %79 = math.rsqrt %78 : vector<16x1xf32>
    %80 = vector.broadcast %79 : vector<16x1xf32> to vector<16x128xf32>
    %81 = arith.mulf %74, %80 : vector<16x128xf32>
    %82 = vector.broadcast %62 : vector<1x128xf32> to vector<16x128xf32>
    %83 = arith.mulf %81, %82 : vector<16x128xf32>
    %84 = vector.broadcast %63 : vector<1x128xf32> to vector<16x128xf32>
    %85 = arith.addf %83, %84 : vector<16x128xf32>
    %cst_33 = arith.constant 5.000000e-01 : f32
    %86 = vector.broadcast %cst_33 : f32 to vector<16x128xf32>
    %87 = arith.mulf %86, %85 : vector<16x128xf32>
    %cst_34 = arith.constant 4.471500e-02 : f32
    %88 = vector.broadcast %cst_34 : f32 to vector<16x128xf32>
    %89 = arith.mulf %88, %85 : vector<16x128xf32>
    %90 = arith.mulf %89, %85 : vector<16x128xf32>
    %91 = arith.mulf %90, %85 : vector<16x128xf32>
    %92 = arith.addf %85, %91 : vector<16x128xf32>
    %cst_35 = arith.constant 0.797884583 : f32
    %93 = vector.broadcast %cst_35 : f32 to vector<16x128xf32>
    %94 = arith.mulf %93, %92 : vector<16x128xf32>
    %95 = math.tanh %94 : vector<16x128xf32>
    %cst_36 = arith.constant 1.000000e+00 : f32
    %96 = vector.broadcast %cst_36 : f32 to vector<16x128xf32>
    %97 = arith.addf %96, %95 : vector<16x128xf32>
    %98 = arith.mulf %87, %97 : vector<16x128xf32>
    %c192 = arith.constant 192 : index
    %c0_37 = arith.constant 0 : index
    %99 = vector.load %arg4[%c192, %c0_37] : memref<2784x128xf32, #tpu.memory_space<vmem>>, vector<128x128xf32>
    %cst_38 = arith.constant dense<0.000000e+00> : vector<16x128xf32>
    %100 = tpu.matmul %98, %99, %cst_38 {dimension_numbers = #tpu.dot_dimension_numbers<[1], [0], [0], [1], [0, 0, 1, 1], [], []>} : vector<16x128xf32>, vector<128x128xf32>, vector<16x128xf32> -> vector<16x128xf32>
    %c320 = arith.constant 320 : index
    %c0_39 = arith.constant 0 : index
    %101 = vector.load %arg4[%c320, %c0_39] : memref<2784x128xf32, #tpu.memory_space<vmem>>, vector<1x128xf32>
    %102 = vector.broadcast %101 : vector<1x128xf32> to vector<16x128xf32>
    %103 = arith.addf %100, %102 : vector<16x128xf32>
    %c328 = arith.constant 328 : index
    %c0_40 = arith.constant 0 : index
    %104 = vector.load %arg4[%c328, %c0_40] : memref<2784x128xf32, #tpu.memory_space<vmem>>, vector<1x128xf32>
    %c336 = arith.constant 336 : index
    %c0_41 = arith.constant 0 : index
    %105 = vector.load %arg4[%c336, %c0_41] : memref<2784x128xf32, #tpu.memory_space<vmem>>, vector<1x128xf32>
    %cst_42 = arith.constant dense<0.000000e+00> : vector<16xf32>
    %106 = vector.multi_reduction <add>, %103, %cst_42 [1] : vector<16x128xf32> to vector<16xf32>
    %107 = vector.shape_cast %106 : vector<16xf32> to vector<16x1xf32>
    %cst_43 = arith.constant 1.280000e+02 : f32
    %108 = vector.broadcast %cst_43 : f32 to vector<16x1xf32>
    %109 = arith.divf %107, %108 : vector<16x1xf32>
    %110 = arith.mulf %103, %103 : vector<16x128xf32>
    %cst_44 = arith.constant dense<0.000000e+00> : vector<16xf32>
    %111 = vector.multi_reduction <add>, %110, %cst_44 [1] : vector<16x128xf32> to vector<16xf32>
    %112 = vector.shape_cast %111 : vector<16xf32> to vector<16x1xf32>
    %cst_45 = arith.constant 1.280000e+02 : f32
    %113 = vector.broadcast %cst_45 : f32 to vector<16x1xf32>
    %114 = arith.divf %112, %113 : vector<16x1xf32>
    %115 = vector.broadcast %109 : vector<16x1xf32> to vector<16x128xf32>
    %116 = arith.subf %103, %115 : vector<16x128xf32>
    %117 = arith.mulf %109, %109 : vector<16x1xf32>
    %118 = arith.subf %114, %117 : vector<16x1xf32>
    %cst_46 = arith.constant 9.99999974E-6 : f32
    %119 = vector.broadcast %cst_46 : f32 to vector<16x1xf32>
    %120 = arith.addf %118, %119 : vector<16x1xf32>
    %121 = math.rsqrt %120 : vector<16x1xf32>
    %122 = vector.broadcast %121 : vector<16x1xf32> to vector<16x128xf32>
    %123 = arith.mulf %116, %122 : vector<16x128xf32>
    %124 = vector.broadcast %104 : vector<1x128xf32> to vector<16x128xf32>
    %125 = arith.mulf %123, %124 : vector<16x128xf32>
    %126 = vector.broadcast %105 : vector<1x128xf32> to vector<16x128xf32>
    %127 = arith.addf %125, %126 : vector<16x128xf32>
    %cst_47 = arith.constant 5.000000e-01 : f32
    %128 = vector.broadcast %cst_47 : f32 to vector<16x128xf32>
    %129 = arith.mulf %128, %127 : vector<16x128xf32>
    %cst_48 = arith.constant 4.471500e-02 : f32
    %130 = vector.broadcast %cst_48 : f32 to vector<16x128xf32>
    %131 = arith.mulf %130, %127 : vector<16x128xf32>
    %132 = arith.mulf %131, %127 : vector<16x128xf32>
    %133 = arith.mulf %132, %127 : vector<16x128xf32>
    %134 = arith.addf %127, %133 : vector<16x128xf32>
    %cst_49 = arith.constant 0.797884583 : f32
    %135 = vector.broadcast %cst_49 : f32 to vector<16x128xf32>
    %136 = arith.mulf %135, %134 : vector<16x128xf32>
    %137 = math.tanh %136 : vector<16x128xf32>
    %cst_50 = arith.constant 1.000000e+00 : f32
    %138 = vector.broadcast %cst_50 : f32 to vector<16x128xf32>
    %139 = arith.addf %138, %137 : vector<16x128xf32>
    %140 = arith.mulf %129, %139 : vector<16x128xf32>
    %c344 = arith.constant 344 : index
    %c0_51 = arith.constant 0 : index
    %141 = vector.load %arg4[%c344, %c0_51] : memref<2784x128xf32, #tpu.memory_space<vmem>>, vector<128x128xf32>
    %cst_52 = arith.constant dense<0.000000e+00> : vector<16x128xf32>
    %142 = tpu.matmul %140, %141, %cst_52 {dimension_numbers = #tpu.dot_dimension_numbers<[1], [0], [0], [1], [0, 0, 1, 1], [], []>} : vector<16x128xf32>, vector<128x128xf32>, vector<16x128xf32> -> vector<16x128xf32>
    %c472 = arith.constant 472 : index
    %c0_53 = arith.constant 0 : index
    %143 = vector.load %arg4[%c472, %c0_53] : memref<2784x128xf32, #tpu.memory_space<vmem>>, vector<1x128xf32>
    %144 = vector.broadcast %143 : vector<1x128xf32> to vector<16x128xf32>
    %145 = arith.addf %142, %144 : vector<16x128xf32>
    %c480 = arith.constant 480 : index
    %c0_54 = arith.constant 0 : index
    %146 = vector.load %arg4[%c480, %c0_54] : memref<2784x128xf32, #tpu.memory_space<vmem>>, vector<1x128xf32>
    %c488 = arith.constant 488 : index
    %c0_55 = arith.constant 0 : index
    %147 = vector.load %arg4[%c488, %c0_55] : memref<2784x128xf32, #tpu.memory_space<vmem>>, vector<1x128xf32>
    %cst_56 = arith.constant dense<0.000000e+00> : vector<16xf32>
    %148 = vector.multi_reduction <add>, %145, %cst_56 [1] : vector<16x128xf32> to vector<16xf32>
    %149 = vector.shape_cast %148 : vector<16xf32> to vector<16x1xf32>
    %cst_57 = arith.constant 1.280000e+02 : f32
    %150 = vector.broadcast %cst_57 : f32 to vector<16x1xf32>
    %151 = arith.divf %149, %150 : vector<16x1xf32>
    %152 = arith.mulf %145, %145 : vector<16x128xf32>
    %cst_58 = arith.constant dense<0.000000e+00> : vector<16xf32>
    %153 = vector.multi_reduction <add>, %152, %cst_58 [1] : vector<16x128xf32> to vector<16xf32>
    %154 = vector.shape_cast %153 : vector<16xf32> to vector<16x1xf32>
    %cst_59 = arith.constant 1.280000e+02 : f32
    %155 = vector.broadcast %cst_59 : f32 to vector<16x1xf32>
    %156 = arith.divf %154, %155 : vector<16x1xf32>
    %157 = vector.broadcast %151 : vector<16x1xf32> to vector<16x128xf32>
    %158 = arith.subf %145, %157 : vector<16x128xf32>
    %159 = arith.mulf %151, %151 : vector<16x1xf32>
    %160 = arith.subf %156, %159 : vector<16x1xf32>
    %cst_60 = arith.constant 9.99999974E-6 : f32
    %161 = vector.broadcast %cst_60 : f32 to vector<16x1xf32>
    %162 = arith.addf %160, %161 : vector<16x1xf32>
    %163 = math.rsqrt %162 : vector<16x1xf32>
    %164 = vector.broadcast %163 : vector<16x1xf32> to vector<16x128xf32>
    %165 = arith.mulf %158, %164 : vector<16x128xf32>
    %166 = vector.broadcast %146 : vector<1x128xf32> to vector<16x128xf32>
    %167 = arith.mulf %165, %166 : vector<16x128xf32>
    %168 = vector.broadcast %147 : vector<1x128xf32> to vector<16x128xf32>
    %169 = arith.addf %167, %168 : vector<16x128xf32>
    %cst_61 = arith.constant 5.000000e-01 : f32
    %170 = vector.broadcast %cst_61 : f32 to vector<16x128xf32>
    %171 = arith.mulf %170, %169 : vector<16x128xf32>
    %cst_62 = arith.constant 4.471500e-02 : f32
    %172 = vector.broadcast %cst_62 : f32 to vector<16x128xf32>
    %173 = arith.mulf %172, %169 : vector<16x128xf32>
    %174 = arith.mulf %173, %169 : vector<16x128xf32>
    %175 = arith.mulf %174, %169 : vector<16x128xf32>
    %176 = arith.addf %169, %175 : vector<16x128xf32>
    %cst_63 = arith.constant 0.797884583 : f32
    %177 = vector.broadcast %cst_63 : f32 to vector<16x128xf32>
    %178 = arith.mulf %177, %176 : vector<16x128xf32>
    %179 = math.tanh %178 : vector<16x128xf32>
    %cst_64 = arith.constant 1.000000e+00 : f32
    %180 = vector.broadcast %cst_64 : f32 to vector<16x128xf32>
    %181 = arith.addf %180, %179 : vector<16x128xf32>
    %182 = arith.mulf %171, %181 : vector<16x128xf32>
    %c496 = arith.constant 496 : index
    %c0_65 = arith.constant 0 : index
    %183 = vector.load %arg4[%c496, %c0_65] : memref<2784x128xf32, #tpu.memory_space<vmem>>, vector<128x32xf32>
    %cst_66 = arith.constant dense<0.000000e+00> : vector<16x32xf32>
    %184 = tpu.matmul %182, %183, %cst_66 {dimension_numbers = #tpu.dot_dimension_numbers<[1], [0], [0], [1], [0, 0, 1, 1], [], []>} : vector<16x128xf32>, vector<128x32xf32>, vector<16x32xf32> -> vector<16x32xf32>
    %c624 = arith.constant 624 : index
    %c0_67 = arith.constant 0 : index
    %185 = vector.load %arg4[%c624, %c0_67] : memref<2784x128xf32, #tpu.memory_space<vmem>>, vector<1x32xf32>
    %186 = vector.broadcast %185 : vector<1x32xf32> to vector<16x32xf32>
    %187 = arith.addf %184, %186 : vector<16x32xf32>
    %c632 = arith.constant 632 : index
    %c0_68 = arith.constant 0 : index
    %188 = vector.load %arg4[%c632, %c0_68] : memref<2784x128xf32, #tpu.memory_space<vmem>>, vector<32x32xf32>
    %cst_69 = arith.constant dense<0.000000e+00> : vector<16x32xf32>
    %189 = tpu.matmul %187, %188, %cst_69 {dimension_numbers = #tpu.dot_dimension_numbers<[1], [0], [0], [1], [0, 0, 1, 1], [], []>} : vector<16x32xf32>, vector<32x32xf32>, vector<16x32xf32> -> vector<16x32xf32>
    %c664 = arith.constant 664 : index
    %c0_70 = arith.constant 0 : index
    %190 = vector.load %arg4[%c664, %c0_70] : memref<2784x128xf32, #tpu.memory_space<vmem>>, vector<1x32xf32>
    %191 = vector.broadcast %190 : vector<1x32xf32> to vector<16x32xf32>
    %192 = arith.addf %189, %191 : vector<16x32xf32>
    %c672 = arith.constant 672 : index
    %c0_71 = arith.constant 0 : index
    %193 = vector.load %arg4[%c672, %c0_71] : memref<2784x128xf32, #tpu.memory_space<vmem>>, vector<32x32xf32>
    %cst_72 = arith.constant dense<0.000000e+00> : vector<16x32xf32>
    %194 = tpu.matmul %187, %193, %cst_72 {dimension_numbers = #tpu.dot_dimension_numbers<[1], [0], [0], [1], [0, 0, 1, 1], [], []>} : vector<16x32xf32>, vector<32x32xf32>, vector<16x32xf32> -> vector<16x32xf32>
    %c704 = arith.constant 704 : index
    %c0_73 = arith.constant 0 : index
    %195 = vector.load %arg4[%c704, %c0_73] : memref<2784x128xf32, #tpu.memory_space<vmem>>, vector<1x32xf32>
    %196 = vector.broadcast %195 : vector<1x32xf32> to vector<16x32xf32>
    %197 = arith.addf %194, %196 : vector<16x32xf32>
    %c712 = arith.constant 712 : index
    %c0_74 = arith.constant 0 : index
    %198 = vector.load %arg4[%c712, %c0_74] : memref<2784x128xf32, #tpu.memory_space<vmem>>, vector<32x32xf32>
    %cst_75 = arith.constant dense<0.000000e+00> : vector<16x32xf32>
    %199 = tpu.matmul %187, %198, %cst_75 {dimension_numbers = #tpu.dot_dimension_numbers<[1], [0], [0], [1], [0, 0, 1, 1], [], []>} : vector<16x32xf32>, vector<32x32xf32>, vector<16x32xf32> -> vector<16x32xf32>
    %c744 = arith.constant 744 : index
    %c0_76 = arith.constant 0 : index
    %200 = vector.load %arg4[%c744, %c0_76] : memref<2784x128xf32, #tpu.memory_space<vmem>>, vector<1x32xf32>
    %201 = vector.broadcast %200 : vector<1x32xf32> to vector<16x32xf32>
    %202 = arith.addf %199, %201 : vector<16x32xf32>
    %c752 = arith.constant 752 : index
    %c0_77 = arith.constant 0 : index
    %203 = vector.load %arg4[%c752, %c0_77] : memref<2784x128xf32, #tpu.memory_space<vmem>>, vector<32x32xf32>
    %c2680 = arith.constant 2680 : index
    %c0_78 = arith.constant 0 : index
    %204 = vector.load %arg4[%c2680, %c0_78] : memref<2784x128xf32, #tpu.memory_space<vmem>>, vector<16x16xf32>
    %cst_79 = arith.constant 0.000000e+00 : f32
    %205 = vector.broadcast %cst_79 : f32 to vector<16x32xf32>
    %c784 = arith.constant 784 : index
    %c0_80 = arith.constant 0 : index
    %206 = vector.load %arg4[%c784, %c0_80] : memref<2784x128xf32, #tpu.memory_space<vmem>>, vector<1x32xf32>
    %207 = vector.broadcast %206 : vector<1x32xf32> to vector<16x32xf32>
    %208 = arith.addf %205, %207 : vector<16x32xf32>
    %209 = vector.extract_strided_slice %192 {offsets = [0, 0], sizes = [16, 16], strides = [1, 1]} : vector<16x32xf32> to vector<16x16xf32>
    %210 = vector.extract_strided_slice %197 {offsets = [0, 0], sizes = [16, 16], strides = [1, 1]} : vector<16x32xf32> to vector<16x16xf32>
    %211 = vector.extract_strided_slice %202 {offsets = [0, 0], sizes = [16, 16], strides = [1, 1]} : vector<16x32xf32> to vector<16x16xf32>
    %cst_81 = arith.constant dense<0.000000e+00> : vector<16x16xf32>
    %212 = tpu.matmul %209, %210, %cst_81 {dimension_numbers = #tpu.dot_dimension_numbers<[1], [1], [0], [0], [0, 0, 1, 0], [], []>} : vector<16x16xf32>, vector<16x16xf32>, vector<16x16xf32> -> vector<16x16xf32>
    %cst_82 = arith.constant 2.500000e-01 : f32
    %213 = vector.broadcast %cst_82 : f32 to vector<16x16xf32>
    %214 = arith.mulf %212, %213 : vector<16x16xf32>
    %215 = arith.addf %214, %204 : vector<16x16xf32>
    %cst_83 = arith.constant dense<0xFF800000> : vector<16xf32>
    %216 = vector.multi_reduction <maximumf>, %215, %cst_83 [1] : vector<16x16xf32> to vector<16xf32>
    %217 = vector.shape_cast %216 : vector<16xf32> to vector<16x1xf32>
    %218 = vector.broadcast %217 : vector<16x1xf32> to vector<16x16xf32>
    %219 = arith.subf %215, %218 : vector<16x16xf32>
    %220 = math.exp %219 : vector<16x16xf32>
    %cst_84 = arith.constant dense<0.000000e+00> : vector<16xf32>
    %221 = vector.multi_reduction <add>, %220, %cst_84 [1] : vector<16x16xf32> to vector<16xf32>
    %222 = vector.shape_cast %221 : vector<16xf32> to vector<16x1xf32>
    %223 = tpu.reciprocal %222 {approx = true} : vector<16x1xf32> -> vector<16x1xf32>
    %224 = vector.broadcast %223 : vector<16x1xf32> to vector<16x16xf32>
    %225 = arith.mulf %220, %224 : vector<16x16xf32>
    %cst_85 = arith.constant dense<0.000000e+00> : vector<16x16xf32>
    %226 = tpu.matmul %225, %211, %cst_85 {dimension_numbers = #tpu.dot_dimension_numbers<[1], [0], [0], [1], [0, 0, 1, 1], [], []>} : vector<16x16xf32>, vector<16x16xf32>, vector<16x16xf32> -> vector<16x16xf32>
    %227 = vector.extract_strided_slice %203 {offsets = [0, 0], sizes = [16, 32], strides = [1, 1]} : vector<32x32xf32> to vector<16x32xf32>
    %cst_86 = arith.constant dense<0.000000e+00> : vector<16x32xf32>
    %228 = tpu.matmul %226, %227, %cst_86 {dimension_numbers = #tpu.dot_dimension_numbers<[1], [0], [0], [1], [0, 0, 1, 1], [], []>} : vector<16x16xf32>, vector<16x32xf32>, vector<16x32xf32> -> vector<16x32xf32>
    %229 = arith.addf %208, %228 : vector<16x32xf32>
    %230 = vector.extract_strided_slice %192 {offsets = [0, 16], sizes = [16, 16], strides = [1, 1]} : vector<16x32xf32> to vector<16x16xf32>
    %231 = vector.extract_strided_slice %197 {offsets = [0, 16], sizes = [16, 16], strides = [1, 1]} : vector<16x32xf32> to vector<16x16xf32>
    %232 = vector.extract_strided_slice %202 {offsets = [0, 16], sizes = [16, 16], strides = [1, 1]} : vector<16x32xf32> to vector<16x16xf32>
    %cst_87 = arith.constant dense<0.000000e+00> : vector<16x16xf32>
    %233 = tpu.matmul %230, %231, %cst_87 {dimension_numbers = #tpu.dot_dimension_numbers<[1], [1], [0], [0], [0, 0, 1, 0], [], []>} : vector<16x16xf32>, vector<16x16xf32>, vector<16x16xf32> -> vector<16x16xf32>
    %cst_88 = arith.constant 2.500000e-01 : f32
    %234 = vector.broadcast %cst_88 : f32 to vector<16x16xf32>
    %235 = arith.mulf %233, %234 : vector<16x16xf32>
    %236 = arith.addf %235, %204 : vector<16x16xf32>
    %cst_89 = arith.constant dense<0xFF800000> : vector<16xf32>
    %237 = vector.multi_reduction <maximumf>, %236, %cst_89 [1] : vector<16x16xf32> to vector<16xf32>
    %238 = vector.shape_cast %237 : vector<16xf32> to vector<16x1xf32>
    %239 = vector.broadcast %238 : vector<16x1xf32> to vector<16x16xf32>
    %240 = arith.subf %236, %239 : vector<16x16xf32>
    %241 = math.exp %240 : vector<16x16xf32>
    %cst_90 = arith.constant dense<0.000000e+00> : vector<16xf32>
    %242 = vector.multi_reduction <add>, %241, %cst_90 [1] : vector<16x16xf32> to vector<16xf32>
    %243 = vector.shape_cast %242 : vector<16xf32> to vector<16x1xf32>
    %244 = tpu.reciprocal %243 {approx = true} : vector<16x1xf32> -> vector<16x1xf32>
    %245 = vector.broadcast %244 : vector<16x1xf32> to vector<16x16xf32>
    %246 = arith.mulf %241, %245 : vector<16x16xf32>
    %cst_91 = arith.constant dense<0.000000e+00> : vector<16x16xf32>
    %247 = tpu.matmul %246, %232, %cst_91 {dimension_numbers = #tpu.dot_dimension_numbers<[1], [0], [0], [1], [0, 0, 1, 1], [], []>} : vector<16x16xf32>, vector<16x16xf32>, vector<16x16xf32> -> vector<16x16xf32>
    %248 = vector.extract_strided_slice %203 {offsets = [16, 0], sizes = [16, 32], strides = [1, 1]} : vector<32x32xf32> to vector<16x32xf32>
    %cst_92 = arith.constant dense<0.000000e+00> : vector<16x32xf32>
    %249 = tpu.matmul %247, %248, %cst_92 {dimension_numbers = #tpu.dot_dimension_numbers<[1], [0], [0], [1], [0, 0, 1, 1], [], []>} : vector<16x16xf32>, vector<16x32xf32>, vector<16x32xf32> -> vector<16x32xf32>
    %250 = arith.addf %229, %249 : vector<16x32xf32>
    %c2696 = arith.constant 2696 : index
    %c0_93 = arith.constant 0 : index
    %251 = vector.load %arg4[%c2696, %c0_93] : memref<2784x128xf32, #tpu.memory_space<vmem>>, vector<2x16xf32>
    %cst_94 = arith.constant dense<0.000000e+00> : vector<2x32xf32>
    %252 = tpu.matmul %251, %250, %cst_94 {dimension_numbers = #tpu.dot_dimension_numbers<[1], [0], [0], [1], [0, 0, 1, 1], [], []>} : vector<2x16xf32>, vector<16x32xf32>, vector<2x32xf32> -> vector<2x32xf32>
    %c0_95 = arith.constant 0 : index
    %c0_96 = arith.constant 0 : index
    %253 = vector.load %arg7[%c0_95, %c0_96] : memref<40x768xf32, #tpu.memory_space<vmem>>, vector<32x768xf32>
    %cst_97 = arith.constant dense<0.000000e+00> : vector<2x768xf32>
    %254 = tpu.matmul %252, %253, %cst_97 {dimension_numbers = #tpu.dot_dimension_numbers<[1], [0], [0], [1], [0, 0, 1, 1], [], []>} : vector<2x32xf32>, vector<32x768xf32>, vector<2x768xf32> -> vector<2x768xf32>
    %c32_98 = arith.constant 32 : index
    %c0_99 = arith.constant 0 : index
    %255 = vector.load %arg7[%c32_98, %c0_99] : memref<40x768xf32, #tpu.memory_space<vmem>>, vector<1x768xf32>
    %256 = vector.broadcast %255 : vector<1x768xf32> to vector<2x768xf32>
    %257 = arith.addf %254, %256 : vector<2x768xf32>
    %cst_100 = arith.constant 0.000000e+00 : f32
    %258 = vector.broadcast %cst_100 : f32 to vector<2x768xf32>
    %259 = arith.maximumf %257, %258 : vector<2x768xf32>
    %260 = vector.extract_strided_slice %259 {offsets = [0, 0], sizes = [2, 512], strides = [1, 1]} : vector<2x768xf32> to vector<2x512xf32>
    %c0_101 = arith.constant 0 : index
    %c0_102 = arith.constant 0 : index
    %261 = vector.load %arg5[%c0_101, %c0_102] : memref<1512x256xf32, #tpu.memory_space<vmem>>, vector<512x256xf32>
    %cst_103 = arith.constant dense<0.000000e+00> : vector<2x256xf32>
    %262 = tpu.matmul %260, %261, %cst_103 {dimension_numbers = #tpu.dot_dimension_numbers<[1], [0], [0], [1], [0, 0, 1, 1], [], []>} : vector<2x512xf32>, vector<512x256xf32>, vector<2x256xf32> -> vector<2x256xf32>
    %c512 = arith.constant 512 : index
    %c0_104 = arith.constant 0 : index
    %263 = vector.load %arg5[%c512, %c0_104] : memref<1512x256xf32, #tpu.memory_space<vmem>>, vector<1x256xf32>
    %264 = vector.broadcast %263 : vector<1x256xf32> to vector<2x256xf32>
    %265 = arith.addf %262, %264 : vector<2x256xf32>
    %cst_105 = arith.constant 0.000000e+00 : f32
    %266 = vector.broadcast %cst_105 : f32 to vector<2x256xf32>
    %267 = arith.maximumf %265, %266 : vector<2x256xf32>
    %c792 = arith.constant 792 : index
    %c0_106 = arith.constant 0 : index
    %268 = vector.load %arg4[%c792, %c0_106] : memref<2784x128xf32, #tpu.memory_space<vmem>>, vector<256x128xf32>
    %cst_107 = arith.constant dense<0.000000e+00> : vector<2x128xf32>
    %269 = tpu.matmul %267, %268, %cst_107 {dimension_numbers = #tpu.dot_dimension_numbers<[1], [0], [0], [1], [0, 0, 1, 1], [], []>} : vector<2x256xf32>, vector<256x128xf32>, vector<2x128xf32> -> vector<2x128xf32>
    %c1048 = arith.constant 1048 : index
    %c0_108 = arith.constant 0 : index
    %270 = vector.load %arg4[%c1048, %c0_108] : memref<2784x128xf32, #tpu.memory_space<vmem>>, vector<1x128xf32>
    %271 = vector.broadcast %270 : vector<1x128xf32> to vector<2x128xf32>
    %272 = arith.addf %269, %271 : vector<2x128xf32>
    %cst_109 = arith.constant 0.000000e+00 : f32
    %273 = vector.broadcast %cst_109 : f32 to vector<2x128xf32>
    %274 = arith.maximumf %272, %273 : vector<2x128xf32>
    %275 = vector.extract_strided_slice %259 {offsets = [0, 512], sizes = [2, 256], strides = [1, 1]} : vector<2x768xf32> to vector<2x256xf32>
    %c1056 = arith.constant 1056 : index
    %c0_110 = arith.constant 0 : index
    %276 = vector.load %arg4[%c1056, %c0_110] : memref<2784x128xf32, #tpu.memory_space<vmem>>, vector<256x128xf32>
    %cst_111 = arith.constant dense<0.000000e+00> : vector<2x128xf32>
    %277 = tpu.matmul %275, %276, %cst_111 {dimension_numbers = #tpu.dot_dimension_numbers<[1], [0], [0], [1], [0, 0, 1, 1], [], []>} : vector<2x256xf32>, vector<256x128xf32>, vector<2x128xf32> -> vector<2x128xf32>
    %c1312 = arith.constant 1312 : index
    %c0_112 = arith.constant 0 : index
    %278 = vector.load %arg4[%c1312, %c0_112] : memref<2784x128xf32, #tpu.memory_space<vmem>>, vector<1x128xf32>
    %279 = vector.broadcast %278 : vector<1x128xf32> to vector<2x128xf32>
    %280 = arith.addf %277, %279 : vector<2x128xf32>
    %cst_113 = arith.constant 0.000000e+00 : f32
    %281 = vector.broadcast %cst_113 : f32 to vector<2x128xf32>
    %282 = arith.maximumf %280, %281 : vector<2x128xf32>
    %c2768 = arith.constant 2768 : index
    %c0_114 = arith.constant 0 : index
    %283 = vector.load %arg4[%c2768, %c0_114] : memref<2784x128xf32, #tpu.memory_space<vmem>>, vector<7x3xf32>
    %cst_115 = arith.constant dense<0.000000e+00> : vector<2x3xf32>
    %284 = tpu.matmul %4, %283, %cst_115 {dimension_numbers = #tpu.dot_dimension_numbers<[1], [0], [0], [1], [0, 0, 1, 1], [], []>} : vector<2x7xf32>, vector<7x3xf32>, vector<2x3xf32> -> vector<2x3xf32>
    %c2776 = arith.constant 2776 : index
    %c0_116 = arith.constant 0 : index
    %285 = vector.load %arg4[%c2776, %c0_116] : memref<2784x128xf32, #tpu.memory_space<vmem>>, vector<7x3xf32>
    %cst_117 = arith.constant dense<0.000000e+00> : vector<2x3xf32>
    %286 = tpu.matmul %5, %285, %cst_117 {dimension_numbers = #tpu.dot_dimension_numbers<[1], [0], [0], [1], [0, 0, 1, 1], [], []>} : vector<2x7xf32>, vector<7x3xf32>, vector<2x3xf32> -> vector<2x3xf32>
    %287 = arith.addf %284, %286 : vector<2x3xf32>
    %c0_118 = arith.constant 0 : index
    %c0_119 = arith.constant 0 : index
    %288 = vector.load %arg6[%c0_118, %c0_119] : memref<16x384xf32, #tpu.memory_space<vmem>>, vector<3x384xf32>
    %cst_120 = arith.constant dense<0.000000e+00> : vector<2x384xf32>
    %289 = tpu.matmul %287, %288, %cst_120 {dimension_numbers = #tpu.dot_dimension_numbers<[1], [0], [0], [1], [0, 0, 1, 1], [], []>} : vector<2x3xf32>, vector<3x384xf32>, vector<2x384xf32> -> vector<2x384xf32>
    %c8_121 = arith.constant 8 : index
    %c0_122 = arith.constant 0 : index
    %290 = vector.load %arg6[%c8_121, %c0_122] : memref<16x384xf32, #tpu.memory_space<vmem>>, vector<1x384xf32>
    %291 = vector.broadcast %290 : vector<1x384xf32> to vector<2x384xf32>
    %292 = arith.addf %289, %291 : vector<2x384xf32>
    %cst_123 = arith.constant 0.000000e+00 : f32
    %293 = vector.broadcast %cst_123 : f32 to vector<2x384xf32>
    %294 = arith.maximumf %292, %293 : vector<2x384xf32>
    %c520 = arith.constant 520 : index
    %c0_124 = arith.constant 0 : index
    %295 = vector.load %arg5[%c520, %c0_124] : memref<1512x256xf32, #tpu.memory_space<vmem>>, vector<384x192xf32>
    %cst_125 = arith.constant dense<0.000000e+00> : vector<2x192xf32>
    %296 = tpu.matmul %294, %295, %cst_125 {dimension_numbers = #tpu.dot_dimension_numbers<[1], [0], [0], [1], [0, 0, 1, 1], [], []>} : vector<2x384xf32>, vector<384x192xf32>, vector<2x192xf32> -> vector<2x192xf32>
    %c904 = arith.constant 904 : index
    %c0_126 = arith.constant 0 : index
    %297 = vector.load %arg5[%c904, %c0_126] : memref<1512x256xf32, #tpu.memory_space<vmem>>, vector<1x192xf32>
    %298 = vector.broadcast %297 : vector<1x192xf32> to vector<2x192xf32>
    %299 = arith.addf %296, %298 : vector<2x192xf32>
    %cst_127 = arith.constant 0.000000e+00 : f32
    %300 = vector.broadcast %cst_127 : f32 to vector<2x192xf32>
    %301 = arith.maximumf %299, %300 : vector<2x192xf32>
    %c1576 = arith.constant 1576 : index
    %c0_128 = arith.constant 0 : index
    %302 = vector.load %arg4[%c1576, %c0_128] : memref<2784x128xf32, #tpu.memory_space<vmem>>, vector<192x96xf32>
    %cst_129 = arith.constant dense<0.000000e+00> : vector<2x96xf32>
    %303 = tpu.matmul %301, %302, %cst_129 {dimension_numbers = #tpu.dot_dimension_numbers<[1], [0], [0], [1], [0, 0, 1, 1], [], []>} : vector<2x192xf32>, vector<192x96xf32>, vector<2x96xf32> -> vector<2x96xf32>
    %c1768 = arith.constant 1768 : index
    %c0_130 = arith.constant 0 : index
    %304 = vector.load %arg4[%c1768, %c0_130] : memref<2784x128xf32, #tpu.memory_space<vmem>>, vector<1x96xf32>
    %305 = vector.broadcast %304 : vector<1x96xf32> to vector<2x96xf32>
    %306 = arith.addf %303, %305 : vector<2x96xf32>
    %cst_131 = arith.constant 0.000000e+00 : f32
    %307 = vector.broadcast %cst_131 : f32 to vector<2x96xf32>
    %308 = arith.maximumf %306, %307 : vector<2x96xf32>
    %c1776 = arith.constant 1776 : index
    %c0_132 = arith.constant 0 : index
    %309 = vector.load %arg4[%c1776, %c0_132] : memref<2784x128xf32, #tpu.memory_space<vmem>>, vector<96x128xf32>
    %cst_133 = arith.constant dense<0.000000e+00> : vector<2x128xf32>
    %310 = tpu.matmul %308, %309, %cst_133 {dimension_numbers = #tpu.dot_dimension_numbers<[1], [0], [0], [1], [0, 0, 1, 1], [], []>} : vector<2x96xf32>, vector<96x128xf32>, vector<2x128xf32> -> vector<2x128xf32>
    %c1872 = arith.constant 1872 : index
    %c0_134 = arith.constant 0 : index
    %311 = vector.load %arg4[%c1872, %c0_134] : memref<2784x128xf32, #tpu.memory_space<vmem>>, vector<1x128xf32>
    %312 = vector.broadcast %311 : vector<1x128xf32> to vector<2x128xf32>
    %313 = arith.addf %310, %312 : vector<2x128xf32>
    %cst_135 = arith.constant 0.000000e+00 : f32
    %314 = vector.broadcast %cst_135 : f32 to vector<2x128xf32>
    %315 = arith.maximumf %313, %314 : vector<2x128xf32>
    %c1880 = arith.constant 1880 : index
    %c0_136 = arith.constant 0 : index
    %316 = vector.load %arg4[%c1880, %c0_136] : memref<2784x128xf32, #tpu.memory_space<vmem>>, vector<128x64xf32>
    %cst_137 = arith.constant dense<0.000000e+00> : vector<2x64xf32>
    %317 = tpu.matmul %315, %316, %cst_137 {dimension_numbers = #tpu.dot_dimension_numbers<[1], [0], [0], [1], [0, 0, 1, 1], [], []>} : vector<2x128xf32>, vector<128x64xf32>, vector<2x64xf32> -> vector<2x64xf32>
    %c2008 = arith.constant 2008 : index
    %c0_138 = arith.constant 0 : index
    %318 = vector.load %arg4[%c2008, %c0_138] : memref<2784x128xf32, #tpu.memory_space<vmem>>, vector<1x64xf32>
    %319 = vector.broadcast %318 : vector<1x64xf32> to vector<2x64xf32>
    %320 = arith.addf %317, %319 : vector<2x64xf32>
    %cst_139 = arith.constant 0.000000e+00 : f32
    %321 = vector.broadcast %cst_139 : f32 to vector<2x64xf32>
    %322 = arith.maximumf %320, %321 : vector<2x64xf32>
    %c1320 = arith.constant 1320 : index
    %c0_140 = arith.constant 0 : index
    %323 = vector.load %arg4[%c1320, %c0_140] : memref<2784x128xf32, #tpu.memory_space<vmem>>, vector<128x7xf32>
    %cst_141 = arith.constant dense<0.000000e+00> : vector<2x7xf32>
    %324 = tpu.matmul %274, %323, %cst_141 {dimension_numbers = #tpu.dot_dimension_numbers<[1], [0], [0], [1], [0, 0, 1, 1], [], []>} : vector<2x128xf32>, vector<128x7xf32>, vector<2x7xf32> -> vector<2x7xf32>
    %c1448 = arith.constant 1448 : index
    %c0_142 = arith.constant 0 : index
    %325 = vector.load %arg4[%c1448, %c0_142] : memref<2784x128xf32, #tpu.memory_space<vmem>>, vector<128x7xf32>
    %cst_143 = arith.constant dense<0.000000e+00> : vector<2x7xf32>
    %326 = tpu.matmul %282, %325, %cst_143 {dimension_numbers = #tpu.dot_dimension_numbers<[1], [0], [0], [1], [0, 0, 1, 1], [], []>} : vector<2x128xf32>, vector<128x7xf32>, vector<2x7xf32> -> vector<2x7xf32>
    %327 = arith.addf %324, %326 : vector<2x7xf32>
    %c2016 = arith.constant 2016 : index
    %c0_144 = arith.constant 0 : index
    %328 = vector.load %arg4[%c2016, %c0_144] : memref<2784x128xf32, #tpu.memory_space<vmem>>, vector<64x7xf32>
    %cst_145 = arith.constant dense<0.000000e+00> : vector<2x7xf32>
    %329 = tpu.matmul %322, %328, %cst_145 {dimension_numbers = #tpu.dot_dimension_numbers<[1], [0], [0], [1], [0, 0, 1, 1], [], []>} : vector<2x64xf32>, vector<64x7xf32>, vector<2x7xf32> -> vector<2x7xf32>
    %330 = arith.addf %327, %329 : vector<2x7xf32>
    %c2080 = arith.constant 2080 : index
    %c0_146 = arith.constant 0 : index
    %331 = vector.load %arg4[%c2080, %c0_146] : memref<2784x128xf32, #tpu.memory_space<vmem>>, vector<1x7xf32>
    %332 = vector.broadcast %331 : vector<1x7xf32> to vector<2x7xf32>
    %333 = arith.addf %330, %332 : vector<2x7xf32>
    %334 = arith.addf %4, %333 : vector<2x7xf32>
    %335 = arith.subf %9, %7 : vector<2x7xf32>
    %336 = arith.mulf %335, %335 : vector<2x7xf32>
    %cst_147 = arith.constant dense<0.000000e+00> : vector<2xf32>
    %337 = vector.multi_reduction <add>, %336, %cst_147 [1] : vector<2x7xf32> to vector<2xf32>
    %338 = vector.shape_cast %337 : vector<2xf32> to vector<2x1xf32>
    %339 = math.sqrt %338 : vector<2x1xf32>
    %cst_148 = arith.constant 9.99999996E-13 : f32
    %340 = vector.broadcast %cst_148 : f32 to vector<2x1xf32>
    %341 = arith.maximumf %339, %340 : vector<2x1xf32>
    %342 = vector.broadcast %341 : vector<2x1xf32> to vector<2x7xf32>
    %343 = arith.divf %335, %342 : vector<2x7xf32>
    %344 = arith.subf %9, %334 : vector<2x7xf32>
    %345 = arith.mulf %344, %344 : vector<2x7xf32>
    %cst_149 = arith.constant dense<0.000000e+00> : vector<2xf32>
    %346 = vector.multi_reduction <add>, %345, %cst_149 [1] : vector<2x7xf32> to vector<2xf32>
    %347 = vector.shape_cast %346 : vector<2xf32> to vector<2x1xf32>
    %348 = math.sqrt %347 : vector<2x1xf32>
    %cst_150 = arith.constant 9.99999996E-13 : f32
    %349 = vector.broadcast %cst_150 : f32 to vector<2x1xf32>
    %350 = arith.maximumf %348, %349 : vector<2x1xf32>
    %351 = vector.broadcast %350 : vector<2x1xf32> to vector<2x7xf32>
    %352 = arith.divf %344, %351 : vector<2x7xf32>
    %353 = arith.subf %4, %5 : vector<2x7xf32>
    %354 = arith.mulf %353, %353 : vector<2x7xf32>
    %cst_151 = arith.constant dense<0.000000e+00> : vector<2xf32>
    %355 = vector.multi_reduction <add>, %354, %cst_151 [1] : vector<2x7xf32> to vector<2xf32>
    %356 = vector.shape_cast %355 : vector<2xf32> to vector<2x1xf32>
    %357 = math.sqrt %356 : vector<2x1xf32>
    %cst_152 = arith.constant 9.99999996E-13 : f32
    %358 = vector.broadcast %cst_152 : f32 to vector<2x1xf32>
    %359 = arith.maximumf %357, %358 : vector<2x1xf32>
    %360 = vector.broadcast %359 : vector<2x1xf32> to vector<2x7xf32>
    %361 = arith.divf %353, %360 : vector<2x7xf32>
    %362 = arith.subf %4, %6 : vector<2x7xf32>
    %363 = arith.mulf %362, %362 : vector<2x7xf32>
    %cst_153 = arith.constant dense<0.000000e+00> : vector<2xf32>
    %364 = vector.multi_reduction <add>, %363, %cst_153 [1] : vector<2x7xf32> to vector<2xf32>
    %365 = vector.shape_cast %364 : vector<2xf32> to vector<2x1xf32>
    %366 = math.sqrt %365 : vector<2x1xf32>
    %cst_154 = arith.constant 9.99999996E-13 : f32
    %367 = vector.broadcast %cst_154 : f32 to vector<2x1xf32>
    %368 = arith.maximumf %366, %367 : vector<2x1xf32>
    %369 = vector.broadcast %368 : vector<2x1xf32> to vector<2x7xf32>
    %370 = arith.divf %362, %369 : vector<2x7xf32>
    %c2600 = arith.constant 2600 : index
    %c0_155 = arith.constant 0 : index
    %371 = vector.load %arg4[%c2600, %c0_155] : memref<2784x128xf32, #tpu.memory_space<vmem>>, vector<7x35xf32>
    %cst_156 = arith.constant dense<0.000000e+00> : vector<2x35xf32>
    %372 = tpu.matmul %361, %371, %cst_156 {dimension_numbers = #tpu.dot_dimension_numbers<[1], [0], [0], [1], [0, 0, 1, 1], [], []>} : vector<2x7xf32>, vector<7x35xf32>, vector<2x35xf32> -> vector<2x35xf32>
    %c2608 = arith.constant 2608 : index
    %c0_157 = arith.constant 0 : index
    %373 = vector.load %arg4[%c2608, %c0_157] : memref<2784x128xf32, #tpu.memory_space<vmem>>, vector<1x35xf32>
    %374 = vector.broadcast %373 : vector<1x35xf32> to vector<2x35xf32>
    %375 = arith.addf %372, %374 : vector<2x35xf32>
    %cst_158 = arith.constant 0.000000e+00 : f32
    %376 = vector.broadcast %cst_158 : f32 to vector<2x35xf32>
    %377 = arith.maximumf %375, %376 : vector<2x35xf32>
    %c912 = arith.constant 912 : index
    %c0_159 = arith.constant 0 : index
    %378 = vector.load %arg5[%c912, %c0_159] : memref<1512x256xf32, #tpu.memory_space<vmem>>, vector<35x147xf32>
    %cst_160 = arith.constant dense<0.000000e+00> : vector<2x147xf32>
    %379 = tpu.matmul %377, %378, %cst_160 {dimension_numbers = #tpu.dot_dimension_numbers<[1], [0], [0], [1], [0, 0, 1, 1], [], []>} : vector<2x35xf32>, vector<35x147xf32>, vector<2x147xf32> -> vector<2x147xf32>
    %c1008 = arith.constant 1008 : index
    %c0_161 = arith.constant 0 : index
    %380 = vector.load %arg5[%c1008, %c0_161] : memref<1512x256xf32, #tpu.memory_space<vmem>>, vector<1x147xf32>
    %381 = vector.broadcast %380 : vector<1x147xf32> to vector<2x147xf32>
    %382 = arith.addf %379, %381 : vector<2x147xf32>
    %c952 = arith.constant 952 : index
    %c0_162 = arith.constant 0 : index
    %383 = vector.load %arg5[%c952, %c0_162] : memref<1512x256xf32, #tpu.memory_space<vmem>>, vector<49x147xf32>
    %cst_163 = arith.constant dense<0.000000e+00> : vector<2x147xf32>
    %384 = tpu.matmul %11, %383, %cst_163 {dimension_numbers = #tpu.dot_dimension_numbers<[1], [0], [0], [1], [0, 0, 1, 1], [], []>} : vector<2x49xf32>, vector<49x147xf32>, vector<2x147xf32> -> vector<2x147xf32>
    %c1016 = arith.constant 1016 : index
    %c0_164 = arith.constant 0 : index
    %385 = vector.load %arg5[%c1016, %c0_164] : memref<1512x256xf32, #tpu.memory_space<vmem>>, vector<1x147xf32>
    %386 = vector.broadcast %385 : vector<1x147xf32> to vector<2x147xf32>
    %387 = arith.addf %384, %386 : vector<2x147xf32>
    %388 = vector.extract_strided_slice %382 {offsets = [0, 0], sizes = [2, 49], strides = [1, 1]} : vector<2x147xf32> to vector<2x49xf32>
    %389 = vector.extract_strided_slice %387 {offsets = [0, 0], sizes = [2, 49], strides = [1, 1]} : vector<2x147xf32> to vector<2x49xf32>
    %390 = arith.addf %388, %389 : vector<2x49xf32>
    %391 = arith.negf %390 : vector<2x49xf32>
    %392 = math.exp %391 : vector<2x49xf32>
    %cst_165 = arith.constant 1.000000e+00 : f32
    %393 = vector.broadcast %cst_165 : f32 to vector<2x49xf32>
    %394 = arith.addf %393, %392 : vector<2x49xf32>
    %395 = arith.divf %393, %394 : vector<2x49xf32>
    %396 = vector.extract_strided_slice %382 {offsets = [0, 49], sizes = [2, 49], strides = [1, 1]} : vector<2x147xf32> to vector<2x49xf32>
    %397 = vector.extract_strided_slice %387 {offsets = [0, 49], sizes = [2, 49], strides = [1, 1]} : vector<2x147xf32> to vector<2x49xf32>
    %398 = arith.addf %396, %397 : vector<2x49xf32>
    %399 = arith.negf %398 : vector<2x49xf32>
    %400 = math.exp %399 : vector<2x49xf32>
    %cst_166 = arith.constant 1.000000e+00 : f32
    %401 = vector.broadcast %cst_166 : f32 to vector<2x49xf32>
    %402 = arith.addf %401, %400 : vector<2x49xf32>
    %403 = arith.divf %401, %402 : vector<2x49xf32>
    %404 = vector.extract_strided_slice %382 {offsets = [0, 98], sizes = [2, 49], strides = [1, 1]} : vector<2x147xf32> to vector<2x49xf32>
    %405 = vector.extract_strided_slice %387 {offsets = [0, 98], sizes = [2, 49], strides = [1, 1]} : vector<2x147xf32> to vector<2x49xf32>
    %406 = arith.mulf %395, %405 : vector<2x49xf32>
    %407 = arith.addf %404, %406 : vector<2x49xf32>
    %408 = math.tanh %407 : vector<2x49xf32>
    %cst_167 = arith.constant 1.000000e+00 : f32
    %409 = vector.broadcast %cst_167 : f32 to vector<2x49xf32>
    %410 = arith.subf %409, %403 : vector<2x49xf32>
    %411 = arith.mulf %410, %408 : vector<2x49xf32>
    %412 = arith.mulf %403, %11 : vector<2x49xf32>
    %413 = arith.addf %411, %412 : vector<2x49xf32>
    %c2616 = arith.constant 2616 : index
    %c0_168 = arith.constant 0 : index
    %414 = vector.load %arg4[%c2616, %c0_168] : memref<2784x128xf32, #tpu.memory_space<vmem>>, vector<7x35xf32>
    %cst_169 = arith.constant dense<0.000000e+00> : vector<2x35xf32>
    %415 = tpu.matmul %370, %414, %cst_169 {dimension_numbers = #tpu.dot_dimension_numbers<[1], [0], [0], [1], [0, 0, 1, 1], [], []>} : vector<2x7xf32>, vector<7x35xf32>, vector<2x35xf32> -> vector<2x35xf32>
    %c2624 = arith.constant 2624 : index
    %c0_170 = arith.constant 0 : index
    %416 = vector.load %arg4[%c2624, %c0_170] : memref<2784x128xf32, #tpu.memory_space<vmem>>, vector<1x35xf32>
    %417 = vector.broadcast %416 : vector<1x35xf32> to vector<2x35xf32>
    %418 = arith.addf %415, %417 : vector<2x35xf32>
    %cst_171 = arith.constant 0.000000e+00 : f32
    %419 = vector.broadcast %cst_171 : f32 to vector<2x35xf32>
    %420 = arith.maximumf %418, %419 : vector<2x35xf32>
    %c1024 = arith.constant 1024 : index
    %c0_172 = arith.constant 0 : index
    %421 = vector.load %arg5[%c1024, %c0_172] : memref<1512x256xf32, #tpu.memory_space<vmem>>, vector<49x147xf32>
    %cst_173 = arith.constant dense<0.000000e+00> : vector<2x147xf32>
    %422 = tpu.matmul %413, %421, %cst_173 {dimension_numbers = #tpu.dot_dimension_numbers<[1], [0], [0], [1], [0, 0, 1, 1], [], []>} : vector<2x49xf32>, vector<49x147xf32>, vector<2x147xf32> -> vector<2x147xf32>
    %c1080 = arith.constant 1080 : index
    %c0_174 = arith.constant 0 : index
    %423 = vector.load %arg5[%c1080, %c0_174] : memref<1512x256xf32, #tpu.memory_space<vmem>>, vector<35x147xf32>
    %cst_175 = arith.constant dense<0.000000e+00> : vector<2x147xf32>
    %424 = tpu.matmul %420, %423, %cst_175 {dimension_numbers = #tpu.dot_dimension_numbers<[1], [0], [0], [1], [0, 0, 1, 1], [], []>} : vector<2x35xf32>, vector<35x147xf32>, vector<2x147xf32> -> vector<2x147xf32>
    %425 = arith.addf %422, %424 : vector<2x147xf32>
    %c1176 = arith.constant 1176 : index
    %c0_176 = arith.constant 0 : index
    %426 = vector.load %arg5[%c1176, %c0_176] : memref<1512x256xf32, #tpu.memory_space<vmem>>, vector<1x147xf32>
    %427 = vector.broadcast %426 : vector<1x147xf32> to vector<2x147xf32>
    %428 = arith.addf %425, %427 : vector<2x147xf32>
    %c1120 = arith.constant 1120 : index
    %c0_177 = arith.constant 0 : index
    %429 = vector.load %arg5[%c1120, %c0_177] : memref<1512x256xf32, #tpu.memory_space<vmem>>, vector<49x147xf32>
    %cst_178 = arith.constant dense<0.000000e+00> : vector<2x147xf32>
    %430 = tpu.matmul %12, %429, %cst_178 {dimension_numbers = #tpu.dot_dimension_numbers<[1], [0], [0], [1], [0, 0, 1, 1], [], []>} : vector<2x49xf32>, vector<49x147xf32>, vector<2x147xf32> -> vector<2x147xf32>
    %c1184 = arith.constant 1184 : index
    %c0_179 = arith.constant 0 : index
    %431 = vector.load %arg5[%c1184, %c0_179] : memref<1512x256xf32, #tpu.memory_space<vmem>>, vector<1x147xf32>
    %432 = vector.broadcast %431 : vector<1x147xf32> to vector<2x147xf32>
    %433 = arith.addf %430, %432 : vector<2x147xf32>
    %434 = vector.extract_strided_slice %428 {offsets = [0, 0], sizes = [2, 49], strides = [1, 1]} : vector<2x147xf32> to vector<2x49xf32>
    %435 = vector.extract_strided_slice %433 {offsets = [0, 0], sizes = [2, 49], strides = [1, 1]} : vector<2x147xf32> to vector<2x49xf32>
    %436 = arith.addf %434, %435 : vector<2x49xf32>
    %437 = arith.negf %436 : vector<2x49xf32>
    %438 = math.exp %437 : vector<2x49xf32>
    %cst_180 = arith.constant 1.000000e+00 : f32
    %439 = vector.broadcast %cst_180 : f32 to vector<2x49xf32>
    %440 = arith.addf %439, %438 : vector<2x49xf32>
    %441 = arith.divf %439, %440 : vector<2x49xf32>
    %442 = vector.extract_strided_slice %428 {offsets = [0, 49], sizes = [2, 49], strides = [1, 1]} : vector<2x147xf32> to vector<2x49xf32>
    %443 = vector.extract_strided_slice %433 {offsets = [0, 49], sizes = [2, 49], strides = [1, 1]} : vector<2x147xf32> to vector<2x49xf32>
    %444 = arith.addf %442, %443 : vector<2x49xf32>
    %445 = arith.negf %444 : vector<2x49xf32>
    %446 = math.exp %445 : vector<2x49xf32>
    %cst_181 = arith.constant 1.000000e+00 : f32
    %447 = vector.broadcast %cst_181 : f32 to vector<2x49xf32>
    %448 = arith.addf %447, %446 : vector<2x49xf32>
    %449 = arith.divf %447, %448 : vector<2x49xf32>
    %450 = vector.extract_strided_slice %428 {offsets = [0, 98], sizes = [2, 49], strides = [1, 1]} : vector<2x147xf32> to vector<2x49xf32>
    %451 = vector.extract_strided_slice %433 {offsets = [0, 98], sizes = [2, 49], strides = [1, 1]} : vector<2x147xf32> to vector<2x49xf32>
    %452 = arith.mulf %441, %451 : vector<2x49xf32>
    %453 = arith.addf %450, %452 : vector<2x49xf32>
    %454 = math.tanh %453 : vector<2x49xf32>
    %cst_182 = arith.constant 1.000000e+00 : f32
    %455 = vector.broadcast %cst_182 : f32 to vector<2x49xf32>
    %456 = arith.subf %455, %449 : vector<2x49xf32>
    %457 = arith.mulf %456, %454 : vector<2x49xf32>
    %458 = arith.mulf %449, %12 : vector<2x49xf32>
    %459 = arith.addf %457, %458 : vector<2x49xf32>
    %c2088 = arith.constant 2088 : index
    %c0_183 = arith.constant 0 : index
    %460 = vector.load %arg4[%c2088, %c0_183] : memref<2784x128xf32, #tpu.memory_space<vmem>>, vector<49x49xf32>
    %cst_184 = arith.constant dense<0.000000e+00> : vector<2x49xf32>
    %461 = tpu.matmul %459, %460, %cst_184 {dimension_numbers = #tpu.dot_dimension_numbers<[1], [0], [0], [1], [0, 0, 1, 1], [], []>} : vector<2x49xf32>, vector<49x49xf32>, vector<2x49xf32> -> vector<2x49xf32>
    %c2144 = arith.constant 2144 : index
    %c0_185 = arith.constant 0 : index
    %462 = vector.load %arg4[%c2144, %c0_185] : memref<2784x128xf32, #tpu.memory_space<vmem>>, vector<1x49xf32>
    %463 = vector.broadcast %462 : vector<1x49xf32> to vector<2x49xf32>
    %464 = arith.addf %461, %463 : vector<2x49xf32>
    %cst_186 = arith.constant 0.000000e+00 : f32
    %465 = vector.broadcast %cst_186 : f32 to vector<2x49xf32>
    %466 = arith.maximumf %464, %465 : vector<2x49xf32>
    %c2632 = arith.constant 2632 : index
    %c0_187 = arith.constant 0 : index
    %467 = vector.load %arg4[%c2632, %c0_187] : memref<2784x128xf32, #tpu.memory_space<vmem>>, vector<7x70xf32>
    %cst_188 = arith.constant dense<0.000000e+00> : vector<2x70xf32>
    %468 = tpu.matmul %343, %467, %cst_188 {dimension_numbers = #tpu.dot_dimension_numbers<[1], [0], [0], [1], [0, 0, 1, 1], [], []>} : vector<2x7xf32>, vector<7x70xf32>, vector<2x70xf32> -> vector<2x70xf32>
    %c2640 = arith.constant 2640 : index
    %c0_189 = arith.constant 0 : index
    %469 = vector.load %arg4[%c2640, %c0_189] : memref<2784x128xf32, #tpu.memory_space<vmem>>, vector<7x70xf32>
    %cst_190 = arith.constant dense<0.000000e+00> : vector<2x70xf32>
    %470 = tpu.matmul %352, %469, %cst_190 {dimension_numbers = #tpu.dot_dimension_numbers<[1], [0], [0], [1], [0, 0, 1, 1], [], []>} : vector<2x7xf32>, vector<7x70xf32>, vector<2x70xf32> -> vector<2x70xf32>
    %471 = arith.addf %468, %470 : vector<2x70xf32>
    %c2648 = arith.constant 2648 : index
    %c0_191 = arith.constant 0 : index
    %472 = vector.load %arg4[%c2648, %c0_191] : memref<2784x128xf32, #tpu.memory_space<vmem>>, vector<1x70xf32>
    %473 = vector.broadcast %472 : vector<1x70xf32> to vector<2x70xf32>
    %474 = arith.addf %471, %473 : vector<2x70xf32>
    %cst_192 = arith.constant 0.000000e+00 : f32
    %475 = vector.broadcast %cst_192 : f32 to vector<2x70xf32>
    %476 = arith.maximumf %474, %475 : vector<2x70xf32>
    %c1192 = arith.constant 1192 : index
    %c0_193 = arith.constant 0 : index
    %477 = vector.load %arg5[%c1192, %c0_193] : memref<1512x256xf32, #tpu.memory_space<vmem>>, vector<49x147xf32>
    %cst_194 = arith.constant dense<0.000000e+00> : vector<2x147xf32>
    %478 = tpu.matmul %466, %477, %cst_194 {dimension_numbers = #tpu.dot_dimension_numbers<[1], [0], [0], [1], [0, 0, 1, 1], [], []>} : vector<2x49xf32>, vector<49x147xf32>, vector<2x147xf32> -> vector<2x147xf32>
    %c1248 = arith.constant 1248 : index
    %c0_195 = arith.constant 0 : index
    %479 = vector.load %arg5[%c1248, %c0_195] : memref<1512x256xf32, #tpu.memory_space<vmem>>, vector<70x147xf32>
    %cst_196 = arith.constant dense<0.000000e+00> : vector<2x147xf32>
    %480 = tpu.matmul %476, %479, %cst_196 {dimension_numbers = #tpu.dot_dimension_numbers<[1], [0], [0], [1], [0, 0, 1, 1], [], []>} : vector<2x70xf32>, vector<70x147xf32>, vector<2x147xf32> -> vector<2x147xf32>
    %481 = arith.addf %478, %480 : vector<2x147xf32>
    %c1376 = arith.constant 1376 : index
    %c0_197 = arith.constant 0 : index
    %482 = vector.load %arg5[%c1376, %c0_197] : memref<1512x256xf32, #tpu.memory_space<vmem>>, vector<1x147xf32>
    %483 = vector.broadcast %482 : vector<1x147xf32> to vector<2x147xf32>
    %484 = arith.addf %481, %483 : vector<2x147xf32>
    %c1320_198 = arith.constant 1320 : index
    %c0_199 = arith.constant 0 : index
    %485 = vector.load %arg5[%c1320_198, %c0_199] : memref<1512x256xf32, #tpu.memory_space<vmem>>, vector<49x147xf32>
    %cst_200 = arith.constant dense<0.000000e+00> : vector<2x147xf32>
    %486 = tpu.matmul %13, %485, %cst_200 {dimension_numbers = #tpu.dot_dimension_numbers<[1], [0], [0], [1], [0, 0, 1, 1], [], []>} : vector<2x49xf32>, vector<49x147xf32>, vector<2x147xf32> -> vector<2x147xf32>
    %c1384 = arith.constant 1384 : index
    %c0_201 = arith.constant 0 : index
    %487 = vector.load %arg5[%c1384, %c0_201] : memref<1512x256xf32, #tpu.memory_space<vmem>>, vector<1x147xf32>
    %488 = vector.broadcast %487 : vector<1x147xf32> to vector<2x147xf32>
    %489 = arith.addf %486, %488 : vector<2x147xf32>
    %490 = vector.extract_strided_slice %484 {offsets = [0, 0], sizes = [2, 49], strides = [1, 1]} : vector<2x147xf32> to vector<2x49xf32>
    %491 = vector.extract_strided_slice %489 {offsets = [0, 0], sizes = [2, 49], strides = [1, 1]} : vector<2x147xf32> to vector<2x49xf32>
    %492 = arith.addf %490, %491 : vector<2x49xf32>
    %493 = arith.negf %492 : vector<2x49xf32>
    %494 = math.exp %493 : vector<2x49xf32>
    %cst_202 = arith.constant 1.000000e+00 : f32
    %495 = vector.broadcast %cst_202 : f32 to vector<2x49xf32>
    %496 = arith.addf %495, %494 : vector<2x49xf32>
    %497 = arith.divf %495, %496 : vector<2x49xf32>
    %498 = vector.extract_strided_slice %484 {offsets = [0, 49], sizes = [2, 49], strides = [1, 1]} : vector<2x147xf32> to vector<2x49xf32>
    %499 = vector.extract_strided_slice %489 {offsets = [0, 49], sizes = [2, 49], strides = [1, 1]} : vector<2x147xf32> to vector<2x49xf32>
    %500 = arith.addf %498, %499 : vector<2x49xf32>
    %501 = arith.negf %500 : vector<2x49xf32>
    %502 = math.exp %501 : vector<2x49xf32>
    %cst_203 = arith.constant 1.000000e+00 : f32
    %503 = vector.broadcast %cst_203 : f32 to vector<2x49xf32>
    %504 = arith.addf %503, %502 : vector<2x49xf32>
    %505 = arith.divf %503, %504 : vector<2x49xf32>
    %506 = vector.extract_strided_slice %484 {offsets = [0, 98], sizes = [2, 49], strides = [1, 1]} : vector<2x147xf32> to vector<2x49xf32>
    %507 = vector.extract_strided_slice %489 {offsets = [0, 98], sizes = [2, 49], strides = [1, 1]} : vector<2x147xf32> to vector<2x49xf32>
    %508 = arith.mulf %497, %507 : vector<2x49xf32>
    %509 = arith.addf %506, %508 : vector<2x49xf32>
    %510 = math.tanh %509 : vector<2x49xf32>
    %cst_204 = arith.constant 1.000000e+00 : f32
    %511 = vector.broadcast %cst_204 : f32 to vector<2x49xf32>
    %512 = arith.subf %511, %505 : vector<2x49xf32>
    %513 = arith.mulf %512, %510 : vector<2x49xf32>
    %514 = arith.mulf %505, %13 : vector<2x49xf32>
    %515 = arith.addf %513, %514 : vector<2x49xf32>
    %c1392 = arith.constant 1392 : index
    %c0_205 = arith.constant 0 : index
    %516 = vector.load %arg5[%c1392, %c0_205] : memref<1512x256xf32, #tpu.memory_space<vmem>>, vector<49x196xf32>
    %cst_206 = arith.constant dense<0.000000e+00> : vector<2x196xf32>
    %517 = tpu.matmul %459, %516, %cst_206 {dimension_numbers = #tpu.dot_dimension_numbers<[1], [0], [0], [1], [0, 0, 1, 1], [], []>} : vector<2x49xf32>, vector<49x196xf32>, vector<2x196xf32> -> vector<2x196xf32>
    %c1448_207 = arith.constant 1448 : index
    %c0_208 = arith.constant 0 : index
    %518 = vector.load %arg5[%c1448_207, %c0_208] : memref<1512x256xf32, #tpu.memory_space<vmem>>, vector<49x196xf32>
    %cst_209 = arith.constant dense<0.000000e+00> : vector<2x196xf32>
    %519 = tpu.matmul %515, %518, %cst_209 {dimension_numbers = #tpu.dot_dimension_numbers<[1], [0], [0], [1], [0, 0, 1, 1], [], []>} : vector<2x49xf32>, vector<49x196xf32>, vector<2x196xf32> -> vector<2x196xf32>
    %520 = arith.addf %517, %519 : vector<2x196xf32>
    %c1504 = arith.constant 1504 : index
    %c0_210 = arith.constant 0 : index
    %521 = vector.load %arg5[%c1504, %c0_210] : memref<1512x256xf32, #tpu.memory_space<vmem>>, vector<1x196xf32>
    %522 = vector.broadcast %521 : vector<1x196xf32> to vector<2x196xf32>
    %523 = arith.addf %520, %522 : vector<2x196xf32>
    %cst_211 = arith.constant 0.000000e+00 : f32
    %524 = vector.broadcast %cst_211 : f32 to vector<2x196xf32>
    %525 = arith.maximumf %523, %524 : vector<2x196xf32>
    %c2152 = arith.constant 2152 : index
    %c0_212 = arith.constant 0 : index
    %526 = vector.load %arg4[%c2152, %c0_212] : memref<2784x128xf32, #tpu.memory_space<vmem>>, vector<196x49xf32>
    %cst_213 = arith.constant dense<0.000000e+00> : vector<2x49xf32>
    %527 = tpu.matmul %525, %526, %cst_213 {dimension_numbers = #tpu.dot_dimension_numbers<[1], [0], [0], [1], [0, 0, 1, 1], [], []>} : vector<2x196xf32>, vector<196x49xf32>, vector<2x49xf32> -> vector<2x49xf32>
    %c2352 = arith.constant 2352 : index
    %c0_214 = arith.constant 0 : index
    %528 = vector.load %arg4[%c2352, %c0_214] : memref<2784x128xf32, #tpu.memory_space<vmem>>, vector<1x49xf32>
    %529 = vector.broadcast %528 : vector<1x49xf32> to vector<2x49xf32>
    %530 = arith.addf %527, %529 : vector<2x49xf32>
    %cst_215 = arith.constant 0.000000e+00 : f32
    %531 = vector.broadcast %cst_215 : f32 to vector<2x49xf32>
    %532 = arith.maximumf %530, %531 : vector<2x49xf32>
    %c2656 = arith.constant 2656 : index
    %c0_216 = arith.constant 0 : index
    %533 = vector.load %arg4[%c2656, %c0_216] : memref<2784x128xf32, #tpu.memory_space<vmem>>, vector<1x1xf32>
    %534 = vector.broadcast %533 : vector<1x1xf32> to vector<2x49xf32>
    %535 = arith.mulf %532, %534 : vector<2x49xf32>
    %c2360 = arith.constant 2360 : index
    %c0_217 = arith.constant 0 : index
    %536 = vector.load %arg4[%c2360, %c0_217] : memref<2784x128xf32, #tpu.memory_space<vmem>>, vector<49x49xf32>
    %cst_218 = arith.constant dense<0.000000e+00> : vector<2x49xf32>
    %537 = tpu.matmul %515, %536, %cst_218 {dimension_numbers = #tpu.dot_dimension_numbers<[1], [0], [0], [1], [0, 0, 1, 1], [], []>} : vector<2x49xf32>, vector<49x49xf32>, vector<2x49xf32> -> vector<2x49xf32>
    %c2416 = arith.constant 2416 : index
    %c0_219 = arith.constant 0 : index
    %538 = vector.load %arg4[%c2416, %c0_219] : memref<2784x128xf32, #tpu.memory_space<vmem>>, vector<49x49xf32>
    %cst_220 = arith.constant dense<0.000000e+00> : vector<2x49xf32>
    %539 = tpu.matmul %535, %538, %cst_220 {dimension_numbers = #tpu.dot_dimension_numbers<[1], [0], [0], [1], [0, 0, 1, 1], [], []>} : vector<2x49xf32>, vector<49x49xf32>, vector<2x49xf32> -> vector<2x49xf32>
    %540 = arith.addf %537, %539 : vector<2x49xf32>
    %c2472 = arith.constant 2472 : index
    %c0_221 = arith.constant 0 : index
    %541 = vector.load %arg4[%c2472, %c0_221] : memref<2784x128xf32, #tpu.memory_space<vmem>>, vector<1x49xf32>
    %542 = vector.broadcast %541 : vector<1x49xf32> to vector<2x49xf32>
    %543 = arith.addf %540, %542 : vector<2x49xf32>
    %cst_222 = arith.constant 0.000000e+00 : f32
    %544 = vector.broadcast %cst_222 : f32 to vector<2x49xf32>
    %545 = arith.maximumf %543, %544 : vector<2x49xf32>
    %c2480 = arith.constant 2480 : index
    %c0_223 = arith.constant 0 : index
    %546 = vector.load %arg4[%c2480, %c0_223] : memref<2784x128xf32, #tpu.memory_space<vmem>>, vector<49x49xf32>
    %cst_224 = arith.constant dense<0.000000e+00> : vector<2x49xf32>
    %547 = tpu.matmul %459, %546, %cst_224 {dimension_numbers = #tpu.dot_dimension_numbers<[1], [0], [0], [1], [0, 0, 1, 1], [], []>} : vector<2x49xf32>, vector<49x49xf32>, vector<2x49xf32> -> vector<2x49xf32>
    %c2536 = arith.constant 2536 : index
    %c0_225 = arith.constant 0 : index
    %548 = vector.load %arg4[%c2536, %c0_225] : memref<2784x128xf32, #tpu.memory_space<vmem>>, vector<49x49xf32>
    %cst_226 = arith.constant dense<0.000000e+00> : vector<2x49xf32>
    %549 = tpu.matmul %545, %548, %cst_226 {dimension_numbers = #tpu.dot_dimension_numbers<[1], [0], [0], [1], [0, 0, 1, 1], [], []>} : vector<2x49xf32>, vector<49x49xf32>, vector<2x49xf32> -> vector<2x49xf32>
    %550 = arith.addf %547, %549 : vector<2x49xf32>
    %c2592 = arith.constant 2592 : index
    %c0_227 = arith.constant 0 : index
    %551 = vector.load %arg4[%c2592, %c0_227] : memref<2784x128xf32, #tpu.memory_space<vmem>>, vector<1x49xf32>
    %552 = vector.broadcast %551 : vector<1x49xf32> to vector<2x49xf32>
    %553 = arith.addf %550, %552 : vector<2x49xf32>
    %cst_228 = arith.constant 0.000000e+00 : f32
    %554 = vector.broadcast %cst_228 : f32 to vector<2x49xf32>
    %555 = arith.maximumf %553, %554 : vector<2x49xf32>
    %556 = arith.subf %9, %334 : vector<2x7xf32>
    %c2704 = arith.constant 2704 : index
    %c0_229 = arith.constant 0 : index
    %557 = vector.load %arg4[%c2704, %c0_229] : memref<2784x128xf32, #tpu.memory_space<vmem>>, vector<7x49xf32>
    %cst_230 = arith.constant dense<0.000000e+00> : vector<2x49xf32>
    %558 = tpu.matmul %556, %557, %cst_230 {dimension_numbers = #tpu.dot_dimension_numbers<[1], [0], [0], [1], [0, 0, 1, 1], [], []>} : vector<2x7xf32>, vector<7x49xf32>, vector<2x49xf32> -> vector<2x49xf32>
    %559 = arith.mulf %535, %558 : vector<2x49xf32>
    %c2712 = arith.constant 2712 : index
    %c0_231 = arith.constant 0 : index
    %560 = vector.load %arg4[%c2712, %c0_231] : memref<2784x128xf32, #tpu.memory_space<vmem>>, vector<49x7xf32>
    %cst_232 = arith.constant dense<0.000000e+00> : vector<2x7xf32>
    %561 = tpu.matmul %559, %560, %cst_232 {dimension_numbers = #tpu.dot_dimension_numbers<[1], [0], [0], [1], [0, 0, 1, 1], [], []>} : vector<2x49xf32>, vector<49x7xf32>, vector<2x7xf32> -> vector<2x7xf32>
    %562 = arith.addf %334, %561 : vector<2x7xf32>
    %c0_233 = arith.constant 0 : index
    %c0_234 = arith.constant 0 : index
    %c0_235 = arith.constant 0 : index
    %563 = vector.load %arg8[%c0_233, %c0_234, %c0_235] : memref<1x2x256xf32, #tpu.memory_space<vmem>>, vector<1x2x7xf32>
    %564 = vector.shape_cast %563 : vector<1x2x7xf32> to vector<2x7xf32>
    %565 = vector.shape_cast %562 : vector<2x7xf32> to vector<1x2x7xf32>
    tpu.vector_store %arg8[%c0_233, %c0_234, %c0_235], %565 {strides = array<i32>} : memref<1x2x256xf32, #tpu.memory_space<vmem>>, vector<1x2x7xf32>,
    %c0_236 = arith.constant 0 : index
    %c0_237 = arith.constant 0 : index
    %c7 = arith.constant 7 : index
    %566 = vector.load %arg8[%c0_236, %c0_237, %c7] : memref<1x2x256xf32, #tpu.memory_space<vmem>>, vector<1x2x7xf32>
    %567 = vector.shape_cast %566 : vector<1x2x7xf32> to vector<2x7xf32>
    %568 = vector.shape_cast %334 : vector<2x7xf32> to vector<1x2x7xf32>
    tpu.vector_store %arg8[%c0_236, %c0_237, %c7], %568 {strides = array<i32>} : memref<1x2x256xf32, #tpu.memory_space<vmem>>, vector<1x2x7xf32>,
    %c0_238 = arith.constant 0 : index
    %c0_239 = arith.constant 0 : index
    %c14 = arith.constant 14 : index
    %569 = vector.load %arg8[%c0_238, %c0_239, %c14] : memref<1x2x256xf32, #tpu.memory_space<vmem>>, vector<1x2x49xf32>
    %570 = vector.shape_cast %569 : vector<1x2x49xf32> to vector<2x49xf32>
    %571 = vector.shape_cast %555 : vector<2x49xf32> to vector<1x2x49xf32>
    tpu.vector_store %arg8[%c0_238, %c0_239, %c14], %571 {strides = array<i32>} : memref<1x2x256xf32, #tpu.memory_space<vmem>>, vector<1x2x49xf32>,
    %c0_240 = arith.constant 0 : index
    %c0_241 = arith.constant 0 : index
    %c63 = arith.constant 63 : index
    %572 = vector.load %arg8[%c0_240, %c0_241, %c63] : memref<1x2x256xf32, #tpu.memory_space<vmem>>, vector<1x2x49xf32>
    %573 = vector.shape_cast %572 : vector<1x2x49xf32> to vector<2x49xf32>
    %574 = vector.shape_cast %413 : vector<2x49xf32> to vector<1x2x49xf32>
    tpu.vector_store %arg8[%c0_240, %c0_241, %c63], %574 {strides = array<i32>} : memref<1x2x256xf32, #tpu.memory_space<vmem>>, vector<1x2x49xf32>,
    %c0_242 = arith.constant 0 : index
    %c0_243 = arith.constant 0 : index
    %c112 = arith.constant 112 : index
    %575 = vector.load %arg8[%c0_242, %c0_243, %c112] : memref<1x2x256xf32, #tpu.memory_space<vmem>>, vector<1x2x49xf32>
    %576 = vector.shape_cast %575 : vector<1x2x49xf32> to vector<2x49xf32>
    %577 = vector.shape_cast %515 : vector<2x49xf32> to vector<1x2x49xf32>
    tpu.vector_store %arg8[%c0_242, %c0_243, %c112], %577 {strides = array<i32>} : memref<1x2x256xf32, #tpu.memory_space<vmem>>, vector<1x2x49xf32>,
    %c0_244 = arith.constant 0 : index
    %c0_245 = arith.constant 0 : index
    %c161 = arith.constant 161 : index
    %578 = vector.load %arg8[%c0_244, %c0_245, %c161] : memref<1x2x256xf32, #tpu.memory_space<vmem>>, vector<1x2x7xf32>
    %579 = vector.shape_cast %578 : vector<1x2x7xf32> to vector<2x7xf32>
    %580 = vector.shape_cast %4 : vector<2x7xf32> to vector<1x2x7xf32>
    tpu.vector_store %arg8[%c0_244, %c0_245, %c161], %580 {strides = array<i32>} : memref<1x2x256xf32, #tpu.memory_space<vmem>>, vector<1x2x7xf32>,
    %c0_246 = arith.constant 0 : index
    %c0_247 = arith.constant 0 : index
    %c168_248 = arith.constant 168 : index
    %581 = vector.load %arg8[%c0_246, %c0_247, %c168_248] : memref<1x2x256xf32, #tpu.memory_space<vmem>>, vector<1x2x7xf32>
    %582 = vector.shape_cast %581 : vector<1x2x7xf32> to vector<2x7xf32>
    %583 = vector.shape_cast %5 : vector<2x7xf32> to vector<1x2x7xf32>
    tpu.vector_store %arg8[%c0_246, %c0_247, %c168_248], %583 {strides = array<i32>} : memref<1x2x256xf32, #tpu.memory_space<vmem>>, vector<1x2x7xf32>,
    %cst_249 = arith.constant 0.000000e+00 : f32
    %584 = vector.broadcast %cst_249 : f32 to vector<2x81xf32>
    %c0_250 = arith.constant 0 : index
    %c0_251 = arith.constant 0 : index
    %c175 = arith.constant 175 : index
    %585 = vector.load %arg8[%c0_250, %c0_251, %c175] : memref<1x2x256xf32, #tpu.memory_space<vmem>>, vector<1x2x81xf32>
    %586 = vector.shape_cast %585 : vector<1x2x81xf32> to vector<2x81xf32>
    %587 = vector.shape_cast %584 : vector<2x81xf32> to vector<1x2x81xf32>
    tpu.vector_store %arg8[%c0_250, %c0_251, %c175], %587 {strides = array<i32>} : memref<1x2x256xf32, #tpu.memory_space<vmem>>, vector<1x2x81xf32>,
    %588 = tpu.concatenate %562, %4, %5, %334, %9 in 0 : vector<2x7xf32>, vector<2x7xf32>, vector<2x7xf32>, vector<2x7xf32>, vector<2x7xf32> -> vector<10x7xf32>
    %c0_252 = arith.constant 0 : index
    %c0_253 = arith.constant 0 : index
    %589 = vector.load %arg9[%c0_252, %c0_253] : memref<10x7xf32, #tpu.memory_space<vmem>>, vector<10x7xf32>
    tpu.vector_store %arg9[%c0_252, %c0_253], %588 {strides = array<i32>} : memref<10x7xf32, #tpu.memory_space<vmem>>, vector<10x7xf32>,
    %590 = tpu.concatenate %413, %555, %515 in 1 : vector<2x49xf32>, vector<2x49xf32>, vector<2x49xf32> -> vector<2x147xf32>
    %c0_254 = arith.constant 0 : index
    %c0_255 = arith.constant 0 : index
    %591 = vector.load %arg10[%c0_254, %c0_255] : memref<2x147xf32, #tpu.memory_space<vmem>>, vector<2x147xf32>
    tpu.vector_store %arg10[%c0_254, %c0_255], %590 {strides = array<i32>} : memref<2x147xf32, #tpu.memory_space<vmem>>, vector<2x147xf32>,
    return
  }
  func.func @transform_0(%arg0: i32) -> (i32, i32, i32) {
    %c0_i32 = arith.constant 0 : i32
    %c0_i32_0 = arith.constant 0 : i32
    %c0_i32_1 = arith.constant 0 : i32
    return %arg0, %c0_i32, %c0_i32_0 : i32, i32, i32
  }
  func.func @transform_1(%arg0: i32) -> (i32, i32) {
    %c0_i32 = arith.constant 0 : i32
    %c0_i32_0 = arith.constant 0 : i32
    %c0_i32_1 = arith.constant 0 : i32
    return %c0_i32, %c0_i32_0 : i32, i32
  }
  func.func @transform_2(%arg0: i32) -> (i32, i32) {
    %c0_i32 = arith.constant 0 : i32
    %c0_i32_0 = arith.constant 0 : i32
    %c0_i32_1 = arith.constant 0 : i32
    return %c0_i32, %c0_i32_0 : i32, i32
  }
  func.func @transform_3(%arg0: i32) -> (i32, i32) {
    %c0_i32 = arith.constant 0 : i32
    %c0_i32_0 = arith.constant 0 : i32
    %c0_i32_1 = arith.constant 0 : i32
    return %c0_i32, %c0_i32_0 : i32, i32
  }
  func.func @transform_4(%arg0: i32) -> (i32, i32) {
    %c0_i32 = arith.constant 0 : i32
    %c0_i32_0 = arith.constant 0 : i32
    %c0_i32_1 = arith.constant 0 : i32
    return %c0_i32, %c0_i32_0 : i32, i32
  }
  func.func @transform_5(%arg0: i32) -> (i32, i32) {
    %c0_i32 = arith.constant 0 : i32
    %c0_i32_0 = arith.constant 0 : i32
    %c0_i32_1 = arith.constant 0 : i32
    return %c0_i32, %c0_i32_0 : i32, i32
  }
  func.func @transform_6(%arg0: i32) -> (i32, i32) {
    %c0_i32 = arith.constant 0 : i32
    %c0_i32_0 = arith.constant 0 : i32
    %c0_i32_1 = arith.constant 0 : i32
    return %c0_i32, %c0_i32_0 : i32, i32
  }
  func.func @transform_7(%arg0: i32) -> (i32, i32, i32) {
    %c0_i32 = arith.constant 0 : i32
    %c0_i32_0 = arith.constant 0 : i32
    %c0_i32_1 = arith.constant 0 : i32
    return %arg0, %c0_i32, %c0_i32_0 : i32, i32, i32
  }
}

</mosaic_0001>

<llo_original>
// kernel: forward.1
$region0: #{forward.1}
  #allocation0 [shape = 'u32[]', space=smem, size = 0x4, offset = 0x4, fixed_abs, tag = 'smem constant byte address 0x4 - core index']
  #allocation1 [shape = 'u32[72,128]{1,0:T(1,128)}', space=vmem, size = 0x9000, scoped, tag = 'internal scratch']
  #allocation2 [shape = 'f32[10,7]{1,0:T(8,128)}', space=vmem, size = 0x2000, scoped, tag = 'scratch operand']
  #allocation3 [shape = 'f32[2,147]{1,0:T(2,128)}', space=vmem, size = 0x800, scoped, tag = 'scratch operand']
  %s0 = inlined_call_operand.hbm [shape: f32[4,2,7], index: 0, kind: input, shape index: {}]
  %s1 = inlined_call_operand.vmem [shape: f32[10,7], index: 1, kind: input, shape index: {}]
  %s2 = inlined_call_operand.vmem [shape: f32[2,147], index: 2, kind: input, shape index: {}]
  %s3 = inlined_call_operand.hbm [shape: f32[2784,128], index: 3, kind: input, shape index: {}]
  %s4 = inlined_call_operand.hbm [shape: f32[1512,256], index: 4, kind: input, shape index: {}]
  %s5 = inlined_call_operand.hbm [shape: f32[16,384], index: 5, kind: input, shape index: {}]
  %s6 = inlined_call_operand.hbm [shape: f32[40,768], index: 6, kind: input, shape index: {}]
  %s7 = inlined_call_operand.vmem [shape: f32[4,2,256], index: 7, kind: output, shape index: {}]
  %s8 = sld [smem:[#allocation0]]
  $region85: #{forward.1} parent=0
    _
  %s10 = ssub.s32 1, %s8
  %s11 = scalar_select 0, %s10, %s8
  $region1: #{forward.1} parent=0
    #allocation4 [shape = 'u8[2048]{0}', space=vmem, size = 0x800, scoped, tag = 'input window, operand 0']
    #allocation5 [shape = 's32[2]{0}', space=sflag, size = 0x8, scoped, tag = 'scoped memory for forward.1']
    #allocation6 [shape = 'u8[1425408]{0}', space=vmem, size = 0x15c000, scoped, tag = 'input window, operand 3, single buffered']
    #allocation7 [shape = 's32[1]{0}', space=sflag, size = 0x4, scoped, tag = 'scoped memory for forward.1']
    #allocation8 [shape = 'u8[1548288]{0}', space=vmem, size = 0x17a000, scoped, tag = 'input window, operand 4, single buffered']
    #allocation9 [shape = 'u8[24576]{0}', space=vmem, size = 0x6000, scoped, tag = 'input window, operand 5, single buffered']
    #allocation10 [shape = 's32[1]{0}', space=sflag, size = 0x4, scoped, tag = 'scoped memory for forward.1']
    #allocation11 [shape = 'u8[122880]{0}', space=vmem, size = 0x1e000, scoped, tag = 'input window, operand 6, single buffered']
    %12 = vsyncpa [#allocation5], 0
    %s13 = scalar_lea.sflag [#allocation5], 1
    %14 = vsyncpa %s13, 0
    %15 = vsyncpa [#allocation7], 0
    %16 = vsyncpa [#allocation10], 0
    loop: start=0, step=1, limit=6
    $region2: #{forward.1} parent=1 // loop_pre_header
      _
    $region3: #{forward.1} parent=1 // loop_header
      %s18 = sphi 0, %s22
      %p19 = scmp.ge.s32.totalorder %s18, 6
      %s28 = sphi 0, %s30
      %s31 = sphi 0, %s28
      %s32 = sphi 0, %s31
      %s48 = sphi 0, %s32
      %s52 = sphi 0, %s52
      %s54 = sphi 0, %s52
      %s55 = sphi 0, %s54
      %s69 = sphi 0, %s55
      %s73 = sphi 0, %s73
      %s75 = sphi 0, %s73
      %s76 = sphi 0, %s75
      %s90 = sphi 0, %s76
      %s94 = sphi 0, %s94
      %s96 = sphi 0, %s94
      %s97 = sphi 0, %s96
      %s111 = sphi 0, %s97
      %s115 = sphi 0, %s115
      %s117 = sphi 0, %s115
      %s118 = sphi 0, %s117
      %s132 = sphi 0, %s118
      %s136 = sphi 0, %s136
      %s138 = sphi 0, %s136
      %s139 = sphi 0, %s138
      %s153 = sphi 0, %s139
      %s157 = sphi 0, %s157
      %s159 = sphi 0, %s157
      %s160 = sphi 0, %s159
      %s174 = sphi 0, %s160
      %s180 = sphi 0, %s182
      %s183 = sphi 0, %s180
      %s184 = sphi 0, %s183
      %s200 = sphi 0, %s184
    $region4: #{forward.1} parent=1 // loop_header_branch
      %21 = sbr.rel (%p19) target = $region8
    $region5: #{forward.1} parent=1 // loop_body
      %s23 = ssub.s32 %s18, 1
      %s24 = ssub.s32 %s18, 2
      %s25 = sadd.s32 %s18, 1
      %s26 = ssub.s32 %s18, %s25
      %p27 = scmp.eq.s32.totalorder %s26, 0
      %s29 = sadd.s32 %s28, 1
      %s30 = scalar_select %p27, %s28, %s29
      %p33 = pneg %p27
      %p34 = scmp.eq.s32.totalorder %s18, 3
      %p35 = por %p33, %p34
      %p36 = scmp.ne.s32.totalorder %s28, %s31
      %p37 = scmp.eq.s32.totalorder %s18, 0
      %p38 = por %p36, %p37
      %p39 = scmp.ne.s32.totalorder %s28, %s31
      %p40 = scmp.eq.s32.totalorder %s23, 3
      %p41 = por %p39, %p40
      %p42 = scmp.ne.s32.totalorder %s31, %s32
      %p43 = scmp.eq.s32.totalorder %s23, 0
      %p44 = por %p42, %p43
      %p45 = scmp.ne.s32.totalorder %s31, %s32
      %p46 = scmp.eq.s32.totalorder %s24, 3
      %p47 = por %p45, %p46
      %p49 = scmp.ne.s32.totalorder %s32, %s48
      %p50 = scmp.eq.s32.totalorder %s24, 0
      %p51 = por %p49, %p50
      %s53 = sadd.s32 %s52, 1
      %p56 = scmp.eq.s32.totalorder %s18, 3
      %p57 = scmp.ne.s32.totalorder %s52, %s54
      %p58 = scmp.eq.s32.totalorder %s18, 0
      %p59 = por %p57, %p58
      %p60 = scmp.ne.s32.totalorder %s52, %s54
      %p61 = scmp.eq.s32.totalorder %s23, 3
      %p62 = por %p60, %p61
      %p63 = scmp.ne.s32.totalorder %s54, %s55
      %p64 = scmp.eq.s32.totalorder %s23, 0
      %p65 = por %p63, %p64
      %p66 = scmp.ne.s32.totalorder %s54, %s55
      %p67 = scmp.eq.s32.totalorder %s24, 3
      %p68 = por %p66, %p67
      %p70 = scmp.ne.s32.totalorder %s55, %s69
      %p71 = scmp.eq.s32.totalorder %s24, 0
      %p72 = por %p70, %p71
      %s74 = sadd.s32 %s73, 1
      %p77 = scmp.eq.s32.totalorder %s18, 3
      %p78 = scmp.ne.s32.totalorder %s73, %s75
      %p79 = scmp.eq.s32.totalorder %s18, 0
      %p80 = por %p78, %p79
      %p81 = scmp.ne.s32.totalorder %s73, %s75
      %p82 = scmp.eq.s32.totalorder %s23, 3
      %p83 = por %p81, %p82
      %p84 = scmp.ne.s32.totalorder %s75, %s76
      %p85 = scmp.eq.s32.totalorder %s23, 0
      %p86 = por %p84, %p85
      %p87 = scmp.ne.s32.totalorder %s75, %s76
      %p88 = scmp.eq.s32.totalorder %s24, 3
      %p89 = por %p87, %p88
      %p91 = scmp.ne.s32.totalorder %s76, %s90
      %p92 = scmp.eq.s32.totalorder %s24, 0
      %p93 = por %p91, %p92
      %s95 = sadd.s32 %s94, 1
      %p98 = scmp.eq.s32.totalorder %s18, 3
      %p99 = scmp.ne.s32.totalorder %s94, %s96
      %p100 = scmp.eq.s32.totalorder %s18, 0
      %p101 = por %p99, %p100
      %p102 = scmp.ne.s32.totalorder %s94, %s96
      %p103 = scmp.eq.s32.totalorder %s23, 3
      %p104 = por %p102, %p103
      %p105 = scmp.ne.s32.totalorder %s96, %s97
      %p106 = scmp.eq.s32.totalorder %s23, 0
      %p107 = por %p105, %p106
      %p108 = scmp.ne.s32.totalorder %s96, %s97
      %p109 = scmp.eq.s32.totalorder %s24, 3
      %p110 = por %p108, %p109
      %p112 = scmp.ne.s32.totalorder %s97, %s111
      %p113 = scmp.eq.s32.totalorder %s24, 0
      %p114 = por %p112, %p113
      %s116 = sadd.s32 %s115, 1
      %p119 = scmp.eq.s32.totalorder %s18, 3
      %p120 = scmp.ne.s32.totalorder %s115, %s117
      %p121 = scmp.eq.s32.totalorder %s18, 0
      %p122 = por %p120, %p121
      %p123 = scmp.ne.s32.totalorder %s115, %s117
      %p124 = scmp.eq.s32.totalorder %s23, 3
      %p125 = por %p123, %p124
      %p126 = scmp.ne.s32.totalorder %s117, %s118
      %p127 = scmp.eq.s32.totalorder %s23, 0
      %p128 = por %p126, %p127
      %p129 = scmp.ne.s32.totalorder %s117, %s118
      %p130 = scmp.eq.s32.totalorder %s24, 3
      %p131 = por %p129, %p130
      %p133 = scmp.ne.s32.totalorder %s118, %s132
      %p134 = scmp.eq.s32.totalorder %s24, 0
      %p135 = por %p133, %p134
      %s137 = sadd.s32 %s136, 1
      %p140 = scmp.eq.s32.totalorder %s18, 3
      %p141 = scmp.ne.s32.totalorder %s136, %s138
      %p142 = scmp.eq.s32.totalorder %s18, 0
      %p143 = por %p141, %p142
      %p144 = scmp.ne.s32.totalorder %s136, %s138
      %p145 = scmp.eq.s32.totalorder %s23, 3
      %p146 = por %p144, %p145
      %p147 = scmp.ne.s32.totalorder %s138, %s139
      %p148 = scmp.eq.s32.totalorder %s23, 0
      %p149 = por %p147, %p148
      %p150 = scmp.ne.s32.totalorder %s138, %s139
      %p151 = scmp.eq.s32.totalorder %s24, 3
      %p152 = por %p150, %p151
      %p154 = scmp.ne.s32.totalorder %s139, %s153
      %p155 = scmp.eq.s32.totalorder %s24, 0
      %p156 = por %p154, %p155
      %s158 = sadd.s32 %s157, 1
      %p161 = scmp.eq.s32.totalorder %s18, 3
      %p162 = scmp.ne.s32.totalorder %s157, %s159
      %p163 = scmp.eq.s32.totalorder %s18, 0
      %p164 = por %p162, %p163
      %p165 = scmp.ne.s32.totalorder %s157, %s159
      %p166 = scmp.eq.s32.totalorder %s23, 3
      %p167 = por %p165, %p166
      %p168 = scmp.ne.s32.totalorder %s159, %s160
      %p169 = scmp.eq.s32.totalorder %s23, 0
      %p170 = por %p168, %p169
      %p171 = scmp.ne.s32.totalorder %s159, %s160
      %p172 = scmp.eq.s32.totalorder %s24, 3
      %p173 = por %p171, %p172
      %p175 = scmp.ne.s32.totalorder %s160, %s174
      %p176 = scmp.eq.s32.totalorder %s24, 0
      %p177 = por %p175, %p176
      %s178 = ssub.s32 %s18, %s25
      %p179 = scmp.eq.s32.totalorder %s178, 0
      %s181 = sadd.s32 %s180, 1
      %s182 = scalar_select %p179, %s180, %s181
      %p185 = pneg %p179
      %p186 = scmp.eq.s32.totalorder %s18, 3
      %p187 = por %p185, %p186
      %p188 = scmp.ne.s32.totalorder %s180, %s183
      %p189 = scmp.eq.s32.totalorder %s18, 0
      %p190 = por %p188, %p189
      %p191 = scmp.ne.s32.totalorder %s180, %s183
      %p192 = scmp.eq.s32.totalorder %s23, 3
      %p193 = por %p191, %p192
      %p194 = scmp.ne.s32.totalorder %s183, %s184
      %p195 = scmp.eq.s32.totalorder %s23, 0
      %p196 = por %p194, %p195
      %p197 = scmp.ne.s32.totalorder %s183, %s184
      %p198 = scmp.eq.s32.totalorder %s24, 3
      %p199 = por %p197, %p198
      %p201 = scmp.ne.s32.totalorder %s184, %s200
      %p202 = scmp.eq.s32.totalorder %s24, 0
      %p203 = por %p201, %p202
      %p204 = scmp.le.s32.totalorder 1, %s18
      %p205 = scmp.lt.s32.totalorder %s18, 5
      %p206 = pnand %p204, %p205
      %p207 = pneg %p206
      // Predicated region
      $region9: #{forward.1} parent=5 // pred_check
        _
      $region10: #{forward.1} parent=5 // pred_check_branch
        %209 = sbr.rel (%p206) target = $region12
      $region11: #{forward.1} parent=5 // pred_region
        %s210 = ssub.s32 %s18, 1
        // Predicated region
        $region13: #{forward.1} parent=11 // pred_check
          %p211 = pneg %p65
        $region14: #{forward.1} parent=11 // pred_check_branch
          %213 = sbr.rel (%p211) target = $region16
        $region15: #{forward.1} parent=11 // pred_region
          _
        $region16: #{forward.1} parent=11 // pred_fallthru
          _
        // Predicated region
        $region17: #{forward.1} parent=11 // pred_check
          %p214 = pneg %p86
        $region18: #{forward.1} parent=11 // pred_check_branch
          %216 = sbr.rel (%p214) target = $region20
        $region19: #{forward.1} parent=11 // pred_region
          _
        $region20: #{forward.1} parent=11 // pred_fallthru
          _
        // Predicated region
        $region21: #{forward.1} parent=11 // pred_check
          %p217 = pneg %p107
        $region22: #{forward.1} parent=11 // pred_check_branch
          %219 = sbr.rel (%p217) target = $region24
        $region23: #{forward.1} parent=11 // pred_region
          %221 = vsyncadd [#allocation7], 0
          %s222 = sshll.u32 %s3, 4
          %s223 = int_to_ptr.hbm [resolvable:$true] %s222
          %s224 = sshll.u32 [#allocation6], 4
          %s225 = int_to_ptr.vmem [resolvable:$true] %s224
          %230 = dma.hbm_to_vmem [thread:$0]  %s223, 44544, %s225, [#allocation7], 128, 128, 8
        $region24: #{forward.1} parent=11 // pred_fallthru
          _
        // Predicated region
        $region25: #{forward.1} parent=11 // pred_check
          %p231 = pneg %p128
        $region26: #{forward.1} parent=11 // pred_check_branch
          %233 = sbr.rel (%p231) target = $region28
        $region27: #{forward.1} parent=11 // pred_region
          %235 = vsyncadd [#allocation7], 0
          %s236 = sshll.u32 %s4, 4
          %s237 = int_to_ptr.hbm [resolvable:$true] %s236
          %s238 = sshll.u32 [#allocation8], 4
          %s239 = int_to_ptr.vmem [resolvable:$true] %s238
          %244 = dma.hbm_to_vmem [thread:$0]  %s237, 48384, %s239, [#allocation7], 256, 256, 16
        $region28: #{forward.1} parent=11 // pred_fallthru
          _
        // Predicated region
        $region29: #{forward.1} parent=11 // pred_check
          %p245 = pneg %p149
        $region30: #{forward.1} parent=11 // pred_check_branch
          %247 = sbr.rel (%p245) target = $region32
        $region31: #{forward.1} parent=11 // pred_region
          %249 = vsyncadd [#allocation10], 0
          %s250 = sshll.u32 %s5, 4
          %s251 = int_to_ptr.hbm [resolvable:$true] %s250
          %s252 = sshll.u32 [#allocation9], 4
          %s253 = int_to_ptr.vmem [resolvable:$true] %s252
          %258 = dma.hbm_to_vmem [thread:$0]  %s251, 768, %s253, [#allocation10], 384, 384, 24
        $region32: #{forward.1} parent=11 // pred_fallthru
          _
        // Predicated region
        $region33: #{forward.1} parent=11 // pred_check
          %p259 = pneg %p170
        $region34: #{forward.1} parent=11 // pred_check_branch
          %261 = sbr.rel (%p259) target = $region36
        $region35: #{forward.1} parent=11 // pred_region
          %263 = vsyncadd [#allocation10], 0
          %s264 = sshll.u32 %s6, 4
          %s265 = int_to_ptr.hbm [resolvable:$true] %s264
          %s266 = sshll.u32 [#allocation11], 4
          %s267 = int_to_ptr.vmem [resolvable:$true] %s266
          %272 = dma.hbm_to_vmem [thread:$0]  %s265, 3840, %s267, [#allocation10], 768, 768, 48
        $region36: #{forward.1} parent=11 // pred_fallthru
          _
      $region12: #{forward.1} parent=5 // pred_fallthru
        _
      %p273 = scmp.lt.s32.totalorder %s18, 4
      // Predicated region
      $region37: #{forward.1} parent=5 // pred_check
        %p274 = pneg %p273
      $region38: #{forward.1} parent=5 // pred_check_branch
        %276 = sbr.rel (%p274) target = $region40
      $region39: #{forward.1} parent=5 // pred_region
        // Predicated region
        $region41: #{forward.1} parent=39 // pred_check
          %p277 = pneg %p38
        $region42: #{forward.1} parent=39 // pred_check_branch
          %279 = sbr.rel (%p277) target = $region44
        $region43: #{forward.1} parent=39 // pred_region
          %s280 = sand.u32 %s28, 1
          %s281 = scalar_lea.sflag [#allocation5], %s280
          %s282 = sand.u32 %s28, 1
          %s283 = smul.addr %s282, 2
          %s284 = scalar_lea.vmem [#allocation4], %s283
          %286 = vsyncadd %s281, 0
          %s287 = smul.addr %s18, 2
          %s288 = scalar_lea.hbm %s0, %s287
          %s290 = sshll.u32 %s288, 4
          %s291 = int_to_ptr.hbm [resolvable:$true] %s290
          %s292 = sshll.u32 %s284, 4
          %s293 = int_to_ptr.vmem [resolvable:$true] %s292
          %295 = dma.hbm_to_vmem [thread:$0]  %s291, 32, %s293, %s281
        $region44: #{forward.1} parent=39 // pred_fallthru
          _
      $region40: #{forward.1} parent=5 // pred_fallthru
        _
      %p296 = scmp.le.s32.totalorder 1, %s18
      %p297 = scmp.lt.s32.totalorder %s18, 5
      %p298 = pnand %p296, %p297
      %p299 = pneg %p298
      // Predicated region
      $region45: #{forward.1} parent=5 // pred_check
        _
      $region46: #{forward.1} parent=5 // pred_check_branch
        %301 = sbr.rel (%p298) target = $region48
      $region47: #{forward.1} parent=5 // pred_region
        %s302 = ssub.s32 %s18, 1
        %s303 = sand.u32 %s31, 1
        %s304 = scalar_lea.sflag [#allocation5], %s303
        %s305 = sand.u32 %s31, 1
        %s306 = smul.addr %s305, 2
        %s307 = scalar_lea.vmem [#allocation4], %s306
        // Predicated region
        $region49: #{forward.1} parent=47 // pred_check
          %p308 = pneg %p44
        $region50: #{forward.1} parent=47 // pred_check_branch
          %310 = sbr.rel (%p308) target = $region52
        $region51: #{forward.1} parent=47 // pred_region
          %312 = dma.done %s304, 32
        $region52: #{forward.1} parent=47 // pred_fallthru
          _
        // Predicated region
        $region53: #{forward.1} parent=47 // pred_check
          %p313 = pneg %p107
        $region54: #{forward.1} parent=47 // pred_check_branch
          %315 = sbr.rel (%p313) target = $region56
        $region55: #{forward.1} parent=47 // pred_region
          %317 = dma.done [#allocation7], 44544
        $region56: #{forward.1} parent=47 // pred_fallthru
          _
        // Predicated region
        $region57: #{forward.1} parent=47 // pred_check
          %p318 = pneg %p128
        $region58: #{forward.1} parent=47 // pred_check_branch
          %320 = sbr.rel (%p318) target = $region60
        $region59: #{forward.1} parent=47 // pred_region
          %322 = dma.done [#allocation7], 48384
        $region60: #{forward.1} parent=47 // pred_fallthru
          _
        // Predicated region
        $region61: #{forward.1} parent=47 // pred_check
          %p323 = pneg %p149
        $region62: #{forward.1} parent=47 // pred_check_branch
          %325 = sbr.rel (%p323) target = $region64
        $region63: #{forward.1} parent=47 // pred_region
          %327 = dma.done [#allocation10], 768
        $region64: #{forward.1} parent=47 // pred_fallthru
          _
        // Predicated region
        $region65: #{forward.1} parent=47 // pred_check
          %p328 = pneg %p170
        $region66: #{forward.1} parent=47 // pred_check_branch
          %330 = sbr.rel (%p328) target = $region68
        $region67: #{forward.1} parent=47 // pred_region
          %332 = dma.done [#allocation10], 3840
        $region68: #{forward.1} parent=47 // pred_fallthru
          _
        %s333 = sand.u32 %s31, 1
        %s334 = scalar_lea.sflag [#allocation5], %s333
        %s335 = sand.u32 %s31, 1
        %s336 = smul.addr %s335, 2
        %s337 = scalar_lea.vmem [#allocation4], %s336
        %p338 = pneg %p44
        %p339 = pneg %p41
        %p340 = pneg %p65
        %p341 = pneg %p62
        %p342 = pneg %p86
        %p343 = pneg %p83
        %p344 = pneg %p107
        %p345 = pneg %p104
        %p346 = pneg %p128
        %p347 = pneg %p125
        %p348 = pneg %p149
        %p349 = pneg %p146
        %p350 = pneg %p170
        %p351 = pneg %p167
        %p352 = pneg %p196
        %p353 = pneg %p193
        %p354 = scmp.lt.s32.totalorder %s23, 3
        %s355 = scalar_select %p354, %s23, 3
        %s356 = smul.addr %s355, 2
        %s357 = smul.addr %s356, 2
        %s358 = scalar_lea.vmem %s7, %s357
        %p359 = scmp.lt.s32.totalorder %s23, 3
        %s360 = scalar_select %p359, %s23, 3
        %s361 = smul.addr %s360, 2
        %s362 = smul.addr %s361, 2
        %s363 = scalar_lea.vmem %s7, %s362
        %p364 = scmp.eq.s32.totalorder %s23, 0
        // Predicated region
        $region69: #{forward.1} parent=47 // pred_check
          %p365 = pneg %p364
        $region70: #{forward.1} parent=47 // pred_check_branch
          %367 = sbr.rel (%p365) target = $region72
        $region71: #{forward.1} parent=47 // pred_region
          %v368 = vld [vmem:[%s1] sm:$0xff]
          %v369 = vld [vmem:[%s1 + $0x8] sm:$0x3]
          %vm370 = vcmask 56320
          %371 = vst.msk [vmem:[#allocation2] sm:$0xff] %vm370, %v368
          %vm372 = vcmask 50176
          %373 = vst.msk [vmem:[#allocation2 + $0x8] sm:$0x3] %vm372, %v369
          %v374 = vld [vmem:[%s2] sm:$0xf]
          %vm375 = vcmask 1041408
          %vm376 = vcmask 150530
          %vm377 = vmor %vm376, %vm375
          %378 = vst.msk [vmem:[#allocation3] sm:$0xf] %vm377, %v374
        $region72: #{forward.1} parent=47 // pred_fallthru
          _
        %v379 = vld [vmem:[#allocation2] sm:$0xff]
        %v380 = vld [vmem:[#allocation2 + $0x8] sm:$0x3]
        %v381 = vld [vmem:[%s307] sm:$0x3]
        %v382 = vld [vmem:[#allocation3] sm:$0xf]
        %v383 = vld [vmem:[#allocation6 + $0xa68] sm:$0xff]
        %v384 = vld [vmem:[#allocation6 + $0xa70] sm:$0xff]
        %vm385 = vcmask 80896
        %v387 = vsel %vm385, %v383, 0
        %v390 = vsel %vm385, %v384, 0
        %vm392 = vcmask 1041408
        %v394 = vsel %vm392, %v380, 0
        %396 = vmatpush.msra.mxu0 0.0
        %397 = vmatpush.msra.mxu0 0.0
        %398 = vmatpush.msra.mxu0 0.0
        %399 = vmatpush.msra.mxu0 0.0
        %400 = vmatpush.msra.mxu0 0.0
        %401 = vmatpush.msra.mxu0 0.0
        %402 = vmatpush.msra.mxu0 0.0
        %403 = vmatpush.msra.mxu0 0.0
        %404 = vmatpush.msra.mxu0 0.0
        %405 = vmatpush.msra.mxu0 0.0
        %406 = vmatpush.msra.mxu0 0.0
        %407 = vmatpush.msra.mxu0 0.0
        %408 = vmatpush.msra.mxu0 0.0
        %409 = vmatpush.msra.mxu0 0.0
        %410 = vmatpush.msra.mxu0 %v394
        %411 = vmatpush.msra.mxu0 %v379
        %412 = vmatmul.f32.gmra.mxu0 %v387
        %v413 = vpop.f32.mrf.mxu0
        %v414 = vadd.f32 0.0, %v413
        %415 = vmatmul.f32.gmra.mxu0 %v390
        %v416 = vpop.f32.mrf.mxu0
        %v417 = vadd.f32 0.0, %v416
        %418 = vdwg.mxu0
        %v419 = vld [vmem:[#allocation6] sm:$0x7f]
        %v420 = vld [vmem:[#allocation6 + $0x8] sm:$0xff]
        %v421 = vld [vmem:[#allocation6 + $0x10] sm:$0xff]
        %vm422 = vcmask 56320
        %v424 = vsel %vm422, %v414, 0
        %v427 = vsel %vm422, %v417, 0
        %vm429 = vcmask 1046528
        %v431 = vsel %vm429, %v419, 0
        %433 = vmatpush.msra.mxu0 0.0
        %434 = vmatpush.msra.mxu0 0.0
        %435 = vmatpush.msra.mxu0 0.0
        %436 = vmatpush.msra.mxu0 0.0
        %437 = vmatpush.msra.mxu0 0.0
        %438 = vmatpush.msra.mxu0 0.0
        %439 = vmatpush.msra.mxu0 0.0
        %440 = vmatpush.msra.mxu0 0.0
        %441 = vmatpush.msra.mxu0 0.0
        %442 = vmatpush.msra.mxu0 0.0
        %443 = vmatpush.msra.mxu0 0.0
        %444 = vmatpush.msra.mxu0 0.0
        %445 = vmatpush.msra.mxu0 0.0
        %446 = vmatpush.msra.mxu0 0.0
        %447 = vmatpush.msra.mxu0 0.0
        %448 = vmatpush.msra.mxu0 %v431
        %449 = vmatmul.f32.gmra.mxu0 %v424
        %v450 = vpop.f32.mrf.mxu0
        %v451 = vadd.f32 %v420, %v450
        %452 = vmatmul.f32.gmra.mxu0 %v427
        %v453 = vpop.f32.mrf.mxu0
        %v454 = vadd.f32 %v421, %v453
        %455 = vdwg.mxu0
        %v456 = vld [vmem:[#allocation6 + $0x18] sm:$0x1]
        %v457 = vld [vmem:[#allocation6 + $0x20] sm:$0x1]
        %458 = vadd.xlane.f32.xlu0 %v451
        %v459 = vpop.xlane.xlu0 %458
        %460 = vadd.xlane.f32.xlu0 %v454
        %v461 = vpop.xlane.xlu0 %460
        %v462 = vrcp.pop 128.0
        %v463 = vmul.f32 128.0, %v462
        %v464 = vsub.f32 1.0, %v463
        %v465 = vmul.f32 %v462, %v464
        %v466 = vadd.f32 %v462, %v465
        %vm467 = vweird.f32 %v462
        %v468 = vsel %vm467, %v462, %v466
        %v469 = vmul.f32 %v459, %v468
        %v470 = vmul.f32 %v461, %v468
        %v471 = vmul.f32 %v451, %v451
        %v472 = vmul.f32 %v454, %v454
        %473 = vadd.xlane.f32.xlu0 %v471
        %v474 = vpop.xlane.xlu0 %473
        %475 = vadd.xlane.f32.xlu0 %v472
        %v476 = vpop.xlane.xlu0 %475
        %v477 = vmul.f32 %v474, %v468
        %v478 = vmul.f32 %v476, %v468
        %v479 = vsub.f32 %v451, %v469
        %v480 = vsub.f32 %v454, %v470
        %v481 = vmul.f32 %v469, %v469
        %v482 = vmul.f32 %v470, %v470
        %v483 = vsub.f32 %v477, %v481
        %v484 = vsub.f32 %v478, %v482
        %v485 = vadd.f32 %v483, 1e-05
        %v486 = vadd.f32 %v484, 1e-05
        %v487 = vrsqrt.pop %v485
        %v488 = vmul.f32 %v487, %v485
        %v489 = vmul.f32 %v488, %v487
        %v490 = vmul.f32 0.5, %v489
        %v491 = vsub.f32 1.5, %v490
        %v492 = vmul.f32 %v487, %v491
        %vm493 = vweird.f32 %v485
        %vm494 = vweird.f32 %v487
        %vm495 = vmor %vm493, %vm494
        %v496 = vsel %vm495, %v487, %v492
        %v497 = vrsqrt.pop %v486
        %v498 = vmul.f32 %v497, %v486
        %v499 = vmul.f32 %v498, %v497
        %v500 = vmul.f32 0.5, %v499
        %v501 = vsub.f32 1.5, %v500
        %v502 = vmul.f32 %v497, %v501
        %vm503 = vweird.f32 %v486
        %vm504 = vweird.f32 %v497
        %vm505 = vmor %vm503, %vm504
        %v506 = vsel %vm505, %v497, %v502
        %v507 = vmul.f32 %v479, %v496
        %v508 = vmul.f32 %v480, %v506
        %v509 = vperm.slane %v456, 0
        %v510 = vmul.f32 %v507, %v509
        %v511 = vmul.f32 %v508, %v509
        %v512 = vperm.slane %v457, 0
        %v513 = vadd.f32 %v510, %v512
        %v514 = vadd.f32 %v511, %v512
        %v515 = vmul.f32 %v513, 0.5
        %v516 = vmul.f32 %v514, 0.5
        %v517 = vmul.f32 %v513, 0.044715
        %v518 = vmul.f32 %v514, 0.044715
        %v519 = vmul.f32 %v517, %v513
        %v520 = vmul.f32 %v518, %v514
        %v521 = vmul.f32 %v519, %v513
        %v522 = vmul.f32 %v520, %v514
        %v523 = vadd.f32 %v513, %v521
        %v524 = vadd.f32 %v514, %v522
        %v525 = vmul.f32 %v523, 0.7978846
        %v526 = vmul.f32 %v524, 0.7978846
        %v527 = vtanh.pop %v525
        %v528 = vtanh.pop %v526
        %v529 = vadd.f32 %v527, 1.0
        %v530 = vadd.f32 %v528, 1.0
        %v531 = vmul.f32 %v515, %v529
        %v532 = vmul.f32 %v516, %v530
        %v533 = vld [vmem:[#allocation6 + $0x28] sm:$0xff]
        %v534 = vld [vmem:[#allocation6 + $0x30] sm:$0xff]
        %v535 = vld [vmem:[#allocation6 + $0x38] sm:$0xff]
        %v536 = vld [vmem:[#allocation6 + $0x40] sm:$0xff]
        %v537 = vld [vmem:[#allocation6 + $0x48] sm:$0xff]
        %v538 = vld [vmem:[#allocation6 + $0x50] sm:$0xff]
        %v539 = vld [vmem:[#allocation6 + $0x58] sm:$0xff]
        %v540 = vld [vmem:[#allocation6 + $0x60] sm:$0xff]
        %v541 = vld [vmem:[#allocation6 + $0x68] sm:$0xff]
        %v542 = vld [vmem:[#allocation6 + $0x70] sm:$0xff]
        %v543 = vld [vmem:[#allocation6 + $0x78] sm:$0xff]
        %v544 = vld [vmem:[#allocation6 + $0x80] sm:$0xff]
        %v545 = vld [vmem:[#allocation6 + $0x88] sm:$0xff]
        %v546 = vld [vmem:[#allocation6 + $0x90] sm:$0xff]
        %v547 = vld [vmem:[#allocation6 + $0x98] sm:$0xff]
        %v548 = vld [vmem:[#allocation6 + $0xa0] sm:$0xff]
        %v549 = vld [vmem:[#allocation6 + $0xa8] sm:$0x1]
        %v550 = vperm.slane %v549, 0
        %551 = vmatpush.msra.mxu0 %v548
        %552 = vmatpush.msra.mxu0 %v547
        %553 = vmatpush.msra.mxu0 %v546
        %554 = vmatpush.msra.mxu0 %v545
        %555 = vmatpush.msra.mxu0 %v544
        %556 = vmatpush.msra.mxu0 %v543
        %557 = vmatpush.msra.mxu0 %v542
        %558 = vmatpush.msra.mxu0 %v541
        %559 = vmatpush.msra.mxu0 %v540
        %560 = vmatpush.msra.mxu0 %v539
        %561 = vmatpush.msra.mxu0 %v538
        %562 = vmatpush.msra.mxu0 %v537
        %563 = vmatpush.msra.mxu0 %v536
        %564 = vmatpush.msra.mxu0 %v535
        %565 = vmatpush.msra.mxu0 %v534
        %566 = vmatpush.msra.mxu0 %v533
        %567 = vmatmul.f32.gmra.mxu0 %v531
        %v568 = vpop.f32.mrf.mxu0
        %v569 = vadd.f32 %v550, %v568
        %570 = vmatmul.f32.gmra.mxu0 %v532
        %v571 = vpop.f32.mrf.mxu0
        %v572 = vadd.f32 %v550, %v571
        %573 = vdwg.mxu0
        %v574 = vld [vmem:[#allocation6 + $0xb0] sm:$0x1]
        %v575 = vld [vmem:[#allocation6 + $0xb8] sm:$0x1]
        %576 = vadd.xlane.f32.xlu0 %v569
        %v577 = vpop.xlane.xlu0 %576
        %578 = vadd.xlane.f32.xlu0 %v572
        %v579 = vpop.xlane.xlu0 %578
        %v580 = vmul.f32 %v577, %v468
        %v581 = vmul.f32 %v579, %v468
        %v582 = vmul.f32 %v569, %v569
        %v583 = vmul.f32 %v572, %v572
        %584 = vadd.xlane.f32.xlu0 %v582
        %v585 = vpop.xlane.xlu0 %584
        %586 = vadd.xlane.f32.xlu0 %v583
        %v587 = vpop.xlane.xlu0 %586
        %v588 = vmul.f32 %v585, %v468
        %v589 = vmul.f32 %v587, %v468
        %v590 = vsub.f32 %v569, %v580
        %v591 = vsub.f32 %v572, %v581
        %v592 = vmul.f32 %v580, %v580
        %v593 = vmul.f32 %v581, %v581
        %v594 = vsub.f32 %v588, %v592
        %v595 = vsub.f32 %v589, %v593
        %v596 = vadd.f32 %v594, 1e-05
        %v597 = vadd.f32 %v595, 1e-05
        %v598 = vrsqrt.pop %v596
        %v599 = vmul.f32 %v598, %v596
        %v600 = vmul.f32 %v599, %v598
        %v601 = vmul.f32 0.5, %v600
        %v602 = vsub.f32 1.5, %v601
        %v603 = vmul.f32 %v598, %v602
        %vm604 = vweird.f32 %v596
        %vm605 = vweird.f32 %v598
        %vm606 = vmor %vm604, %vm605
        %v607 = vsel %vm606, %v598, %v603
        %v608 = vrsqrt.pop %v597
        %v609 = vmul.f32 %v608, %v597
        %v610 = vmul.f32 %v609, %v608
        %v611 = vmul.f32 0.5, %v610
        %v612 = vsub.f32 1.5, %v611
        %v613 = vmul.f32 %v608, %v612
        %vm614 = vweird.f32 %v597
        %vm615 = vweird.f32 %v608
        %vm616 = vmor %vm614, %vm615
        %v617 = vsel %vm616, %v608, %v613
        %v618 = vmul.f32 %v590, %v607
        %v619 = vmul.f32 %v591, %v617
        %v620 = vperm.slane %v574, 0
        %v621 = vmul.f32 %v618, %v620
        %v622 = vmul.f32 %v619, %v620
        %v623 = vperm.slane %v575, 0
        %v624 = vadd.f32 %v621, %v623
        %v625 = vadd.f32 %v622, %v623
        %v626 = vmul.f32 %v624, 0.5
        %v627 = vmul.f32 %v625, 0.5
        %v628 = vmul.f32 %v624, 0.044715
        %v629 = vmul.f32 %v625, 0.044715
        %v630 = vmul.f32 %v628, %v624
        %v631 = vmul.f32 %v629, %v625
        %v632 = vmul.f32 %v630, %v624
        %v633 = vmul.f32 %v631, %v625
        %v634 = vadd.f32 %v624, %v632
        %v635 = vadd.f32 %v625, %v633
        %v636 = vmul.f32 %v634, 0.7978846
        %v637 = vmul.f32 %v635, 0.7978846
        %v638 = vtanh.pop %v636
        %v639 = vtanh.pop %v637
        %v640 = vadd.f32 %v638, 1.0
        %v641 = vadd.f32 %v639, 1.0
        %v642 = vmul.f32 %v626, %v640
        %v643 = vmul.f32 %v627, %v641
        %v644 = vld [vmem:[#allocation6 + $0xc0] sm:$0xff]
        %v645 = vld [vmem:[#allocation6 + $0xc8] sm:$0xff]
        %v646 = vld [vmem:[#allocation6 + $0xd0] sm:$0xff]
        %v647 = vld [vmem:[#allocation6 + $0xd8] sm:$0xff]
        %v648 = vld [vmem:[#allocation6 + $0xe0] sm:$0xff]
        %v649 = vld [vmem:[#allocation6 + $0xe8] sm:$0xff]
        %v650 = vld [vmem:[#allocation6 + $0xf0] sm:$0xff]
        %v651 = vld [vmem:[#allocation6 + $0xf8] sm:$0xff]
        %v652 = vld [vmem:[#allocation6 + $0x100] sm:$0xff]
        %v653 = vld [vmem:[#allocation6 + $0x108] sm:$0xff]
        %v654 = vld [vmem:[#allocation6 + $0x110] sm:$0xff]
        %v655 = vld [vmem:[#allocation6 + $0x118] sm:$0xff]
        %v656 = vld [vmem:[#allocation6 + $0x120] sm:$0xff]
        %v657 = vld [vmem:[#allocation6 + $0x128] sm:$0xff]
        %v658 = vld [vmem:[#allocation6 + $0x130] sm:$0xff]
        %v659 = vld [vmem:[#allocation6 + $0x138] sm:$0xff]
        %v660 = vld [vmem:[#allocation6 + $0x140] sm:$0x1]
        %v661 = vperm.slane %v660, 0
        %662 = vmatpush.msra.mxu0 %v659
        %663 = vmatpush.msra.mxu0 %v658
        %664 = vmatpush.msra.mxu0 %v657
        %665 = vmatpush.msra.mxu0 %v656
        %666 = vmatpush.msra.mxu0 %v655
        %667 = vmatpush.msra.mxu0 %v654
        %668 = vmatpush.msra.mxu0 %v653
        %669 = vmatpush.msra.mxu0 %v652
        %670 = vmatpush.msra.mxu0 %v651
        %671 = vmatpush.msra.mxu0 %v650
        %672 = vmatpush.msra.mxu0 %v649
        %673 = vmatpush.msra.mxu0 %v648
        %674 = vmatpush.msra.mxu0 %v647
        %675 = vmatpush.msra.mxu0 %v646
        %676 = vmatpush.msra.mxu0 %v645
        %677 = vmatpush.msra.mxu0 %v644
        %678 = vmatmul.f32.gmra.mxu0 %v642
        %v679 = vpop.f32.mrf.mxu0
        %v680 = vadd.f32 %v661, %v679
        %681 = vmatmul.f32.gmra.mxu0 %v643
        %v682 = vpop.f32.mrf.mxu0
        %v683 = vadd.f32 %v661, %v682
        %684 = vdwg.mxu0
        %v685 = vld [vmem:[#allocation6 + $0x148] sm:$0x1]
        %v686 = vld [vmem:[#allocation6 + $0x150] sm:$0x1]
        %687 = vadd.xlane.f32.xlu0 %v680
        %v688 = vpop.xlane.xlu0 %687
        %689 = vadd.xlane.f32.xlu0 %v683
        %v690 = vpop.xlane.xlu0 %689
        %v691 = vmul.f32 %v688, %v468
        %v692 = vmul.f32 %v690, %v468
        %v693 = vmul.f32 %v680, %v680
        %v694 = vmul.f32 %v683, %v683
        %695 = vadd.xlane.f32.xlu0 %v693
        %v696 = vpop.xlane.xlu0 %695
        %697 = vadd.xlane.f32.xlu0 %v694
        %v698 = vpop.xlane.xlu0 %697
        %v699 = vmul.f32 %v696, %v468
        %v700 = vmul.f32 %v698, %v468
        %v701 = vsub.f32 %v680, %v691
        %v702 = vsub.f32 %v683, %v692
        %v703 = vmul.f32 %v691, %v691
        %v704 = vmul.f32 %v692, %v692
        %v705 = vsub.f32 %v699, %v703
        %v706 = vsub.f32 %v700, %v704
        %v707 = vadd.f32 %v705, 1e-05
        %v708 = vadd.f32 %v706, 1e-05
        %v709 = vrsqrt.pop %v707
        %v710 = vmul.f32 %v709, %v707
        %v711 = vmul.f32 %v710, %v709
        %v712 = vmul.f32 0.5, %v711
        %v713 = vsub.f32 1.5, %v712
        %v714 = vmul.f32 %v709, %v713
        %vm715 = vweird.f32 %v707
        %vm716 = vweird.f32 %v709
        %vm717 = vmor %vm715, %vm716
        %v718 = vsel %vm717, %v709, %v714
        %v719 = vrsqrt.pop %v708
        %v720 = vmul.f32 %v719, %v708
        %v721 = vmul.f32 %v720, %v719
        %v722 = vmul.f32 0.5, %v721
        %v723 = vsub.f32 1.5, %v722
        %v724 = vmul.f32 %v719, %v723
        %vm725 = vweird.f32 %v708
        %vm726 = vweird.f32 %v719
        %vm727 = vmor %vm725, %vm726
        %v728 = vsel %vm727, %v719, %v724
        %v729 = vmul.f32 %v701, %v718
        %v730 = vmul.f32 %v702, %v728
        %v731 = vperm.slane %v685, 0
        %v732 = vmul.f32 %v729, %v731
        %v733 = vmul.f32 %v730, %v731
        %v734 = vperm.slane %v686, 0
        %v735 = vadd.f32 %v732, %v734
        %v736 = vadd.f32 %v733, %v734
        %v737 = vmul.f32 %v735, 0.5
        %v738 = vmul.f32 %v736, 0.5
        %v739 = vmul.f32 %v735, 0.044715
        %v740 = vmul.f32 %v736, 0.044715
        %v741 = vmul.f32 %v739, %v735
        %v742 = vmul.f32 %v740, %v736
        %v743 = vmul.f32 %v741, %v735
        %v744 = vmul.f32 %v742, %v736
        %v745 = vadd.f32 %v735, %v743
        %v746 = vadd.f32 %v736, %v744
        %v747 = vmul.f32 %v745, 0.7978846
        %v748 = vmul.f32 %v746, 0.7978846
        %v749 = vtanh.pop %v747
        %v750 = vtanh.pop %v748
        %v751 = vadd.f32 %v749, 1.0
        %v752 = vadd.f32 %v750, 1.0
        %v753 = vmul.f32 %v737, %v751
        %v754 = vmul.f32 %v738, %v752
        %v755 = vld [vmem:[#allocation6 + $0x158] sm:$0xff]
        %v756 = vld [vmem:[#allocation6 + $0x160] sm:$0xff]
        %v757 = vld [vmem:[#allocation6 + $0x168] sm:$0xff]
        %v758 = vld [vmem:[#allocation6 + $0x170] sm:$0xff]
        %v759 = vld [vmem:[#allocation6 + $0x178] sm:$0xff]
        %v760 = vld [vmem:[#allocation6 + $0x180] sm:$0xff]
        %v761 = vld [vmem:[#allocation6 + $0x188] sm:$0xff]
        %v762 = vld [vmem:[#allocation6 + $0x190] sm:$0xff]
        %v763 = vld [vmem:[#allocation6 + $0x198] sm:$0xff]
        %v764 = vld [vmem:[#allocation6 + $0x1a0] sm:$0xff]
        %v765 = vld [vmem:[#allocation6 + $0x1a8] sm:$0xff]
        %v766 = vld [vmem:[#allocation6 + $0x1b0] sm:$0xff]
        %v767 = vld [vmem:[#allocation6 + $0x1b8] sm:$0xff]
        %v768 = vld [vmem:[#allocation6 + $0x1c0] sm:$0xff]
        %v769 = vld [vmem:[#allocation6 + $0x1c8] sm:$0xff]
        %v770 = vld [vmem:[#allocation6 + $0x1d0] sm:$0xff]
        %v771 = vld [vmem:[#allocation6 + $0x1d8] sm:$0x1]
        %v772 = vperm.slane %v771, 0
        %773 = vmatpush.msra.mxu0 %v770
        %774 = vmatpush.msra.mxu0 %v769
        %775 = vmatpush.msra.mxu0 %v768
        %776 = vmatpush.msra.mxu0 %v767
        %777 = vmatpush.msra.mxu0 %v766
        %778 = vmatpush.msra.mxu0 %v765
        %779 = vmatpush.msra.mxu0 %v764
        %780 = vmatpush.msra.mxu0 %v763
        %781 = vmatpush.msra.mxu0 %v762
        %782 = vmatpush.msra.mxu0 %v761
        %783 = vmatpush.msra.mxu0 %v760
        %784 = vmatpush.msra.mxu0 %v759
        %785 = vmatpush.msra.mxu0 %v758
        %786 = vmatpush.msra.mxu0 %v757
        %787 = vmatpush.msra.mxu0 %v756
        %788 = vmatpush.msra.mxu0 %v755
        %789 = vmatmul.f32.gmra.mxu0 %v753
        %v790 = vpop.f32.mrf.mxu0
        %v791 = vadd.f32 %v772, %v790
        %792 = vmatmul.f32.gmra.mxu0 %v754
        %v793 = vpop.f32.mrf.mxu0
        %v794 = vadd.f32 %v772, %v793
        %795 = vdwg.mxu0
        %v796 = vld [vmem:[#allocation6 + $0x1e0] sm:$0x1]
        %v797 = vld [vmem:[#allocation6 + $0x1e8] sm:$0x1]
        %798 = vadd.xlane.f32.xlu0 %v791
        %v799 = vpop.xlane.xlu0 %798
        %800 = vadd.xlane.f32.xlu0 %v794
        %v801 = vpop.xlane.xlu0 %800
        %v802 = vmul.f32 %v799, %v468
        %v803 = vmul.f32 %v801, %v468
        %v804 = vmul.f32 %v791, %v791
        %v805 = vmul.f32 %v794, %v794
        %806 = vadd.xlane.f32.xlu0 %v804
        %v807 = vpop.xlane.xlu0 %806
        %808 = vadd.xlane.f32.xlu0 %v805
        %v809 = vpop.xlane.xlu0 %808
        %v810 = vmul.f32 %v807, %v468
        %v811 = vmul.f32 %v809, %v468
        %v812 = vsub.f32 %v791, %v802
        %v813 = vsub.f32 %v794, %v803
        %v814 = vmul.f32 %v802, %v802
        %v815 = vmul.f32 %v803, %v803
        %v816 = vsub.f32 %v810, %v814
        %v817 = vsub.f32 %v811, %v815
        %v818 = vadd.f32 %v816, 1e-05
        %v819 = vadd.f32 %v817, 1e-05
        %v820 = vrsqrt.pop %v818
        %v821 = vmul.f32 %v820, %v818
        %v822 = vmul.f32 %v821, %v820
        %v823 = vmul.f32 0.5, %v822
        %v824 = vsub.f32 1.5, %v823
        %v825 = vmul.f32 %v820, %v824
        %vm826 = vweird.f32 %v818
        %vm827 = vweird.f32 %v820
        %vm828 = vmor %vm826, %vm827
        %v829 = vsel %vm828, %v820, %v825
        %v830 = vrsqrt.pop %v819
        %v831 = vmul.f32 %v830, %v819
        %v832 = vmul.f32 %v831, %v830
        %v833 = vmul.f32 0.5, %v832
        %v834 = vsub.f32 1.5, %v833
        %v835 = vmul.f32 %v830, %v834
        %vm836 = vweird.f32 %v819
        %vm837 = vweird.f32 %v830
        %vm838 = vmor %vm836, %vm837
        %v839 = vsel %vm838, %v830, %v835
        %v840 = vmul.f32 %v812, %v829
        %v841 = vmul.f32 %v813, %v839
        %v842 = vperm.slane %v796, 0
        %v843 = vmul.f32 %v840, %v842
        %v844 = vmul.f32 %v841, %v842
        %v845 = vperm.slane %v797, 0
        %v846 = vadd.f32 %v843, %v845
        %v847 = vadd.f32 %v844, %v845
        %v848 = vmul.f32 %v846, 0.5
        %v849 = vmul.f32 %v847, 0.5
        %v850 = vmul.f32 %v846, 0.044715
        %v851 = vmul.f32 %v847, 0.044715
        %v852 = vmul.f32 %v850, %v846
        %v853 = vmul.f32 %v851, %v847
        %v854 = vmul.f32 %v852, %v846
        %v855 = vmul.f32 %v853, %v847
        %v856 = vadd.f32 %v846, %v854
        %v857 = vadd.f32 %v847, %v855
        %v858 = vmul.f32 %v856, 0.7978846
        %v859 = vmul.f32 %v857, 0.7978846
        %v860 = vtanh.pop %v858
        %v861 = vtanh.pop %v859
        %v862 = vadd.f32 %v860, 1.0
        %v863 = vadd.f32 %v861, 1.0
        %v864 = vmul.f32 %v848, %v862
        %v865 = vmul.f32 %v849, %v863
        %v866 = vld [vmem:[#allocation6 + $0x1f0] sm:$0xff]
        %v867 = vld [vmem:[#allocation6 + $0x1f8] sm:$0xff]
        %v868 = vld [vmem:[#allocation6 + $0x200] sm:$0xff]
        %v869 = vld [vmem:[#allocation6 + $0x208] sm:$0xff]
        %v870 = vld [vmem:[#allocation6 + $0x210] sm:$0xff]
        %v871 = vld [vmem:[#allocation6 + $0x218] sm:$0xff]
        %v872 = vld [vmem:[#allocation6 + $0x220] sm:$0xff]
        %v873 = vld [vmem:[#allocation6 + $0x228] sm:$0xff]
        %v874 = vld [vmem:[#allocation6 + $0x230] sm:$0xff]
        %v875 = vld [vmem:[#allocation6 + $0x238] sm:$0xff]
        %v876 = vld [vmem:[#allocation6 + $0x240] sm:$0xff]
        %v877 = vld [vmem:[#allocation6 + $0x248] sm:$0xff]
        %v878 = vld [vmem:[#allocation6 + $0x250] sm:$0xff]
        %v879 = vld [vmem:[#allocation6 + $0x258] sm:$0xff]
        %v880 = vld [vmem:[#allocation6 + $0x260] sm:$0xff]
        %v881 = vld [vmem:[#allocation6 + $0x268] sm:$0xff]
        %v882 = vld [vmem:[#allocation6 + $0x270] sm:$0x1]
        %v883 = vperm.slane %v882, 0
        %884 = vmatpush.msra.mxu0 %v881
        %885 = vmatpush.msra.mxu0 %v880
        %886 = vmatpush.msra.mxu0 %v879
        %887 = vmatpush.msra.mxu0 %v878
        %888 = vmatpush.msra.mxu0 %v877
        %889 = vmatpush.msra.mxu0 %v876
        %890 = vmatpush.msra.mxu0 %v875
        %891 = vmatpush.msra.mxu0 %v874
        %892 = vmatpush.msra.mxu0 %v873
        %893 = vmatpush.msra.mxu0 %v872
        %894 = vmatpush.msra.mxu0 %v871
        %895 = vmatpush.msra.mxu0 %v870
        %896 = vmatpush.msra.mxu0 %v869
        %897 = vmatpush.msra.mxu0 %v868
        %898 = vmatpush.msra.mxu0 %v867
        %899 = vmatpush.msra.mxu0 %v866
        %900 = vmatmul.f32.gmra.mxu0 %v864
        %v901 = vpop.f32.mrf.mxu0
        %v902 = vadd.f32 %v883, %v901
        %903 = vmatmul.f32.gmra.mxu0 %v865
        %v904 = vpop.f32.mrf.mxu0
        %v905 = vadd.f32 %v883, %v904
        %906 = vdwg.mxu0
        %v907 = vld [vmem:[#allocation6 + $0x278] sm:$0xff]
        %v908 = vld [vmem:[#allocation6 + $0x280] sm:$0xff]
        %v909 = vld [vmem:[#allocation6 + $0x288] sm:$0xff]
        %v910 = vld [vmem:[#allocation6 + $0x290] sm:$0xff]
        %v911 = vld [vmem:[#allocation6 + $0x298] sm:$0x1]
        %v912 = vperm.slane %v911, 0
        %vm913 = vcmask 261120
        %v915 = vsel %vm913, %v902, 0
        %v918 = vsel %vm913, %v905, 0
        %920 = vmatpush.msra.mxu0 0.0
        %921 = vmatpush.msra.mxu0 0.0
        %922 = vmatpush.msra.mxu0 0.0
        %923 = vmatpush.msra.mxu0 0.0
        %924 = vmatpush.msra.mxu0 0.0
        %925 = vmatpush.msra.mxu0 0.0
        %926 = vmatpush.msra.mxu0 0.0
        %927 = vmatpush.msra.mxu0 0.0
        %928 = vmatpush.msra.mxu0 0.0
        %929 = vmatpush.msra.mxu0 0.0
        %930 = vmatpush.msra.mxu0 0.0
        %931 = vmatpush.msra.mxu0 0.0
        %932 = vmatpush.msra.mxu0 %v910
        %933 = vmatpush.msra.mxu0 %v909
        %934 = vmatpush.msra.mxu0 %v908
        %935 = vmatpush.msra.mxu0 %v907
        %936 = vmatmul.f32.gmra.mxu0 %v915
        %v937 = vpop.f32.mrf.mxu0
        %v938 = vadd.f32 %v912, %v937
        %939 = vmatmul.f32.gmra.mxu0 %v918
        %v940 = vpop.f32.mrf.mxu0
        %v941 = vadd.f32 %v912, %v940
        %942 = vdwg.mxu0
        %v943 = vld [vmem:[#allocation6 + $0x2a0] sm:$0xff]
        %v944 = vld [vmem:[#allocation6 + $0x2a8] sm:$0xff]
        %v945 = vld [vmem:[#allocation6 + $0x2b0] sm:$0xff]
        %v946 = vld [vmem:[#allocation6 + $0x2b8] sm:$0xff]
        %v947 = vld [vmem:[#allocation6 + $0x2c0] sm:$0x1]
        %v948 = vperm.slane %v947, 0
        %949 = vmatpush.msra.mxu0 0.0
        %950 = vmatpush.msra.mxu0 0.0
        %951 = vmatpush.msra.mxu0 0.0
        %952 = vmatpush.msra.mxu0 0.0
        %953 = vmatpush.msra.mxu0 0.0
        %954 = vmatpush.msra.mxu0 0.0
        %955 = vmatpush.msra.mxu0 0.0
        %956 = vmatpush.msra.mxu0 0.0
        %957 = vmatpush.msra.mxu0 0.0
        %958 = vmatpush.msra.mxu0 0.0
        %959 = vmatpush.msra.mxu0 0.0
        %960 = vmatpush.msra.mxu0 0.0
        %961 = vmatpush.msra.mxu0 %v946
        %962 = vmatpush.msra.mxu0 %v945
        %963 = vmatpush.msra.mxu0 %v944
        %964 = vmatpush.msra.mxu0 %v943
        %965 = vmatmul.f32.gmra.mxu0 %v915
        %v966 = vpop.f32.mrf.mxu0
        %v967 = vadd.f32 %v948, %v966
        %968 = vmatmul.f32.gmra.mxu0 %v918
        %v969 = vpop.f32.mrf.mxu0
        %v970 = vadd.f32 %v948, %v969
        %971 = vdwg.mxu0
        %v972 = vld [vmem:[#allocation6 + $0x2c8] sm:$0xff]
        %v973 = vld [vmem:[#allocation6 + $0x2d0] sm:$0xff]
        %v974 = vld [vmem:[#allocation6 + $0x2d8] sm:$0xff]
        %v975 = vld [vmem:[#allocation6 + $0x2e0] sm:$0xff]
        %v976 = vld [vmem:[#allocation6 + $0x2e8] sm:$0x1]
        %v977 = vperm.slane %v976, 0
        %978 = vmatpush.msra.mxu0 0.0
        %979 = vmatpush.msra.mxu0 0.0
        %980 = vmatpush.msra.mxu0 0.0
        %981 = vmatpush.msra.mxu0 0.0
        %982 = vmatpush.msra.mxu0 0.0
        %983 = vmatpush.msra.mxu0 0.0
        %984 = vmatpush.msra.mxu0 0.0
        %985 = vmatpush.msra.mxu0 0.0
        %986 = vmatpush.msra.mxu0 0.0
        %987 = vmatpush.msra.mxu0 0.0
        %988 = vmatpush.msra.mxu0 0.0
        %989 = vmatpush.msra.mxu0 0.0
        %990 = vmatpush.msra.mxu0 %v975
        %991 = vmatpush.msra.mxu0 %v974
        %992 = vmatpush.msra.mxu0 %v973
        %993 = vmatpush.msra.mxu0 %v972
        %994 = vmatmul.f32.gmra.mxu0 %v915
        %v995 = vpop.f32.mrf.mxu0
        %v996 = vadd.f32 %v977, %v995
        %997 = vmatmul.f32.gmra.mxu0 %v918
        %v998 = vpop.f32.mrf.mxu0
        %v999 = vadd.f32 %v977, %v998
        %1000 = vdwg.mxu0
        %v1001 = vld [vmem:[#allocation6 + $0x2f0] sm:$0xff]
        %v1002 = vld [vmem:[#allocation6 + $0x2f8] sm:$0xff]
        %v1003 = vld [vmem:[#allocation6 + $0x300] sm:$0xff]
        %v1004 = vld [vmem:[#allocation6 + $0x308] sm:$0xff]
        %v1005 = vld [vmem:[#allocation6 + $0xa78] sm:$0xff]
        %v1006 = vld [vmem:[#allocation6 + $0xa80] sm:$0xff]
        %v1007 = vld [vmem:[#allocation6 + $0x310] sm:$0x1]
        %v1008 = vperm.slane %v1007, 0
        %v1009 = vadd.f32 %v1008, 0.0
        %vm1010 = vcmask 130048
        %v1012 = vsel %vm1010, %v938, 0
        %v1015 = vsel %vm1010, %v941, 0
        %v1018 = vsel %vm1010, %v967, 0
        %v1021 = vsel %vm1010, %v970, 0
        %1023 = vmatpush.xpose.msra.mxu0 0.0
        %1024 = vmatpush.xpose.msra.mxu0 0.0
        %1025 = vmatpush.xpose.msra.mxu0 0.0
        %1026 = vmatpush.xpose.msra.mxu0 0.0
        %1027 = vmatpush.xpose.msra.mxu0 0.0
        %1028 = vmatpush.xpose.msra.mxu0 0.0
        %1029 = vmatpush.xpose.msra.mxu0 0.0
        %1030 = vmatpush.xpose.msra.mxu0 0.0
        %1031 = vmatpush.xpose.msra.mxu0 0.0
        %1032 = vmatpush.xpose.msra.mxu0 0.0
        %1033 = vmatpush.xpose.msra.mxu0 0.0
        %1034 = vmatpush.xpose.msra.mxu0 0.0
        %1035 = vmatpush.xpose.msra.mxu0 0.0
        %1036 = vmatpush.xpose.msra.mxu0 0.0
        %1037 = vmatpush.xpose.msra.mxu0 %v1021
        %1038 = vmatpush.xpose.msra.mxu0 %v1018
        %1039 = vmatmul.f32.gmra.mxu0 %v1012
        %v1040 = vpop.f32.mrf.mxu0
        %v1041 = vadd.f32 0.0, %v1040
        %1042 = vmatmul.f32.gmra.mxu0 %v1015
        %v1043 = vpop.f32.mrf.mxu0
        %v1044 = vadd.f32 0.0, %v1043
        %1045 = vdwg.mxu0
        %v1046 = vmul.f32 %v1041, 0.25
        %v1047 = vmul.f32 %v1044, 0.25
        %v1048 = vadd.f32 %v1046, %v1005
        %v1049 = vadd.f32 %v1047, %v1006
        %v1050 = vsel %vm1010, %v1048, -inf
        %1051 = vmax.xlane.f32.xlu0 %v1050
        %v1052 = vpop.xlane.xlu0 %1051
        %v1053 = vsel %vm1010, %v1049, -inf
        %1054 = vmax.xlane.f32.xlu0 %v1053
        %v1055 = vpop.xlane.xlu0 %1054
        %v1056 = vsub.f32 %v1048, %v1052
        %v1057 = vsub.f32 %v1049, %v1055
        %v1058 = vmul.f32 %v1056, 1.442695
        %v1059 = vpow.pop %v1058
        %v1060 = vmul.f32 %v1057, 1.442695
        %v1061 = vpow.pop %v1060
        %v1062 = vsel %vm1010, %v1059, 0.0
        %1063 = vadd.xlane.f32.xlu0 %v1062
        %v1064 = vpop.xlane.xlu0 %1063
        %v1065 = vsel %vm1010, %v1061, 0.0
        %1066 = vadd.xlane.f32.xlu0 %v1065
        %v1067 = vpop.xlane.xlu0 %1066
        %v1068 = vrcp.pop %v1064
        %v1069 = vrcp.pop %v1067
        %v1070 = vmul.f32 %v1059, %v1068
        %v1071 = vmul.f32 %v1061, %v1069
        %v1073 = vsel %vm1010, %v1070, 0
        %v1076 = vsel %vm1010, %v1071, 0
        %1078 = vmatpush.msra.mxu0 0.0
        %1079 = vmatpush.msra.mxu0 0.0
        %1080 = vmatpush.msra.mxu0 0.0
        %1081 = vmatpush.msra.mxu0 0.0
        %1082 = vmatpush.msra.mxu0 0.0
        %1083 = vmatpush.msra.mxu0 0.0
        %1084 = vmatpush.msra.mxu0 0.0
        %1085 = vmatpush.msra.mxu0 0.0
        %1086 = vmatpush.msra.mxu0 0.0
        %1087 = vmatpush.msra.mxu0 0.0
        %1088 = vmatpush.msra.mxu0 0.0
        %1089 = vmatpush.msra.mxu0 0.0
        %1090 = vmatpush.msra.mxu0 0.0
        %1091 = vmatpush.msra.mxu0 0.0
        %1092 = vmatpush.msra.mxu0 %v999
        %1093 = vmatpush.msra.mxu0 %v996
        %1094 = vmatmul.f32.gmra.mxu0 %v1073
        %v1095 = vpop.f32.mrf.mxu0
        %v1096 = vadd.f32 0.0, %v1095
        %1097 = vmatmul.f32.gmra.mxu0 %v1076
        %v1098 = vpop.f32.mrf.mxu0
        %v1099 = vadd.f32 0.0, %v1098
        %1100 = vdwg.mxu0
        %v1102 = vsel %vm1010, %v1096, 0
        %v1105 = vsel %vm1010, %v1099, 0
        %1107 = vmatpush.msra.mxu0 0.0
        %1108 = vmatpush.msra.mxu0 0.0
        %1109 = vmatpush.msra.mxu0 0.0
        %1110 = vmatpush.msra.mxu0 0.0
        %1111 = vmatpush.msra.mxu0 0.0
        %1112 = vmatpush.msra.mxu0 0.0
        %1113 = vmatpush.msra.mxu0 0.0
        %1114 = vmatpush.msra.mxu0 0.0
        %1115 = vmatpush.msra.mxu0 0.0
        %1116 = vmatpush.msra.mxu0 0.0
        %1117 = vmatpush.msra.mxu0 0.0
        %1118 = vmatpush.msra.mxu0 0.0
        %1119 = vmatpush.msra.mxu0 0.0
        %1120 = vmatpush.msra.mxu0 0.0
        %1121 = vmatpush.msra.mxu0 %v1002
        %1122 = vmatpush.msra.mxu0 %v1001
        %1123 = vmatmul.f32.gmra.mxu0 %v1102
        %v1124 = vpop.f32.mrf.mxu0
        %v1125 = vadd.f32 0.0, %v1124
        %1126 = vmatmul.f32.gmra.mxu0 %v1105
        %v1127 = vpop.f32.mrf.mxu0
        %v1128 = vadd.f32 0.0, %v1127
        %1129 = vdwg.mxu0
        %v1130 = vadd.f32 %v1009, %v1125
        %v1131 = vadd.f32 %v1009, %v1128
        %1132 = vrot.lane.b32.xlu0 %v938, 112
        %v1133 = vpop.permute.xlu0 %1132
        %1134 = vrot.lane.b32.xlu0 %v941, 112
        %v1135 = vpop.permute.xlu0 %1134
        %1136 = vrot.lane.b32.xlu0 %v967, 112
        %v1137 = vpop.permute.xlu0 %1136
        %1138 = vrot.lane.b32.xlu0 %v970, 112
        %v1139 = vpop.permute.xlu0 %1138
        %v1140 = vsel %vm1010, %v1133, 0
        %v1142 = vsel %vm1010, %v1135, 0
        %v1144 = vsel %vm1010, %v1137, 0
        %v1146 = vsel %vm1010, %v1139, 0
        %1148 = vmatpush.xpose.msra.mxu0 0.0
        %1149 = vmatpush.xpose.msra.mxu0 0.0
        %1150 = vmatpush.xpose.msra.mxu0 0.0
        %1151 = vmatpush.xpose.msra.mxu0 0.0
        %1152 = vmatpush.xpose.msra.mxu0 0.0
        %1153 = vmatpush.xpose.msra.mxu0 0.0
        %1154 = vmatpush.xpose.msra.mxu0 0.0
        %1155 = vmatpush.xpose.msra.mxu0 0.0
        %1156 = vmatpush.xpose.msra.mxu0 0.0
        %1157 = vmatpush.xpose.msra.mxu0 0.0
        %1158 = vmatpush.xpose.msra.mxu0 0.0
        %1159 = vmatpush.xpose.msra.mxu0 0.0
        %1160 = vmatpush.xpose.msra.mxu0 0.0
        %1161 = vmatpush.xpose.msra.mxu0 0.0
        %1162 = vmatpush.xpose.msra.mxu0 %v1146
        %1163 = vmatpush.xpose.msra.mxu0 %v1144
        %1164 = vmatmul.f32.gmra.mxu0 %v1140
        %v1165 = vpop.f32.mrf.mxu0
        %v1166 = vadd.f32 0.0, %v1165
        %1167 = vmatmul.f32.gmra.mxu0 %v1142
        %v1168 = vpop.f32.mrf.mxu0
        %v1169 = vadd.f32 0.0, %v1168
        %1170 = vdwg.mxu0
        %v1171 = vmul.f32 %v1166, 0.25
        %v1172 = vmul.f32 %v1169, 0.25
        %v1173 = vadd.f32 %v1171, %v1005
        %v1174 = vadd.f32 %v1172, %v1006
        %v1175 = vsel %vm1010, %v1173, -inf
        %1176 = vmax.xlane.f32.xlu0 %v1175
        %v1177 = vpop.xlane.xlu0 %1176
        %v1178 = vsel %vm1010, %v1174, -inf
        %1179 = vmax.xlane.f32.xlu0 %v1178
        %v1180 = vpop.xlane.xlu0 %1179
        %v1181 = vsub.f32 %v1173, %v1177
        %v1182 = vsub.f32 %v1174, %v1180
        %v1183 = vmul.f32 %v1181, 1.442695
        %v1184 = vpow.pop %v1183
        %v1185 = vmul.f32 %v1182, 1.442695
        %v1186 = vpow.pop %v1185
        %v1187 = vsel %vm1010, %v1184, 0.0
        %1188 = vadd.xlane.f32.xlu0 %v1187
        %v1189 = vpop.xlane.xlu0 %1188
        %v1190 = vsel %vm1010, %v1186, 0.0
        %1191 = vadd.xlane.f32.xlu0 %v1190
        %v1192 = vpop.xlane.xlu0 %1191
        %v1193 = vrcp.pop %v1189
        %v1194 = vrcp.pop %v1192
        %v1195 = vmul.f32 %v1184, %v1193
        %v1196 = vmul.f32 %v1186, %v1194
        %1199 = vrot.lane.b32.xlu0 %v996, 112
        %v1200 = vpop.permute.xlu0 %1199
        %1201 = vrot.lane.b32.xlu0 %v999, 112
        %v1202 = vpop.permute.xlu0 %1201
        %v1206 = vsel %vm1010, %v1195, 0
        %v1209 = vsel %vm1010, %v1196, 0
        %1211 = vmatpush.msra.mxu0 0.0
        %1212 = vmatpush.msra.mxu0 0.0
        %1213 = vmatpush.msra.mxu0 0.0
        %1214 = vmatpush.msra.mxu0 0.0
        %1215 = vmatpush.msra.mxu0 0.0
        %1216 = vmatpush.msra.mxu0 0.0
        %1217 = vmatpush.msra.mxu0 0.0
        %1218 = vmatpush.msra.mxu0 0.0
        %1219 = vmatpush.msra.mxu0 0.0
        %1220 = vmatpush.msra.mxu0 0.0
        %1221 = vmatpush.msra.mxu0 0.0
        %1222 = vmatpush.msra.mxu0 0.0
        %1223 = vmatpush.msra.mxu0 0.0
        %1224 = vmatpush.msra.mxu0 0.0
        %1225 = vmatpush.msra.mxu0 %v1202
        %1226 = vmatpush.msra.mxu0 %v1200
        %1227 = vmatmul.f32.gmra.mxu0 %v1206
        %v1228 = vpop.f32.mrf.mxu0
        %v1229 = vadd.f32 0.0, %v1228
        %1230 = vmatmul.f32.gmra.mxu0 %v1209
        %v1231 = vpop.f32.mrf.mxu0
        %v1232 = vadd.f32 0.0, %v1231
        %1233 = vdwg.mxu0
        %v1235 = vsel %vm1010, %v1229, 0
        %v1238 = vsel %vm1010, %v1232, 0
        %1240 = vmatpush.msra.mxu0 0.0
        %1241 = vmatpush.msra.mxu0 0.0
        %1242 = vmatpush.msra.mxu0 0.0
        %1243 = vmatpush.msra.mxu0 0.0
        %1244 = vmatpush.msra.mxu0 0.0
        %1245 = vmatpush.msra.mxu0 0.0
        %1246 = vmatpush.msra.mxu0 0.0
        %1247 = vmatpush.msra.mxu0 0.0
        %1248 = vmatpush.msra.mxu0 0.0
        %1249 = vmatpush.msra.mxu0 0.0
        %1250 = vmatpush.msra.mxu0 0.0
        %1251 = vmatpush.msra.mxu0 0.0
        %1252 = vmatpush.msra.mxu0 0.0
        %1253 = vmatpush.msra.mxu0 0.0
        %1254 = vmatpush.msra.mxu0 %v1004
        %1255 = vmatpush.msra.mxu0 %v1003
        %1256 = vmatmul.f32.gmra.mxu0 %v1235
        %v1257 = vpop.f32.mrf.mxu0
        %v1258 = vadd.f32 0.0, %v1257
        %1259 = vmatmul.f32.gmra.mxu0 %v1238
        %v1260 = vpop.f32.mrf.mxu0
        %v1261 = vadd.f32 0.0, %v1260
        %1262 = vdwg.mxu0
        %v1263 = vadd.f32 %v1130, %v1258
        %v1264 = vadd.f32 %v1131, %v1261
        %v1265 = vld [vmem:[#allocation6 + $0xa88] sm:$0x3]
        %v1267 = vsel %vm1010, %v1265, 0
        %1269 = vmatpush.msra.mxu0 0.0
        %1270 = vmatpush.msra.mxu0 0.0
        %1271 = vmatpush.msra.mxu0 0.0
        %1272 = vmatpush.msra.mxu0 0.0
        %1273 = vmatpush.msra.mxu0 0.0
        %1274 = vmatpush.msra.mxu0 0.0
        %1275 = vmatpush.msra.mxu0 0.0
        %1276 = vmatpush.msra.mxu0 0.0
        %1277 = vmatpush.msra.mxu0 0.0
        %1278 = vmatpush.msra.mxu0 0.0
        %1279 = vmatpush.msra.mxu0 0.0
        %1280 = vmatpush.msra.mxu0 0.0
        %1281 = vmatpush.msra.mxu0 0.0
        %1282 = vmatpush.msra.mxu0 0.0
        %1283 = vmatpush.msra.mxu0 %v1264
        %1284 = vmatpush.msra.mxu0 %v1263
        %1285 = vmatmul.f32.gmra.mxu0 %v1267
        %v1286 = vpop.f32.mrf.mxu0
        %v1287 = vadd.f32 0.0, %v1286
        %1288 = vdwg.mxu0
        %v1289 = vld [vmem:[#allocation11] sm:$0xff]
        %v1290 = vld [vmem:[#allocation11 + $0x8] sm:$0xff]
        %v1291 = vld [vmem:[#allocation11 + $0x10] sm:$0xff]
        %v1292 = vld [vmem:[#allocation11 + $0x18] sm:$0xff]
        %v1293 = vld [vmem:[#allocation11 + $0x20] sm:$0xff]
        %v1294 = vld [vmem:[#allocation11 + $0x28] sm:$0xff]
        %v1295 = vld [vmem:[#allocation11 + $0x30] sm:$0xff]
        %v1296 = vld [vmem:[#allocation11 + $0x38] sm:$0xff]
        %v1297 = vld [vmem:[#allocation11 + $0x40] sm:$0xff]
        %v1298 = vld [vmem:[#allocation11 + $0x48] sm:$0xff]
        %v1299 = vld [vmem:[#allocation11 + $0x50] sm:$0xff]
        %v1300 = vld [vmem:[#allocation11 + $0x58] sm:$0xff]
        %v1301 = vld [vmem:[#allocation11 + $0x60] sm:$0xff]
        %v1302 = vld [vmem:[#allocation11 + $0x68] sm:$0xff]
        %v1303 = vld [vmem:[#allocation11 + $0x70] sm:$0xff]
        %v1304 = vld [vmem:[#allocation11 + $0x78] sm:$0xff]
        %v1305 = vld [vmem:[#allocation11 + $0x80] sm:$0xff]
        %v1306 = vld [vmem:[#allocation11 + $0x88] sm:$0xff]
        %v1307 = vld [vmem:[#allocation11 + $0x90] sm:$0xff]
        %v1308 = vld [vmem:[#allocation11 + $0x98] sm:$0xff]
        %v1309 = vld [vmem:[#allocation11 + $0xa0] sm:$0xff]
        %v1310 = vld [vmem:[#allocation11 + $0xa8] sm:$0xff]
        %v1311 = vld [vmem:[#allocation11 + $0xb0] sm:$0xff]
        %v1312 = vld [vmem:[#allocation11 + $0xb8] sm:$0xff]
        %s1313 = scalar_lea.vmem [#allocation11], 192
        %v1314 = vld [vmem:[%s1313] ss:$8 sm:$0xf]
        %v1315 = vld [vmem:[%s1313] ss:$8 sm:$0x30]
        %v1316 = vor.u32 %v1314, %v1315
        %v1318 = vperm.slane %v1316, 0
        %v1319 = vperm.slane %v1316, 1
        %v1320 = vperm.slane %v1316, 2
        %v1321 = vperm.slane %v1316, 3
        %v1322 = vperm.slane %v1316, 4
        %v1323 = vperm.slane %v1316, 5
        %v1331 = vsel %vm913, %v1287, 0
        %1333 = vmatpush.msra.mxu0 0.0
        %1334 = vmatpush.msra.mxu0 0.0
        %1335 = vmatpush.msra.mxu0 0.0
        %1336 = vmatpush.msra.mxu0 0.0
        %1337 = vmatpush.msra.mxu0 0.0
        %1338 = vmatpush.msra.mxu0 0.0
        %1339 = vmatpush.msra.mxu0 0.0
        %1340 = vmatpush.msra.mxu0 0.0
        %1341 = vmatpush.msra.mxu0 0.0
        %1342 = vmatpush.msra.mxu0 0.0
        %1343 = vmatpush.msra.mxu0 0.0
        %1344 = vmatpush.msra.mxu0 0.0
        %1345 = vmatpush.msra.mxu0 %v1307
        %1346 = vmatpush.msra.mxu0 %v1301
        %1347 = vmatpush.msra.mxu0 %v1295
        %1348 = vmatpush.msra.mxu0 %v1289
        %1349 = vmatmul.f32.gmra.mxu0 %v1331
        %v1350 = vpop.f32.mrf.mxu0
        %v1351 = vadd.f32 %v1318, %v1350
        %1352 = vdwg.mxu0
        %1353 = vmatpush.msra.mxu0 0.0
        %1354 = vmatpush.msra.mxu0 0.0
        %1355 = vmatpush.msra.mxu0 0.0
        %1356 = vmatpush.msra.mxu0 0.0
        %1357 = vmatpush.msra.mxu0 0.0
        %1358 = vmatpush.msra.mxu0 0.0
        %1359 = vmatpush.msra.mxu0 0.0
        %1360 = vmatpush.msra.mxu0 0.0
        %1361 = vmatpush.msra.mxu0 0.0
        %1362 = vmatpush.msra.mxu0 0.0
        %1363 = vmatpush.msra.mxu0 0.0
        %1364 = vmatpush.msra.mxu0 0.0
        %1365 = vmatpush.msra.mxu0 %v1308
        %1366 = vmatpush.msra.mxu0 %v1302
        %1367 = vmatpush.msra.mxu0 %v1296
        %1368 = vmatpush.msra.mxu0 %v1290
        %1369 = vmatmul.f32.gmra.mxu0 %v1331
        %v1370 = vpop.f32.mrf.mxu0
        %v1371 = vadd.f32 %v1319, %v1370
        %1372 = vdwg.mxu0
        %1373 = vmatpush.msra.mxu0 0.0
        %1374 = vmatpush.msra.mxu0 0.0
        %1375 = vmatpush.msra.mxu0 0.0
        %1376 = vmatpush.msra.mxu0 0.0
        %1377 = vmatpush.msra.mxu0 0.0
        %1378 = vmatpush.msra.mxu0 0.0
        %1379 = vmatpush.msra.mxu0 0.0
        %1380 = vmatpush.msra.mxu0 0.0
        %1381 = vmatpush.msra.mxu0 0.0
        %1382 = vmatpush.msra.mxu0 0.0
        %1383 = vmatpush.msra.mxu0 0.0
        %1384 = vmatpush.msra.mxu0 0.0
        %1385 = vmatpush.msra.mxu0 %v1309
        %1386 = vmatpush.msra.mxu0 %v1303
        %1387 = vmatpush.msra.mxu0 %v1297
        %1388 = vmatpush.msra.mxu0 %v1291
        %1389 = vmatmul.f32.gmra.mxu0 %v1331
        %v1390 = vpop.f32.mrf.mxu0
        %v1391 = vadd.f32 %v1320, %v1390
        %1392 = vdwg.mxu0
        %1393 = vmatpush.msra.mxu0 0.0
        %1394 = vmatpush.msra.mxu0 0.0
        %1395 = vmatpush.msra.mxu0 0.0
        %1396 = vmatpush.msra.mxu0 0.0
        %1397 = vmatpush.msra.mxu0 0.0
        %1398 = vmatpush.msra.mxu0 0.0
        %1399 = vmatpush.msra.mxu0 0.0
        %1400 = vmatpush.msra.mxu0 0.0
        %1401 = vmatpush.msra.mxu0 0.0
        %1402 = vmatpush.msra.mxu0 0.0
        %1403 = vmatpush.msra.mxu0 0.0
        %1404 = vmatpush.msra.mxu0 0.0
        %1405 = vmatpush.msra.mxu0 %v1310
        %1406 = vmatpush.msra.mxu0 %v1304
        %1407 = vmatpush.msra.mxu0 %v1298
        %1408 = vmatpush.msra.mxu0 %v1292
        %1409 = vmatmul.f32.gmra.mxu0 %v1331
        %v1410 = vpop.f32.mrf.mxu0
        %v1411 = vadd.f32 %v1321, %v1410
        %1412 = vdwg.mxu0
        %1413 = vmatpush.msra.mxu0 0.0
        %1414 = vmatpush.msra.mxu0 0.0
        %1415 = vmatpush.msra.mxu0 0.0
        %1416 = vmatpush.msra.mxu0 0.0
        %1417 = vmatpush.msra.mxu0 0.0
        %1418 = vmatpush.msra.mxu0 0.0
        %1419 = vmatpush.msra.mxu0 0.0
        %1420 = vmatpush.msra.mxu0 0.0
        %1421 = vmatpush.msra.mxu0 0.0
        %1422 = vmatpush.msra.mxu0 0.0
        %1423 = vmatpush.msra.mxu0 0.0
        %1424 = vmatpush.msra.mxu0 0.0
        %1425 = vmatpush.msra.mxu0 %v1311
        %1426 = vmatpush.msra.mxu0 %v1305
        %1427 = vmatpush.msra.mxu0 %v1299
        %1428 = vmatpush.msra.mxu0 %v1293
        %1429 = vmatmul.f32.gmra.mxu0 %v1331
        %v1430 = vpop.f32.mrf.mxu0
        %v1431 = vadd.f32 %v1322, %v1430
        %1432 = vdwg.mxu0
        %1433 = vmatpush.msra.mxu0 0.0
        %1434 = vmatpush.msra.mxu0 0.0
        %1435 = vmatpush.msra.mxu0 0.0
        %1436 = vmatpush.msra.mxu0 0.0
        %1437 = vmatpush.msra.mxu0 0.0
        %1438 = vmatpush.msra.mxu0 0.0
        %1439 = vmatpush.msra.mxu0 0.0
        %1440 = vmatpush.msra.mxu0 0.0
        %1441 = vmatpush.msra.mxu0 0.0
        %1442 = vmatpush.msra.mxu0 0.0
        %1443 = vmatpush.msra.mxu0 0.0
        %1444 = vmatpush.msra.mxu0 0.0
        %1445 = vmatpush.msra.mxu0 %v1312
        %1446 = vmatpush.msra.mxu0 %v1306
        %1447 = vmatpush.msra.mxu0 %v1300
        %1448 = vmatpush.msra.mxu0 %v1294
        %1449 = vmatmul.f32.gmra.mxu0 %v1331
        %v1450 = vpop.f32.mrf.mxu0
        %v1451 = vadd.f32 %v1323, %v1450
        %1452 = vdwg.mxu0
        %v1453 = vmax.f32 %v1351, 0.0
        %v1454 = vmax.f32 %v1371, 0.0
        %v1455 = vmax.f32 %v1391, 0.0
        %v1456 = vmax.f32 %v1411, 0.0
        %v1457 = vmax.f32 %v1431, 0.0
        %v1458 = vmax.f32 %v1451, 0.0
        %v1459 = vld [vmem:[#allocation8] sm:$0xff]
        %v1460 = vld [vmem:[#allocation8 + $0x8] sm:$0xff]
        %v1461 = vld [vmem:[#allocation8 + $0x10] sm:$0xff]
        %v1462 = vld [vmem:[#allocation8 + $0x18] sm:$0xff]
        %v1463 = vld [vmem:[#allocation8 + $0x20] sm:$0xff]
        %v1464 = vld [vmem:[#allocation8 + $0x28] sm:$0xff]
        %v1465 = vld [vmem:[#allocation8 + $0x30] sm:$0xff]
        %v1466 = vld [vmem:[#allocation8 + $0x38] sm:$0xff]
        %v1467 = vld [vmem:[#allocation8 + $0x40] sm:$0xff]
        %v1468 = vld [vmem:[#allocation8 + $0x48] sm:$0xff]
        %v1469 = vld [vmem:[#allocation8 + $0x50] sm:$0xff]
        %v1470 = vld [vmem:[#allocation8 + $0x58] sm:$0xff]
        %v1471 = vld [vmem:[#allocation8 + $0x60] sm:$0xff]
        %v1472 = vld [vmem:[#allocation8 + $0x68] sm:$0xff]
        %v1473 = vld [vmem:[#allocation8 + $0x70] sm:$0xff]
        %v1474 = vld [vmem:[#allocation8 + $0x78] sm:$0xff]
        %v1475 = vld [vmem:[#allocation8 + $0x80] sm:$0xff]
        %v1476 = vld [vmem:[#allocation8 + $0x88] sm:$0xff]
        %v1477 = vld [vmem:[#allocation8 + $0x90] sm:$0xff]
        %v1478 = vld [vmem:[#allocation8 + $0x98] sm:$0xff]
        %v1479 = vld [vmem:[#allocation8 + $0xa0] sm:$0xff]
        %v1480 = vld [vmem:[#allocation8 + $0xa8] sm:$0xff]
        %v1481 = vld [vmem:[#allocation8 + $0xb0] sm:$0xff]
        %v1482 = vld [vmem:[#allocation8 + $0xb8] sm:$0xff]
        %v1483 = vld [vmem:[#allocation8 + $0xc0] sm:$0xff]
        %v1484 = vld [vmem:[#allocation8 + $0xc8] sm:$0xff]
        %v1485 = vld [vmem:[#allocation8 + $0xd0] sm:$0xff]
        %v1486 = vld [vmem:[#allocation8 + $0xd8] sm:$0xff]
        %v1487 = vld [vmem:[#allocation8 + $0xe0] sm:$0xff]
        %v1488 = vld [vmem:[#allocation8 + $0xe8] sm:$0xff]
        %v1489 = vld [vmem:[#allocation8 + $0xf0] sm:$0xff]
        %v1490 = vld [vmem:[#allocation8 + $0xf8] sm:$0xff]
        %v1491 = vld [vmem:[#allocation8 + $0x100] sm:$0xff]
        %v1492 = vld [vmem:[#allocation8 + $0x108] sm:$0xff]
        %v1493 = vld [vmem:[#allocation8 + $0x110] sm:$0xff]
        %v1494 = vld [vmem:[#allocation8 + $0x118] sm:$0xff]
        %v1495 = vld [vmem:[#allocation8 + $0x120] sm:$0xff]
        %v1496 = vld [vmem:[#allocation8 + $0x128] sm:$0xff]
        %v1497 = vld [vmem:[#allocation8 + $0x130] sm:$0xff]
        %v1498 = vld [vmem:[#allocation8 + $0x138] sm:$0xff]
        %v1499 = vld [vmem:[#allocation8 + $0x140] sm:$0xff]
        %v1500 = vld [vmem:[#allocation8 + $0x148] sm:$0xff]
        %v1501 = vld [vmem:[#allocation8 + $0x150] sm:$0xff]
        %v1502 = vld [vmem:[#allocation8 + $0x158] sm:$0xff]
        %v1503 = vld [vmem:[#allocation8 + $0x160] sm:$0xff]
        %v1504 = vld [vmem:[#allocation8 + $0x168] sm:$0xff]
        %v1505 = vld [vmem:[#allocation8 + $0x170] sm:$0xff]
        %v1506 = vld [vmem:[#allocation8 + $0x178] sm:$0xff]
        %v1507 = vld [vmem:[#allocation8 + $0x180] sm:$0xff]
        %v1508 = vld [vmem:[#allocation8 + $0x188] sm:$0xff]
        %v1509 = vld [vmem:[#allocation8 + $0x190] sm:$0xff]
        %v1510 = vld [vmem:[#allocation8 + $0x198] sm:$0xff]
        %v1511 = vld [vmem:[#allocation8 + $0x1a0] sm:$0xff]
        %v1512 = vld [vmem:[#allocation8 + $0x1a8] sm:$0xff]
        %v1513 = vld [vmem:[#allocation8 + $0x1b0] sm:$0xff]
        %v1514 = vld [vmem:[#allocation8 + $0x1b8] sm:$0xff]
        %v1515 = vld [vmem:[#allocation8 + $0x1c0] sm:$0xff]
        %v1516 = vld [vmem:[#allocation8 + $0x1c8] sm:$0xff]
        %v1517 = vld [vmem:[#allocation8 + $0x1d0] sm:$0xff]
        %v1518 = vld [vmem:[#allocation8 + $0x1d8] sm:$0xff]
        %v1519 = vld [vmem:[#allocation8 + $0x1e0] sm:$0xff]
        %v1520 = vld [vmem:[#allocation8 + $0x1e8] sm:$0xff]
        %v1521 = vld [vmem:[#allocation8 + $0x1f0] sm:$0xff]
        %v1522 = vld [vmem:[#allocation8 + $0x1f8] sm:$0xff]
        %v1523 = vld [vmem:[#allocation8 + $0x200] sm:$0xff]
        %v1524 = vld [vmem:[#allocation8 + $0x208] sm:$0xff]
        %v1525 = vld [vmem:[#allocation8 + $0x210] sm:$0xff]
        %v1526 = vld [vmem:[#allocation8 + $0x218] sm:$0xff]
        %v1527 = vld [vmem:[#allocation8 + $0x220] sm:$0xff]
        %v1528 = vld [vmem:[#allocation8 + $0x228] sm:$0xff]
        %v1529 = vld [vmem:[#allocation8 + $0x230] sm:$0xff]
        %v1530 = vld [vmem:[#allocation8 + $0x238] sm:$0xff]
        %v1531 = vld [vmem:[#allocation8 + $0x240] sm:$0xff]
        %v1532 = vld [vmem:[#allocation8 + $0x248] sm:$0xff]
        %v1533 = vld [vmem:[#allocation8 + $0x250] sm:$0xff]
        %v1534 = vld [vmem:[#allocation8 + $0x258] sm:$0xff]
        %v1535 = vld [vmem:[#allocation8 + $0x260] sm:$0xff]
        %v1536 = vld [vmem:[#allocation8 + $0x268] sm:$0xff]
        %v1537 = vld [vmem:[#allocation8 + $0x270] sm:$0xff]
        %v1538 = vld [vmem:[#allocation8 + $0x278] sm:$0xff]
        %v1539 = vld [vmem:[#allocation8 + $0x280] sm:$0xff]
        %v1540 = vld [vmem:[#allocation8 + $0x288] sm:$0xff]
        %v1541 = vld [vmem:[#allocation8 + $0x290] sm:$0xff]
        %v1542 = vld [vmem:[#allocation8 + $0x298] sm:$0xff]
        %v1543 = vld [vmem:[#allocation8 + $0x2a0] sm:$0xff]
        %v1544 = vld [vmem:[#allocation8 + $0x2a8] sm:$0xff]
        %v1545 = vld [vmem:[#allocation8 + $0x2b0] sm:$0xff]
        %v1546 = vld [vmem:[#allocation8 + $0x2b8] sm:$0xff]
        %v1547 = vld [vmem:[#allocation8 + $0x2c0] sm:$0xff]
        %v1548 = vld [vmem:[#allocation8 + $0x2c8] sm:$0xff]
        %v1549 = vld [vmem:[#allocation8 + $0x2d0] sm:$0xff]
        %v1550 = vld [vmem:[#allocation8 + $0x2d8] sm:$0xff]
        %v1551 = vld [vmem:[#allocation8 + $0x2e0] sm:$0xff]
        %v1552 = vld [vmem:[#allocation8 + $0x2e8] sm:$0xff]
        %v1553 = vld [vmem:[#allocation8 + $0x2f0] sm:$0xff]
        %v1554 = vld [vmem:[#allocation8 + $0x2f8] sm:$0xff]
        %v1555 = vld [vmem:[#allocation8 + $0x300] sm:$0xff]
        %v1556 = vld [vmem:[#allocation8 + $0x308] sm:$0xff]
        %v1557 = vld [vmem:[#allocation8 + $0x310] sm:$0xff]
        %v1558 = vld [vmem:[#allocation8 + $0x318] sm:$0xff]
        %v1559 = vld [vmem:[#allocation8 + $0x320] sm:$0xff]
        %v1560 = vld [vmem:[#allocation8 + $0x328] sm:$0xff]
        %v1561 = vld [vmem:[#allocation8 + $0x330] sm:$0xff]
        %v1562 = vld [vmem:[#allocation8 + $0x338] sm:$0xff]
        %v1563 = vld [vmem:[#allocation8 + $0x340] sm:$0xff]
        %v1564 = vld [vmem:[#allocation8 + $0x348] sm:$0xff]
        %v1565 = vld [vmem:[#allocation8 + $0x350] sm:$0xff]
        %v1566 = vld [vmem:[#allocation8 + $0x358] sm:$0xff]
        %v1567 = vld [vmem:[#allocation8 + $0x360] sm:$0xff]
        %v1568 = vld [vmem:[#allocation8 + $0x368] sm:$0xff]
        %v1569 = vld [vmem:[#allocation8 + $0x370] sm:$0xff]
        %v1570 = vld [vmem:[#allocation8 + $0x378] sm:$0xff]
        %v1571 = vld [vmem:[#allocation8 + $0x380] sm:$0xff]
        %v1572 = vld [vmem:[#allocation8 + $0x388] sm:$0xff]
        %v1573 = vld [vmem:[#allocation8 + $0x390] sm:$0xff]
        %v1574 = vld [vmem:[#allocation8 + $0x398] sm:$0xff]
        %v1575 = vld [vmem:[#allocation8 + $0x3a0] sm:$0xff]
        %v1576 = vld [vmem:[#allocation8 + $0x3a8] sm:$0xff]
        %v1577 = vld [vmem:[#allocation8 + $0x3b0] sm:$0xff]
        %v1578 = vld [vmem:[#allocation8 + $0x3b8] sm:$0xff]
        %v1579 = vld [vmem:[#allocation8 + $0x3c0] sm:$0xff]
        %v1580 = vld [vmem:[#allocation8 + $0x3c8] sm:$0xff]
        %v1581 = vld [vmem:[#allocation8 + $0x3d0] sm:$0xff]
        %v1582 = vld [vmem:[#allocation8 + $0x3d8] sm:$0xff]
        %v1583 = vld [vmem:[#allocation8 + $0x3e0] sm:$0xff]
        %v1584 = vld [vmem:[#allocation8 + $0x3e8] sm:$0xff]
        %v1585 = vld [vmem:[#allocation8 + $0x3f0] sm:$0xff]
        %v1586 = vld [vmem:[#allocation8 + $0x3f8] sm:$0xff]
        %s1587 = scalar_lea.vmem [#allocation8], 1024
        %v1588 = vld [vmem:[%s1587] ss:$8 sm:$0x3]
        %v1590 = vperm.slane %v1588, 0
        %v1591 = vperm.slane %v1588, 1
        %1594 = vmatpush.msra.mxu0 %v1489
        %1595 = vmatpush.msra.mxu0 %v1487
        %1596 = vmatpush.msra.mxu0 %v1485
        %1597 = vmatpush.msra.mxu0 %v1483
        %1598 = vmatpush.msra.mxu0 %v1481
        %1599 = vmatpush.msra.mxu0 %v1479
        %1600 = vmatpush.msra.mxu0 %v1477
        %1601 = vmatpush.msra.mxu0 %v1475
        %1602 = vmatpush.msra.mxu0 %v1473
        %1603 = vmatpush.msra.mxu0 %v1471
        %1604 = vmatpush.msra.mxu0 %v1469
        %1605 = vmatpush.msra.mxu0 %v1467
        %1606 = vmatpush.msra.mxu0 %v1465
        %1607 = vmatpush.msra.mxu0 %v1463
        %1608 = vmatpush.msra.mxu0 %v1461
        %1609 = vmatpush.msra.mxu0 %v1459
        %1610 = vmatmul.f32.gmra.mxu0 %v1453
        %v1611 = vpop.f32.mrf.mxu0
        %v1612 = vadd.f32 %v1590, %v1611
        %1613 = vdwg.mxu0
        %1614 = vmatpush.msra.mxu0 %v1521
        %1615 = vmatpush.msra.mxu0 %v1519
        %1616 = vmatpush.msra.mxu0 %v1517
        %1617 = vmatpush.msra.mxu0 %v1515
        %1618 = vmatpush.msra.mxu0 %v1513
        %1619 = vmatpush.msra.mxu0 %v1511
        %1620 = vmatpush.msra.mxu0 %v1509
        %1621 = vmatpush.msra.mxu0 %v1507
        %1622 = vmatpush.msra.mxu0 %v1505
        %1623 = vmatpush.msra.mxu0 %v1503
        %1624 = vmatpush.msra.mxu0 %v1501
        %1625 = vmatpush.msra.mxu0 %v1499
        %1626 = vmatpush.msra.mxu0 %v1497
        %1627 = vmatpush.msra.mxu0 %v1495
        %1628 = vmatpush.msra.mxu0 %v1493
        %1629 = vmatpush.msra.mxu0 %v1491
        %1630 = vmatmul.f32.gmra.mxu0 %v1454
        %v1631 = vpop.f32.mrf.mxu0
        %v1632 = vadd.f32 %v1612, %v1631
        %1633 = vdwg.mxu0
        %1634 = vmatpush.msra.mxu0 %v1553
        %1635 = vmatpush.msra.mxu0 %v1551
        %1636 = vmatpush.msra.mxu0 %v1549
        %1637 = vmatpush.msra.mxu0 %v1547
        %1638 = vmatpush.msra.mxu0 %v1545
        %1639 = vmatpush.msra.mxu0 %v1543
        %1640 = vmatpush.msra.mxu0 %v1541
        %1641 = vmatpush.msra.mxu0 %v1539
        %1642 = vmatpush.msra.mxu0 %v1537
        %1643 = vmatpush.msra.mxu0 %v1535
        %1644 = vmatpush.msra.mxu0 %v1533
        %1645 = vmatpush.msra.mxu0 %v1531
        %1646 = vmatpush.msra.mxu0 %v1529
        %1647 = vmatpush.msra.mxu0 %v1527
        %1648 = vmatpush.msra.mxu0 %v1525
        %1649 = vmatpush.msra.mxu0 %v1523
        %1650 = vmatmul.f32.gmra.mxu0 %v1455
        %v1651 = vpop.f32.mrf.mxu0
        %v1652 = vadd.f32 %v1632, %v1651
        %1653 = vdwg.mxu0
        %1654 = vmatpush.msra.mxu0 %v1585
        %1655 = vmatpush.msra.mxu0 %v1583
        %1656 = vmatpush.msra.mxu0 %v1581
        %1657 = vmatpush.msra.mxu0 %v1579
        %1658 = vmatpush.msra.mxu0 %v1577
        %1659 = vmatpush.msra.mxu0 %v1575
        %1660 = vmatpush.msra.mxu0 %v1573
        %1661 = vmatpush.msra.mxu0 %v1571
        %1662 = vmatpush.msra.mxu0 %v1569
        %1663 = vmatpush.msra.mxu0 %v1567
        %1664 = vmatpush.msra.mxu0 %v1565
        %1665 = vmatpush.msra.mxu0 %v1563
        %1666 = vmatpush.msra.mxu0 %v1561
        %1667 = vmatpush.msra.mxu0 %v1559
        %1668 = vmatpush.msra.mxu0 %v1557
        %1669 = vmatpush.msra.mxu0 %v1555
        %1670 = vmatmul.f32.gmra.mxu0 %v1456
        %v1671 = vpop.f32.mrf.mxu0
        %v1672 = vadd.f32 %v1652, %v1671
        %1673 = vdwg.mxu0
        %1674 = vmatpush.msra.mxu0 %v1490
        %1675 = vmatpush.msra.mxu0 %v1488
        %1676 = vmatpush.msra.mxu0 %v1486
        %1677 = vmatpush.msra.mxu0 %v1484
        %1678 = vmatpush.msra.mxu0 %v1482
        %1679 = vmatpush.msra.mxu0 %v1480
        %1680 = vmatpush.msra.mxu0 %v1478
        %1681 = vmatpush.msra.mxu0 %v1476
        %1682 = vmatpush.msra.mxu0 %v1474
        %1683 = vmatpush.msra.mxu0 %v1472
        %1684 = vmatpush.msra.mxu0 %v1470
        %1685 = vmatpush.msra.mxu0 %v1468
        %1686 = vmatpush.msra.mxu0 %v1466
        %1687 = vmatpush.msra.mxu0 %v1464
        %1688 = vmatpush.msra.mxu0 %v1462
        %1689 = vmatpush.msra.mxu0 %v1460
        %1690 = vmatmul.f32.gmra.mxu0 %v1453
        %v1691 = vpop.f32.mrf.mxu0
        %v1692 = vadd.f32 %v1591, %v1691
        %1693 = vdwg.mxu0
        %1694 = vmatpush.msra.mxu0 %v1522
        %1695 = vmatpush.msra.mxu0 %v1520
        %1696 = vmatpush.msra.mxu0 %v1518
        %1697 = vmatpush.msra.mxu0 %v1516
        %1698 = vmatpush.msra.mxu0 %v1514
        %1699 = vmatpush.msra.mxu0 %v1512
        %1700 = vmatpush.msra.mxu0 %v1510
        %1701 = vmatpush.msra.mxu0 %v1508
        %1702 = vmatpush.msra.mxu0 %v1506
        %1703 = vmatpush.msra.mxu0 %v1504
        %1704 = vmatpush.msra.mxu0 %v1502
        %1705 = vmatpush.msra.mxu0 %v1500
        %1706 = vmatpush.msra.mxu0 %v1498
        %1707 = vmatpush.msra.mxu0 %v1496
        %1708 = vmatpush.msra.mxu0 %v1494
        %1709 = vmatpush.msra.mxu0 %v1492
        %1710 = vmatmul.f32.gmra.mxu0 %v1454
        %v1711 = vpop.f32.mrf.mxu0
        %v1712 = vadd.f32 %v1692, %v1711
        %1713 = vdwg.mxu0
        %1714 = vmatpush.msra.mxu0 %v1554
        %1715 = vmatpush.msra.mxu0 %v1552
        %1716 = vmatpush.msra.mxu0 %v1550
        %1717 = vmatpush.msra.mxu0 %v1548
        %1718 = vmatpush.msra.mxu0 %v1546
        %1719 = vmatpush.msra.mxu0 %v1544
        %1720 = vmatpush.msra.mxu0 %v1542
        %1721 = vmatpush.msra.mxu0 %v1540
        %1722 = vmatpush.msra.mxu0 %v1538
        %1723 = vmatpush.msra.mxu0 %v1536
        %1724 = vmatpush.msra.mxu0 %v1534
        %1725 = vmatpush.msra.mxu0 %v1532
        %1726 = vmatpush.msra.mxu0 %v1530
        %1727 = vmatpush.msra.mxu0 %v1528
        %1728 = vmatpush.msra.mxu0 %v1526
        %1729 = vmatpush.msra.mxu0 %v1524
        %1730 = vmatmul.f32.gmra.mxu0 %v1455
        %v1731 = vpop.f32.mrf.mxu0
        %v1732 = vadd.f32 %v1712, %v1731
        %1733 = vdwg.mxu0
        %1734 = vmatpush.msra.mxu0 %v1586
        %1735 = vmatpush.msra.mxu0 %v1584
        %1736 = vmatpush.msra.mxu0 %v1582
        %1737 = vmatpush.msra.mxu0 %v1580
        %1738 = vmatpush.msra.mxu0 %v1578
        %1739 = vmatpush.msra.mxu0 %v1576
        %1740 = vmatpush.msra.mxu0 %v1574
        %1741 = vmatpush.msra.mxu0 %v1572
        %1742 = vmatpush.msra.mxu0 %v1570
        %1743 = vmatpush.msra.mxu0 %v1568
        %1744 = vmatpush.msra.mxu0 %v1566
        %1745 = vmatpush.msra.mxu0 %v1564
        %1746 = vmatpush.msra.mxu0 %v1562
        %1747 = vmatpush.msra.mxu0 %v1560
        %1748 = vmatpush.msra.mxu0 %v1558
        %1749 = vmatpush.msra.mxu0 %v1556
        %1750 = vmatmul.f32.gmra.mxu0 %v1456
        %v1751 = vpop.f32.mrf.mxu0
        %v1752 = vadd.f32 %v1732, %v1751
        %1753 = vdwg.mxu0
        %v1754 = vmax.f32 %v1672, 0.0
        %v1755 = vmax.f32 %v1752, 0.0
        %v1756 = vld [vmem:[#allocation6 + $0x318] sm:$0xff]
        %v1757 = vld [vmem:[#allocation6 + $0x320] sm:$0xff]
        %v1758 = vld [vmem:[#allocation6 + $0x328] sm:$0xff]
        %v1759 = vld [vmem:[#allocation6 + $0x330] sm:$0xff]
        %v1760 = vld [vmem:[#allocation6 + $0x338] sm:$0xff]
        %v1761 = vld [vmem:[#allocation6 + $0x340] sm:$0xff]
        %v1762 = vld [vmem:[#allocation6 + $0x348] sm:$0xff]
        %v1763 = vld [vmem:[#allocation6 + $0x350] sm:$0xff]
        %v1764 = vld [vmem:[#allocation6 + $0x358] sm:$0xff]
        %v1765 = vld [vmem:[#allocation6 + $0x360] sm:$0xff]
        %v1766 = vld [vmem:[#allocation6 + $0x368] sm:$0xff]
        %v1767 = vld [vmem:[#allocation6 + $0x370] sm:$0xff]
        %v1768 = vld [vmem:[#allocation6 + $0x378] sm:$0xff]
        %v1769 = vld [vmem:[#allocation6 + $0x380] sm:$0xff]
        %v1770 = vld [vmem:[#allocation6 + $0x388] sm:$0xff]
        %v1771 = vld [vmem:[#allocation6 + $0x390] sm:$0xff]
        %v1772 = vld [vmem:[#allocation6 + $0x398] sm:$0xff]
        %v1773 = vld [vmem:[#allocation6 + $0x3a0] sm:$0xff]
        %v1774 = vld [vmem:[#allocation6 + $0x3a8] sm:$0xff]
        %v1775 = vld [vmem:[#allocation6 + $0x3b0] sm:$0xff]
        %v1776 = vld [vmem:[#allocation6 + $0x3b8] sm:$0xff]
        %v1777 = vld [vmem:[#allocation6 + $0x3c0] sm:$0xff]
        %v1778 = vld [vmem:[#allocation6 + $0x3c8] sm:$0xff]
        %v1779 = vld [vmem:[#allocation6 + $0x3d0] sm:$0xff]
        %v1780 = vld [vmem:[#allocation6 + $0x3d8] sm:$0xff]
        %v1781 = vld [vmem:[#allocation6 + $0x3e0] sm:$0xff]
        %v1782 = vld [vmem:[#allocation6 + $0x3e8] sm:$0xff]
        %v1783 = vld [vmem:[#allocation6 + $0x3f0] sm:$0xff]
        %v1784 = vld [vmem:[#allocation6 + $0x3f8] sm:$0xff]
        %v1785 = vld [vmem:[#allocation6 + $0x400] sm:$0xff]
        %v1786 = vld [vmem:[#allocation6 + $0x408] sm:$0xff]
        %v1787 = vld [vmem:[#allocation6 + $0x410] sm:$0xff]
        %v1788 = vld [vmem:[#allocation6 + $0x418] sm:$0x1]
        %v1789 = vperm.slane %v1788, 0
        %1790 = vmatpush.msra.mxu0 %v1771
        %1791 = vmatpush.msra.mxu0 %v1770
        %1792 = vmatpush.msra.mxu0 %v1769
        %1793 = vmatpush.msra.mxu0 %v1768
        %1794 = vmatpush.msra.mxu0 %v1767
        %1795 = vmatpush.msra.mxu0 %v1766
        %1796 = vmatpush.msra.mxu0 %v1765
        %1797 = vmatpush.msra.mxu0 %v1764
        %1798 = vmatpush.msra.mxu0 %v1763
        %1799 = vmatpush.msra.mxu0 %v1762
        %1800 = vmatpush.msra.mxu0 %v1761
        %1801 = vmatpush.msra.mxu0 %v1760
        %1802 = vmatpush.msra.mxu0 %v1759
        %1803 = vmatpush.msra.mxu0 %v1758
        %1804 = vmatpush.msra.mxu0 %v1757
        %1805 = vmatpush.msra.mxu0 %v1756
        %1806 = vmatmul.f32.gmra.mxu0 %v1754
        %v1807 = vpop.f32.mrf.mxu0
        %v1808 = vadd.f32 %v1789, %v1807
        %1809 = vdwg.mxu0
        %1810 = vmatpush.msra.mxu0 %v1787
        %1811 = vmatpush.msra.mxu0 %v1786
        %1812 = vmatpush.msra.mxu0 %v1785
        %1813 = vmatpush.msra.mxu0 %v1784
        %1814 = vmatpush.msra.mxu0 %v1783
        %1815 = vmatpush.msra.mxu0 %v1782
        %1816 = vmatpush.msra.mxu0 %v1781
        %1817 = vmatpush.msra.mxu0 %v1780
        %1818 = vmatpush.msra.mxu0 %v1779
        %1819 = vmatpush.msra.mxu0 %v1778
        %1820 = vmatpush.msra.mxu0 %v1777
        %1821 = vmatpush.msra.mxu0 %v1776
        %1822 = vmatpush.msra.mxu0 %v1775
        %1823 = vmatpush.msra.mxu0 %v1774
        %1824 = vmatpush.msra.mxu0 %v1773
        %1825 = vmatpush.msra.mxu0 %v1772
        %1826 = vmatmul.f32.gmra.mxu0 %v1755
        %v1827 = vpop.f32.mrf.mxu0
        %v1828 = vadd.f32 %v1808, %v1827
        %1829 = vdwg.mxu0
        %v1830 = vmax.f32 %v1828, 0.0
        %v1831 = vld [vmem:[#allocation6 + $0x420] sm:$0xff]
        %v1832 = vld [vmem:[#allocation6 + $0x428] sm:$0xff]
        %v1833 = vld [vmem:[#allocation6 + $0x430] sm:$0xff]
        %v1834 = vld [vmem:[#allocation6 + $0x438] sm:$0xff]
        %v1835 = vld [vmem:[#allocation6 + $0x440] sm:$0xff]
        %v1836 = vld [vmem:[#allocation6 + $0x448] sm:$0xff]
        %v1837 = vld [vmem:[#allocation6 + $0x450] sm:$0xff]
        %v1838 = vld [vmem:[#allocation6 + $0x458] sm:$0xff]
        %v1839 = vld [vmem:[#allocation6 + $0x460] sm:$0xff]
        %v1840 = vld [vmem:[#allocation6 + $0x468] sm:$0xff]
        %v1841 = vld [vmem:[#allocation6 + $0x470] sm:$0xff]
        %v1842 = vld [vmem:[#allocation6 + $0x478] sm:$0xff]
        %v1843 = vld [vmem:[#allocation6 + $0x480] sm:$0xff]
        %v1844 = vld [vmem:[#allocation6 + $0x488] sm:$0xff]
        %v1845 = vld [vmem:[#allocation6 + $0x490] sm:$0xff]
        %v1846 = vld [vmem:[#allocation6 + $0x498] sm:$0xff]
        %v1847 = vld [vmem:[#allocation6 + $0x4a0] sm:$0xff]
        %v1848 = vld [vmem:[#allocation6 + $0x4a8] sm:$0xff]
        %v1849 = vld [vmem:[#allocation6 + $0x4b0] sm:$0xff]
        %v1850 = vld [vmem:[#allocation6 + $0x4b8] sm:$0xff]
        %v1851 = vld [vmem:[#allocation6 + $0x4c0] sm:$0xff]
        %v1852 = vld [vmem:[#allocation6 + $0x4c8] sm:$0xff]
        %v1853 = vld [vmem:[#allocation6 + $0x4d0] sm:$0xff]
        %v1854 = vld [vmem:[#allocation6 + $0x4d8] sm:$0xff]
        %v1855 = vld [vmem:[#allocation6 + $0x4e0] sm:$0xff]
        %v1856 = vld [vmem:[#allocation6 + $0x4e8] sm:$0xff]
        %v1857 = vld [vmem:[#allocation6 + $0x4f0] sm:$0xff]
        %v1858 = vld [vmem:[#allocation6 + $0x4f8] sm:$0xff]
        %v1859 = vld [vmem:[#allocation6 + $0x500] sm:$0xff]
        %v1860 = vld [vmem:[#allocation6 + $0x508] sm:$0xff]
        %v1861 = vld [vmem:[#allocation6 + $0x510] sm:$0xff]
        %v1862 = vld [vmem:[#allocation6 + $0x518] sm:$0xff]
        %v1863 = vld [vmem:[#allocation6 + $0x520] sm:$0x1]
        %v1864 = vperm.slane %v1863, 0
        %1865 = vmatpush.msra.mxu0 %v1846
        %1866 = vmatpush.msra.mxu0 %v1845
        %1867 = vmatpush.msra.mxu0 %v1844
        %1868 = vmatpush.msra.mxu0 %v1843
        %1869 = vmatpush.msra.mxu0 %v1842
        %1870 = vmatpush.msra.mxu0 %v1841
        %1871 = vmatpush.msra.mxu0 %v1840
        %1872 = vmatpush.msra.mxu0 %v1839
        %1873 = vmatpush.msra.mxu0 %v1838
        %1874 = vmatpush.msra.mxu0 %v1837
        %1875 = vmatpush.msra.mxu0 %v1836
        %1876 = vmatpush.msra.mxu0 %v1835
        %1877 = vmatpush.msra.mxu0 %v1834
        %1878 = vmatpush.msra.mxu0 %v1833
        %1879 = vmatpush.msra.mxu0 %v1832
        %1880 = vmatpush.msra.mxu0 %v1831
        %1881 = vmatmul.f32.gmra.mxu0 %v1457
        %v1882 = vpop.f32.mrf.mxu0
        %v1883 = vadd.f32 %v1864, %v1882
        %1884 = vdwg.mxu0
        %1885 = vmatpush.msra.mxu0 %v1862
        %1886 = vmatpush.msra.mxu0 %v1861
        %1887 = vmatpush.msra.mxu0 %v1860
        %1888 = vmatpush.msra.mxu0 %v1859
        %1889 = vmatpush.msra.mxu0 %v1858
        %1890 = vmatpush.msra.mxu0 %v1857
        %1891 = vmatpush.msra.mxu0 %v1856
        %1892 = vmatpush.msra.mxu0 %v1855
        %1893 = vmatpush.msra.mxu0 %v1854
        %1894 = vmatpush.msra.mxu0 %v1853
        %1895 = vmatpush.msra.mxu0 %v1852
        %1896 = vmatpush.msra.mxu0 %v1851
        %1897 = vmatpush.msra.mxu0 %v1850
        %1898 = vmatpush.msra.mxu0 %v1849
        %1899 = vmatpush.msra.mxu0 %v1848
        %1900 = vmatpush.msra.mxu0 %v1847
        %1901 = vmatmul.f32.gmra.mxu0 %v1458
        %v1902 = vpop.f32.mrf.mxu0
        %v1903 = vadd.f32 %v1883, %v1902
        %1904 = vdwg.mxu0
        %v1905 = vmax.f32 %v1903, 0.0
        %v1906 = vld [vmem:[#allocation6 + $0xad0] sm:$0x7f]
        %v1907 = vld [vmem:[#allocation6 + $0xad8] sm:$0x7f]
        %v1909 = vrot.slane %v379, 2
        %v1910 = vsel %vm422, %v1909, 0
        %v1913 = vsel %vm429, %v1907, 0
        %1915 = vmatpush.msra.mxu0 0.0
        %1916 = vmatpush.msra.mxu0 0.0
        %1917 = vmatpush.msra.mxu0 0.0
        %1918 = vmatpush.msra.mxu0 0.0
        %1919 = vmatpush.msra.mxu0 0.0
        %1920 = vmatpush.msra.mxu0 0.0
        %1921 = vmatpush.msra.mxu0 0.0
        %1922 = vmatpush.msra.mxu0 0.0
        %1923 = vmatpush.msra.mxu0 0.0
        %1924 = vmatpush.msra.mxu0 0.0
        %1925 = vmatpush.msra.mxu0 0.0
        %1926 = vmatpush.msra.mxu0 0.0
        %1927 = vmatpush.msra.mxu0 0.0
        %1928 = vmatpush.msra.mxu0 0.0
        %1929 = vmatpush.msra.mxu0 0.0
        %1930 = vmatpush.msra.mxu0 %v1913
        %1931 = vmatmul.f32.gmra.mxu0 %v1910
        %v1932 = vpop.f32.mrf.mxu0
        %v1933 = vadd.f32 0.0, %v1932
        %1934 = vdwg.mxu0
        %v1935 = vsel %vm422, %v379, 0
        %v1938 = vsel %vm429, %v1906, 0
        %1940 = vmatpush.msra.mxu0 0.0
        %1941 = vmatpush.msra.mxu0 0.0
        %1942 = vmatpush.msra.mxu0 0.0
        %1943 = vmatpush.msra.mxu0 0.0
        %1944 = vmatpush.msra.mxu0 0.0
        %1945 = vmatpush.msra.mxu0 0.0
        %1946 = vmatpush.msra.mxu0 0.0
        %1947 = vmatpush.msra.mxu0 0.0
        %1948 = vmatpush.msra.mxu0 0.0
        %1949 = vmatpush.msra.mxu0 0.0
        %1950 = vmatpush.msra.mxu0 0.0
        %1951 = vmatpush.msra.mxu0 0.0
        %1952 = vmatpush.msra.mxu0 0.0
        %1953 = vmatpush.msra.mxu0 0.0
        %1954 = vmatpush.msra.mxu0 0.0
        %1955 = vmatpush.msra.mxu0 %v1938
        %1956 = vmatmul.f32.gmra.mxu0 %v1935
        %v1957 = vpop.f32.mrf.mxu0
        %v1958 = vadd.f32 %v1933, %v1957
        %1959 = vdwg.mxu0
        %v1960 = vld [vmem:[#allocation9] sm:$0x7]
        %v1961 = vld [vmem:[#allocation9 + $0x8] sm:$0x7]
        %v1962 = vld [vmem:[#allocation9 + $0x10] sm:$0x7]
        %s1963 = scalar_lea.vmem [#allocation9], 24
        %v1964 = vld [vmem:[%s1963] ss:$8 sm:$0x7]
        %v1966 = vperm.slane %v1964, 0
        %v1967 = vperm.slane %v1964, 1
        %v1968 = vperm.slane %v1964, 2
        %vm1972 = vcmask 23552
        %v1974 = vsel %vm1972, %v1958, 0
        %vm1976 = vcmask 1042432
        %v1978 = vsel %vm1976, %v1960, 0
        %v1981 = vsel %vm1976, %v1961, 0
        %v1984 = vsel %vm1976, %v1962, 0
        %1986 = vmatpush.msra.mxu0 0.0
        %1987 = vmatpush.msra.mxu0 0.0
        %1988 = vmatpush.msra.mxu0 0.0
        %1989 = vmatpush.msra.mxu0 0.0
        %1990 = vmatpush.msra.mxu0 0.0
        %1991 = vmatpush.msra.mxu0 0.0
        %1992 = vmatpush.msra.mxu0 0.0
        %1993 = vmatpush.msra.mxu0 0.0
        %1994 = vmatpush.msra.mxu0 0.0
        %1995 = vmatpush.msra.mxu0 0.0
        %1996 = vmatpush.msra.mxu0 0.0
        %1997 = vmatpush.msra.mxu0 0.0
        %1998 = vmatpush.msra.mxu0 0.0
        %1999 = vmatpush.msra.mxu0 0.0
        %2000 = vmatpush.msra.mxu0 0.0
        %2001 = vmatpush.msra.mxu0 %v1978
        %2002 = vmatmul.f32.gmra.mxu0 %v1974
        %v2003 = vpop.f32.mrf.mxu0
        %v2004 = vadd.f32 %v1966, %v2003
        %2005 = vdwg.mxu0
        %2006 = vmatpush.msra.mxu0 0.0
        %2007 = vmatpush.msra.mxu0 0.0
        %2008 = vmatpush.msra.mxu0 0.0
        %2009 = vmatpush.msra.mxu0 0.0
        %2010 = vmatpush.msra.mxu0 0.0
        %2011 = vmatpush.msra.mxu0 0.0
        %2012 = vmatpush.msra.mxu0 0.0
        %2013 = vmatpush.msra.mxu0 0.0
        %2014 = vmatpush.msra.mxu0 0.0
        %2015 = vmatpush.msra.mxu0 0.0
        %2016 = vmatpush.msra.mxu0 0.0
        %2017 = vmatpush.msra.mxu0 0.0
        %2018 = vmatpush.msra.mxu0 0.0
        %2019 = vmatpush.msra.mxu0 0.0
        %2020 = vmatpush.msra.mxu0 0.0
        %2021 = vmatpush.msra.mxu0 %v1981
        %2022 = vmatmul.f32.gmra.mxu0 %v1974
        %v2023 = vpop.f32.mrf.mxu0
        %v2024 = vadd.f32 %v1967, %v2023
        %2025 = vdwg.mxu0
        %2026 = vmatpush.msra.mxu0 0.0
        %2027 = vmatpush.msra.mxu0 0.0
        %2028 = vmatpush.msra.mxu0 0.0
        %2029 = vmatpush.msra.mxu0 0.0
        %2030 = vmatpush.msra.mxu0 0.0
        %2031 = vmatpush.msra.mxu0 0.0
        %2032 = vmatpush.msra.mxu0 0.0
        %2033 = vmatpush.msra.mxu0 0.0
        %2034 = vmatpush.msra.mxu0 0.0
        %2035 = vmatpush.msra.mxu0 0.0
        %2036 = vmatpush.msra.mxu0 0.0
        %2037 = vmatpush.msra.mxu0 0.0
        %2038 = vmatpush.msra.mxu0 0.0
        %2039 = vmatpush.msra.mxu0 0.0
        %2040 = vmatpush.msra.mxu0 0.0
        %2041 = vmatpush.msra.mxu0 %v1984
        %2042 = vmatmul.f32.gmra.mxu0 %v1974
        %v2043 = vpop.f32.mrf.mxu0
        %v2044 = vadd.f32 %v1968, %v2043
        %2045 = vdwg.mxu0
        %v2046 = vmax.f32 %v2004, 0.0
        %v2047 = vmax.f32 %v2024, 0.0
        %v2048 = vmax.f32 %v2044, 0.0
        %v2049 = vld [vmem:[#allocation8 + $0x410] sm:$0xff]
        %v2050 = vld [vmem:[#allocation8 + $0x418] sm:$0xff]
        %v2051 = vld [vmem:[#allocation8 + $0x420] sm:$0xff]
        %v2052 = vld [vmem:[#allocation8 + $0x428] sm:$0xff]
        %v2053 = vld [vmem:[#allocation8 + $0x430] sm:$0xff]
        %v2054 = vld [vmem:[#allocation8 + $0x438] sm:$0xff]
        %v2055 = vld [vmem:[#allocation8 + $0x440] sm:$0xff]
        %v2056 = vld [vmem:[#allocation8 + $0x448] sm:$0xff]
        %v2057 = vld [vmem:[#allocation8 + $0x450] sm:$0xff]
        %v2058 = vld [vmem:[#allocation8 + $0x458] sm:$0xff]
        %v2059 = vld [vmem:[#allocation8 + $0x460] sm:$0xff]
        %v2060 = vld [vmem:[#allocation8 + $0x468] sm:$0xff]
        %v2061 = vld [vmem:[#allocation8 + $0x470] sm:$0xff]
        %v2062 = vld [vmem:[#allocation8 + $0x478] sm:$0xff]
        %v2063 = vld [vmem:[#allocation8 + $0x480] sm:$0xff]
        %v2064 = vld [vmem:[#allocation8 + $0x488] sm:$0xff]
        %v2065 = vld [vmem:[#allocation8 + $0x490] sm:$0xff]
        %v2066 = vld [vmem:[#allocation8 + $0x498] sm:$0xff]
        %v2067 = vld [vmem:[#allocation8 + $0x4a0] sm:$0xff]
        %v2068 = vld [vmem:[#allocation8 + $0x4a8] sm:$0xff]
        %v2069 = vld [vmem:[#allocation8 + $0x4b0] sm:$0xff]
        %v2070 = vld [vmem:[#allocation8 + $0x4b8] sm:$0xff]
        %v2071 = vld [vmem:[#allocation8 + $0x4c0] sm:$0xff]
        %v2072 = vld [vmem:[#allocation8 + $0x4c8] sm:$0xff]
        %v2073 = vld [vmem:[#allocation8 + $0x4d0] sm:$0xff]
        %v2074 = vld [vmem:[#allocation8 + $0x4d8] sm:$0xff]
        %v2075 = vld [vmem:[#allocation8 + $0x4e0] sm:$0xff]
        %v2076 = vld [vmem:[#allocation8 + $0x4e8] sm:$0xff]
        %v2077 = vld [vmem:[#allocation8 + $0x4f0] sm:$0xff]
        %v2078 = vld [vmem:[#allocation8 + $0x4f8] sm:$0xff]
        %v2079 = vld [vmem:[#allocation8 + $0x500] sm:$0xff]
        %v2080 = vld [vmem:[#allocation8 + $0x508] sm:$0xff]
        %v2081 = vld [vmem:[#allocation8 + $0x510] sm:$0xff]
        %v2082 = vld [vmem:[#allocation8 + $0x518] sm:$0xff]
        %v2083 = vld [vmem:[#allocation8 + $0x520] sm:$0xff]
        %v2084 = vld [vmem:[#allocation8 + $0x528] sm:$0xff]
        %v2085 = vld [vmem:[#allocation8 + $0x530] sm:$0xff]
        %v2086 = vld [vmem:[#allocation8 + $0x538] sm:$0xff]
        %v2087 = vld [vmem:[#allocation8 + $0x540] sm:$0xff]
        %v2088 = vld [vmem:[#allocation8 + $0x548] sm:$0xff]
        %v2089 = vld [vmem:[#allocation8 + $0x550] sm:$0xff]
        %v2090 = vld [vmem:[#allocation8 + $0x558] sm:$0xff]
        %v2091 = vld [vmem:[#allocation8 + $0x560] sm:$0xff]
        %v2092 = vld [vmem:[#allocation8 + $0x568] sm:$0xff]
        %v2093 = vld [vmem:[#allocation8 + $0x570] sm:$0xff]
        %v2094 = vld [vmem:[#allocation8 + $0x578] sm:$0xff]
        %v2095 = vld [vmem:[#allocation8 + $0x580] sm:$0xff]
        %v2096 = vld [vmem:[#allocation8 + $0x588] sm:$0xff]
        %v2097 = vld [vmem:[#allocation8 + $0x590] sm:$0xff]
        %v2098 = vld [vmem:[#allocation8 + $0x598] sm:$0xff]
        %v2099 = vld [vmem:[#allocation8 + $0x5a0] sm:$0xff]
        %v2100 = vld [vmem:[#allocation8 + $0x5a8] sm:$0xff]
        %v2101 = vld [vmem:[#allocation8 + $0x5b0] sm:$0xff]
        %v2102 = vld [vmem:[#allocation8 + $0x5b8] sm:$0xff]
        %v2103 = vld [vmem:[#allocation8 + $0x5c0] sm:$0xff]
        %v2104 = vld [vmem:[#allocation8 + $0x5c8] sm:$0xff]
        %v2105 = vld [vmem:[#allocation8 + $0x5d0] sm:$0xff]
        %v2106 = vld [vmem:[#allocation8 + $0x5d8] sm:$0xff]
        %v2107 = vld [vmem:[#allocation8 + $0x5e0] sm:$0xff]
        %v2108 = vld [vmem:[#allocation8 + $0x5e8] sm:$0xff]
        %v2109 = vld [vmem:[#allocation8 + $0x5f0] sm:$0xff]
        %v2110 = vld [vmem:[#allocation8 + $0x5f8] sm:$0xff]
        %v2111 = vld [vmem:[#allocation8 + $0x600] sm:$0xff]
        %v2112 = vld [vmem:[#allocation8 + $0x608] sm:$0xff]
        %v2113 = vld [vmem:[#allocation8 + $0x610] sm:$0xff]
        %v2114 = vld [vmem:[#allocation8 + $0x618] sm:$0xff]
        %v2115 = vld [vmem:[#allocation8 + $0x620] sm:$0xff]
        %v2116 = vld [vmem:[#allocation8 + $0x628] sm:$0xff]
        %v2117 = vld [vmem:[#allocation8 + $0x630] sm:$0xff]
        %v2118 = vld [vmem:[#allocation8 + $0x638] sm:$0xff]
        %v2119 = vld [vmem:[#allocation8 + $0x640] sm:$0xff]
        %v2120 = vld [vmem:[#allocation8 + $0x648] sm:$0xff]
        %v2121 = vld [vmem:[#allocation8 + $0x650] sm:$0xff]
        %v2122 = vld [vmem:[#allocation8 + $0x658] sm:$0xff]
        %v2123 = vld [vmem:[#allocation8 + $0x660] sm:$0xff]
        %v2124 = vld [vmem:[#allocation8 + $0x668] sm:$0xff]
        %v2125 = vld [vmem:[#allocation8 + $0x670] sm:$0xff]
        %v2126 = vld [vmem:[#allocation8 + $0x678] sm:$0xff]
        %v2127 = vld [vmem:[#allocation8 + $0x680] sm:$0xff]
        %v2128 = vld [vmem:[#allocation8 + $0x688] sm:$0xff]
        %v2129 = vld [vmem:[#allocation8 + $0x690] sm:$0xff]
        %v2130 = vld [vmem:[#allocation8 + $0x698] sm:$0xff]
        %v2131 = vld [vmem:[#allocation8 + $0x6a0] sm:$0xff]
        %v2132 = vld [vmem:[#allocation8 + $0x6a8] sm:$0xff]
        %v2133 = vld [vmem:[#allocation8 + $0x6b0] sm:$0xff]
        %v2134 = vld [vmem:[#allocation8 + $0x6b8] sm:$0xff]
        %v2135 = vld [vmem:[#allocation8 + $0x6c0] sm:$0xff]
        %v2136 = vld [vmem:[#allocation8 + $0x6c8] sm:$0xff]
        %v2137 = vld [vmem:[#allocation8 + $0x6d0] sm:$0xff]
        %v2138 = vld [vmem:[#allocation8 + $0x6d8] sm:$0xff]
        %v2139 = vld [vmem:[#allocation8 + $0x6e0] sm:$0xff]
        %v2140 = vld [vmem:[#allocation8 + $0x6e8] sm:$0xff]
        %v2141 = vld [vmem:[#allocation8 + $0x6f0] sm:$0xff]
        %v2142 = vld [vmem:[#allocation8 + $0x6f8] sm:$0xff]
        %v2143 = vld [vmem:[#allocation8 + $0x700] sm:$0xff]
        %v2144 = vld [vmem:[#allocation8 + $0x708] sm:$0xff]
        %s2145 = scalar_lea.vmem [#allocation8], 1808
        %v2146 = vld [vmem:[%s2145] ss:$8 sm:$0x3]
        %v2148 = vperm.slane %v2146, 0
        %v2149 = vperm.slane %v2146, 1
        %2152 = vmatpush.msra.mxu0 %v2079
        %2153 = vmatpush.msra.mxu0 %v2077
        %2154 = vmatpush.msra.mxu0 %v2075
        %2155 = vmatpush.msra.mxu0 %v2073
        %2156 = vmatpush.msra.mxu0 %v2071
        %2157 = vmatpush.msra.mxu0 %v2069
        %2158 = vmatpush.msra.mxu0 %v2067
        %2159 = vmatpush.msra.mxu0 %v2065
        %2160 = vmatpush.msra.mxu0 %v2063
        %2161 = vmatpush.msra.mxu0 %v2061
        %2162 = vmatpush.msra.mxu0 %v2059
        %2163 = vmatpush.msra.mxu0 %v2057
        %2164 = vmatpush.msra.mxu0 %v2055
        %2165 = vmatpush.msra.mxu0 %v2053
        %2166 = vmatpush.msra.mxu0 %v2051
        %2167 = vmatpush.msra.mxu0 %v2049
        %2168 = vmatmul.f32.gmra.mxu0 %v2046
        %v2169 = vpop.f32.mrf.mxu0
        %v2170 = vadd.f32 %v2148, %v2169
        %2171 = vdwg.mxu0
        %2172 = vmatpush.msra.mxu0 %v2111
        %2173 = vmatpush.msra.mxu0 %v2109
        %2174 = vmatpush.msra.mxu0 %v2107
        %2175 = vmatpush.msra.mxu0 %v2105
        %2176 = vmatpush.msra.mxu0 %v2103
        %2177 = vmatpush.msra.mxu0 %v2101
        %2178 = vmatpush.msra.mxu0 %v2099
        %2179 = vmatpush.msra.mxu0 %v2097
        %2180 = vmatpush.msra.mxu0 %v2095
        %2181 = vmatpush.msra.mxu0 %v2093
        %2182 = vmatpush.msra.mxu0 %v2091
        %2183 = vmatpush.msra.mxu0 %v2089
        %2184 = vmatpush.msra.mxu0 %v2087
        %2185 = vmatpush.msra.mxu0 %v2085
        %2186 = vmatpush.msra.mxu0 %v2083
        %2187 = vmatpush.msra.mxu0 %v2081
        %2188 = vmatmul.f32.gmra.mxu0 %v2047
        %v2189 = vpop.f32.mrf.mxu0
        %v2190 = vadd.f32 %v2170, %v2189
        %2191 = vdwg.mxu0
        %2192 = vmatpush.msra.mxu0 %v2143
        %2193 = vmatpush.msra.mxu0 %v2141
        %2194 = vmatpush.msra.mxu0 %v2139
        %2195 = vmatpush.msra.mxu0 %v2137
        %2196 = vmatpush.msra.mxu0 %v2135
        %2197 = vmatpush.msra.mxu0 %v2133
        %2198 = vmatpush.msra.mxu0 %v2131
        %2199 = vmatpush.msra.mxu0 %v2129
        %2200 = vmatpush.msra.mxu0 %v2127
        %2201 = vmatpush.msra.mxu0 %v2125
        %2202 = vmatpush.msra.mxu0 %v2123
        %2203 = vmatpush.msra.mxu0 %v2121
        %2204 = vmatpush.msra.mxu0 %v2119
        %2205 = vmatpush.msra.mxu0 %v2117
        %2206 = vmatpush.msra.mxu0 %v2115
        %2207 = vmatpush.msra.mxu0 %v2113
        %2208 = vmatmul.f32.gmra.mxu0 %v2048
        %v2209 = vpop.f32.mrf.mxu0
        %v2210 = vadd.f32 %v2190, %v2209
        %2211 = vdwg.mxu0
        %2212 = vmatpush.msra.mxu0 %v2080
        %2213 = vmatpush.msra.mxu0 %v2078
        %2214 = vmatpush.msra.mxu0 %v2076
        %2215 = vmatpush.msra.mxu0 %v2074
        %2216 = vmatpush.msra.mxu0 %v2072
        %2217 = vmatpush.msra.mxu0 %v2070
        %2218 = vmatpush.msra.mxu0 %v2068
        %2219 = vmatpush.msra.mxu0 %v2066
        %2220 = vmatpush.msra.mxu0 %v2064
        %2221 = vmatpush.msra.mxu0 %v2062
        %2222 = vmatpush.msra.mxu0 %v2060
        %2223 = vmatpush.msra.mxu0 %v2058
        %2224 = vmatpush.msra.mxu0 %v2056
        %2225 = vmatpush.msra.mxu0 %v2054
        %2226 = vmatpush.msra.mxu0 %v2052
        %2227 = vmatpush.msra.mxu0 %v2050
        %2228 = vmatmul.f32.gmra.mxu0 %v2046
        %v2229 = vpop.f32.mrf.mxu0
        %v2230 = vadd.f32 %v2149, %v2229
        %2231 = vdwg.mxu0
        %2232 = vmatpush.msra.mxu0 %v2112
        %2233 = vmatpush.msra.mxu0 %v2110
        %2234 = vmatpush.msra.mxu0 %v2108
        %2235 = vmatpush.msra.mxu0 %v2106
        %2236 = vmatpush.msra.mxu0 %v2104
        %2237 = vmatpush.msra.mxu0 %v2102
        %2238 = vmatpush.msra.mxu0 %v2100
        %2239 = vmatpush.msra.mxu0 %v2098
        %2240 = vmatpush.msra.mxu0 %v2096
        %2241 = vmatpush.msra.mxu0 %v2094
        %2242 = vmatpush.msra.mxu0 %v2092
        %2243 = vmatpush.msra.mxu0 %v2090
        %2244 = vmatpush.msra.mxu0 %v2088
        %2245 = vmatpush.msra.mxu0 %v2086
        %2246 = vmatpush.msra.mxu0 %v2084
        %2247 = vmatpush.msra.mxu0 %v2082
        %2248 = vmatmul.f32.gmra.mxu0 %v2047
        %v2249 = vpop.f32.mrf.mxu0
        %v2250 = vadd.f32 %v2230, %v2249
        %2251 = vdwg.mxu0
        %2252 = vmatpush.msra.mxu0 %v2144
        %2253 = vmatpush.msra.mxu0 %v2142
        %2254 = vmatpush.msra.mxu0 %v2140
        %2255 = vmatpush.msra.mxu0 %v2138
        %2256 = vmatpush.msra.mxu0 %v2136
        %2257 = vmatpush.msra.mxu0 %v2134
        %2258 = vmatpush.msra.mxu0 %v2132
        %2259 = vmatpush.msra.mxu0 %v2130
        %2260 = vmatpush.msra.mxu0 %v2128
        %2261 = vmatpush.msra.mxu0 %v2126
        %2262 = vmatpush.msra.mxu0 %v2124
        %2263 = vmatpush.msra.mxu0 %v2122
        %2264 = vmatpush.msra.mxu0 %v2120
        %2265 = vmatpush.msra.mxu0 %v2118
        %2266 = vmatpush.msra.mxu0 %v2116
        %2267 = vmatpush.msra.mxu0 %v2114
        %2268 = vmatmul.f32.gmra.mxu0 %v2048
        %v2269 = vpop.f32.mrf.mxu0
        %v2270 = vadd.f32 %v2250, %v2269
        %2271 = vdwg.mxu0
        %v2272 = vmax.f32 %v2210, 0.0
        %v2273 = vmax.f32 %v2270, 0.0
        %v2274 = vld [vmem:[#allocation6 + $0x628] sm:$0xff]
        %v2275 = vld [vmem:[#allocation6 + $0x630] sm:$0xff]
        %v2276 = vld [vmem:[#allocation6 + $0x638] sm:$0xff]
        %v2277 = vld [vmem:[#allocation6 + $0x640] sm:$0xff]
        %v2278 = vld [vmem:[#allocation6 + $0x648] sm:$0xff]
        %v2279 = vld [vmem:[#allocation6 + $0x650] sm:$0xff]
        %v2280 = vld [vmem:[#allocation6 + $0x658] sm:$0xff]
        %v2281 = vld [vmem:[#allocation6 + $0x660] sm:$0xff]
        %v2282 = vld [vmem:[#allocation6 + $0x668] sm:$0xff]
        %v2283 = vld [vmem:[#allocation6 + $0x670] sm:$0xff]
        %v2284 = vld [vmem:[#allocation6 + $0x678] sm:$0xff]
        %v2285 = vld [vmem:[#allocation6 + $0x680] sm:$0xff]
        %v2286 = vld [vmem:[#allocation6 + $0x688] sm:$0xff]
        %v2287 = vld [vmem:[#allocation6 + $0x690] sm:$0xff]
        %v2288 = vld [vmem:[#allocation6 + $0x698] sm:$0xff]
        %v2289 = vld [vmem:[#allocation6 + $0x6a0] sm:$0xff]
        %v2290 = vld [vmem:[#allocation6 + $0x6a8] sm:$0xff]
        %v2291 = vld [vmem:[#allocation6 + $0x6b0] sm:$0xff]
        %v2292 = vld [vmem:[#allocation6 + $0x6b8] sm:$0xff]
        %v2293 = vld [vmem:[#allocation6 + $0x6c0] sm:$0xff]
        %v2294 = vld [vmem:[#allocation6 + $0x6c8] sm:$0xff]
        %v2295 = vld [vmem:[#allocation6 + $0x6d0] sm:$0xff]
        %v2296 = vld [vmem:[#allocation6 + $0x6d8] sm:$0xff]
        %v2297 = vld [vmem:[#allocation6 + $0x6e0] sm:$0xff]
        %v2298 = vld [vmem:[#allocation6 + $0x6e8] sm:$0x1]
        %v2299 = vperm.slane %v2298, 0
        %vm2300 = vcmask 523264
        %v2302 = vsel %vm2300, %v2273, 0
        %2304 = vmatpush.msra.mxu0 %v2289
        %2305 = vmatpush.msra.mxu0 %v2288
        %2306 = vmatpush.msra.mxu0 %v2287
        %2307 = vmatpush.msra.mxu0 %v2286
        %2308 = vmatpush.msra.mxu0 %v2285
        %2309 = vmatpush.msra.mxu0 %v2284
        %2310 = vmatpush.msra.mxu0 %v2283
        %2311 = vmatpush.msra.mxu0 %v2282
        %2312 = vmatpush.msra.mxu0 %v2281
        %2313 = vmatpush.msra.mxu0 %v2280
        %2314 = vmatpush.msra.mxu0 %v2279
        %2315 = vmatpush.msra.mxu0 %v2278
        %2316 = vmatpush.msra.mxu0 %v2277
        %2317 = vmatpush.msra.mxu0 %v2276
        %2318 = vmatpush.msra.mxu0 %v2275
        %2319 = vmatpush.msra.mxu0 %v2274
        %2320 = vmatmul.f32.gmra.mxu0 %v2272
        %v2321 = vpop.f32.mrf.mxu0
        %v2322 = vadd.f32 %v2299, %v2321
        %2323 = vdwg.mxu0
        %2324 = vmatpush.msra.mxu0 0.0
        %2325 = vmatpush.msra.mxu0 0.0
        %2326 = vmatpush.msra.mxu0 0.0
        %2327 = vmatpush.msra.mxu0 0.0
        %2328 = vmatpush.msra.mxu0 0.0
        %2329 = vmatpush.msra.mxu0 0.0
        %2330 = vmatpush.msra.mxu0 0.0
        %2331 = vmatpush.msra.mxu0 0.0
        %2332 = vmatpush.msra.mxu0 %v2297
        %2333 = vmatpush.msra.mxu0 %v2296
        %2334 = vmatpush.msra.mxu0 %v2295
        %2335 = vmatpush.msra.mxu0 %v2294
        %2336 = vmatpush.msra.mxu0 %v2293
        %2337 = vmatpush.msra.mxu0 %v2292
        %2338 = vmatpush.msra.mxu0 %v2291
        %2339 = vmatpush.msra.mxu0 %v2290
        %2340 = vmatmul.f32.gmra.mxu0 %v2302
        %v2341 = vpop.f32.mrf.mxu0
        %v2342 = vadd.f32 %v2322, %v2341
        %2343 = vdwg.mxu0
        %v2344 = vmax.f32 %v2342, 0.0
        %v2345 = vld [vmem:[#allocation6 + $0x6f0] sm:$0xff]
        %v2346 = vld [vmem:[#allocation6 + $0x6f8] sm:$0xff]
        %v2347 = vld [vmem:[#allocation6 + $0x700] sm:$0xff]
        %v2348 = vld [vmem:[#allocation6 + $0x708] sm:$0xff]
        %v2349 = vld [vmem:[#allocation6 + $0x710] sm:$0xff]
        %v2350 = vld [vmem:[#allocation6 + $0x718] sm:$0xff]
        %v2351 = vld [vmem:[#allocation6 + $0x720] sm:$0xff]
        %v2352 = vld [vmem:[#allocation6 + $0x728] sm:$0xff]
        %v2353 = vld [vmem:[#allocation6 + $0x730] sm:$0xff]
        %v2354 = vld [vmem:[#allocation6 + $0x738] sm:$0xff]
        %v2355 = vld [vmem:[#allocation6 + $0x740] sm:$0xff]
        %v2356 = vld [vmem:[#allocation6 + $0x748] sm:$0xff]
        %v2357 = vld [vmem:[#allocation6 + $0x750] sm:$0x1]
        %v2358 = vperm.slane %v2357, 0
        %vm2359 = vcmask 785408
        %v2361 = vsel %vm2359, %v2344, 0
        %2363 = vmatpush.msra.mxu0 0.0
        %2364 = vmatpush.msra.mxu0 0.0
        %2365 = vmatpush.msra.mxu0 0.0
        %2366 = vmatpush.msra.mxu0 0.0
        %2367 = vmatpush.msra.mxu0 %v2356
        %2368 = vmatpush.msra.mxu0 %v2355
        %2369 = vmatpush.msra.mxu0 %v2354
        %2370 = vmatpush.msra.mxu0 %v2353
        %2371 = vmatpush.msra.mxu0 %v2352
        %2372 = vmatpush.msra.mxu0 %v2351
        %2373 = vmatpush.msra.mxu0 %v2350
        %2374 = vmatpush.msra.mxu0 %v2349
        %2375 = vmatpush.msra.mxu0 %v2348
        %2376 = vmatpush.msra.mxu0 %v2347
        %2377 = vmatpush.msra.mxu0 %v2346
        %2378 = vmatpush.msra.mxu0 %v2345
        %2379 = vmatmul.f32.gmra.mxu0 %v2361
        %v2380 = vpop.f32.mrf.mxu0
        %v2381 = vadd.f32 %v2358, %v2380
        %2382 = vdwg.mxu0
        %v2383 = vmax.f32 %v2381, 0.0
        %v2384 = vld [vmem:[#allocation6 + $0x758] sm:$0xff]
        %v2385 = vld [vmem:[#allocation6 + $0x760] sm:$0xff]
        %v2386 = vld [vmem:[#allocation6 + $0x768] sm:$0xff]
        %v2387 = vld [vmem:[#allocation6 + $0x770] sm:$0xff]
        %v2388 = vld [vmem:[#allocation6 + $0x778] sm:$0xff]
        %v2389 = vld [vmem:[#allocation6 + $0x780] sm:$0xff]
        %v2390 = vld [vmem:[#allocation6 + $0x788] sm:$0xff]
        %v2391 = vld [vmem:[#allocation6 + $0x790] sm:$0xff]
        %v2392 = vld [vmem:[#allocation6 + $0x798] sm:$0xff]
        %v2393 = vld [vmem:[#allocation6 + $0x7a0] sm:$0xff]
        %v2394 = vld [vmem:[#allocation6 + $0x7a8] sm:$0xff]
        %v2395 = vld [vmem:[#allocation6 + $0x7b0] sm:$0xff]
        %v2396 = vld [vmem:[#allocation6 + $0x7b8] sm:$0xff]
        %v2397 = vld [vmem:[#allocation6 + $0x7c0] sm:$0xff]
        %v2398 = vld [vmem:[#allocation6 + $0x7c8] sm:$0xff]
        %v2399 = vld [vmem:[#allocation6 + $0x7d0] sm:$0xff]
        %v2400 = vld [vmem:[#allocation6 + $0x7d8] sm:$0x1]
        %v2401 = vperm.slane %v2400, 0
        %2402 = vmatpush.msra.mxu0 %v2399
        %2403 = vmatpush.msra.mxu0 %v2398
        %2404 = vmatpush.msra.mxu0 %v2397
        %2405 = vmatpush.msra.mxu0 %v2396
        %2406 = vmatpush.msra.mxu0 %v2395
        %2407 = vmatpush.msra.mxu0 %v2394
        %2408 = vmatpush.msra.mxu0 %v2393
        %2409 = vmatpush.msra.mxu0 %v2392
        %2410 = vmatpush.msra.mxu0 %v2391
        %2411 = vmatpush.msra.mxu0 %v2390
        %2412 = vmatpush.msra.mxu0 %v2389
        %2413 = vmatpush.msra.mxu0 %v2388
        %2414 = vmatpush.msra.mxu0 %v2387
        %2415 = vmatpush.msra.mxu0 %v2386
        %2416 = vmatpush.msra.mxu0 %v2385
        %2417 = vmatpush.msra.mxu0 %v2384
        %2418 = vmatmul.f32.gmra.mxu0 %v2383
        %v2419 = vpop.f32.mrf.mxu0
        %v2420 = vadd.f32 %v2401, %v2419
        %2421 = vdwg.mxu0
        %v2422 = vmax.f32 %v2420, 0.0
        %v2423 = vld [vmem:[#allocation6 + $0x528] sm:$0xff]
        %v2424 = vld [vmem:[#allocation6 + $0x530] sm:$0xff]
        %v2425 = vld [vmem:[#allocation6 + $0x538] sm:$0xff]
        %v2426 = vld [vmem:[#allocation6 + $0x540] sm:$0xff]
        %v2427 = vld [vmem:[#allocation6 + $0x548] sm:$0xff]
        %v2428 = vld [vmem:[#allocation6 + $0x550] sm:$0xff]
        %v2429 = vld [vmem:[#allocation6 + $0x558] sm:$0xff]
        %v2430 = vld [vmem:[#allocation6 + $0x560] sm:$0xff]
        %v2431 = vld [vmem:[#allocation6 + $0x568] sm:$0xff]
        %v2432 = vld [vmem:[#allocation6 + $0x570] sm:$0xff]
        %v2433 = vld [vmem:[#allocation6 + $0x578] sm:$0xff]
        %v2434 = vld [vmem:[#allocation6 + $0x580] sm:$0xff]
        %v2435 = vld [vmem:[#allocation6 + $0x588] sm:$0xff]
        %v2436 = vld [vmem:[#allocation6 + $0x590] sm:$0xff]
        %v2437 = vld [vmem:[#allocation6 + $0x598] sm:$0xff]
        %v2438 = vld [vmem:[#allocation6 + $0x5a0] sm:$0xff]
        %v2439 = vld [vmem:[#allocation6 + $0x5a8] sm:$0xff]
        %v2440 = vld [vmem:[#allocation6 + $0x5b0] sm:$0xff]
        %v2441 = vld [vmem:[#allocation6 + $0x5b8] sm:$0xff]
        %v2442 = vld [vmem:[#allocation6 + $0x5c0] sm:$0xff]
        %v2443 = vld [vmem:[#allocation6 + $0x5c8] sm:$0xff]
        %v2444 = vld [vmem:[#allocation6 + $0x5d0] sm:$0xff]
        %v2445 = vld [vmem:[#allocation6 + $0x5d8] sm:$0xff]
        %v2446 = vld [vmem:[#allocation6 + $0x5e0] sm:$0xff]
        %v2447 = vld [vmem:[#allocation6 + $0x5e8] sm:$0xff]
        %v2448 = vld [vmem:[#allocation6 + $0x5f0] sm:$0xff]
        %v2449 = vld [vmem:[#allocation6 + $0x5f8] sm:$0xff]
        %v2450 = vld [vmem:[#allocation6 + $0x600] sm:$0xff]
        %v2451 = vld [vmem:[#allocation6 + $0x608] sm:$0xff]
        %v2452 = vld [vmem:[#allocation6 + $0x610] sm:$0xff]
        %v2453 = vld [vmem:[#allocation6 + $0x618] sm:$0xff]
        %v2454 = vld [vmem:[#allocation6 + $0x620] sm:$0xff]
        %2455 = vmatpush.msra.mxu0 %v2454
        %2456 = vmatpush.msra.mxu0 %v2453
        %2457 = vmatpush.msra.mxu0 %v2452
        %2458 = vmatpush.msra.mxu0 %v2451
        %2459 = vmatpush.msra.mxu0 %v2450
        %2460 = vmatpush.msra.mxu0 %v2449
        %2461 = vmatpush.msra.mxu0 %v2448
        %2462 = vmatpush.msra.mxu0 %v2447
        %2463 = vmatpush.msra.mxu0 %v2446
        %2464 = vmatpush.msra.mxu0 %v2445
        %2465 = vmatpush.msra.mxu0 %v2444
        %2466 = vmatpush.msra.mxu0 %v2443
        %2467 = vmatpush.msra.mxu0 %v2442
        %2468 = vmatpush.msra.mxu0 %v2441
        %2469 = vmatpush.msra.mxu0 %v2440
        %2470 = vmatpush.msra.mxu0 %v2439
        %2471 = vmatmul.f32.gmra.mxu0 %v1905
        %v2472 = vpop.f32.mrf.mxu0
        %v2473 = vadd.f32 0.0, %v2472
        %2474 = vdwg.mxu0
        %2475 = vmatpush.msra.mxu0 %v2438
        %2476 = vmatpush.msra.mxu0 %v2437
        %2477 = vmatpush.msra.mxu0 %v2436
        %2478 = vmatpush.msra.mxu0 %v2435
        %2479 = vmatpush.msra.mxu0 %v2434
        %2480 = vmatpush.msra.mxu0 %v2433
        %2481 = vmatpush.msra.mxu0 %v2432
        %2482 = vmatpush.msra.mxu0 %v2431
        %2483 = vmatpush.msra.mxu0 %v2430
        %2484 = vmatpush.msra.mxu0 %v2429
        %2485 = vmatpush.msra.mxu0 %v2428
        %2486 = vmatpush.msra.mxu0 %v2427
        %2487 = vmatpush.msra.mxu0 %v2426
        %2488 = vmatpush.msra.mxu0 %v2425
        %2489 = vmatpush.msra.mxu0 %v2424
        %2490 = vmatpush.msra.mxu0 %v2423
        %2491 = vmatmul.f32.gmra.mxu0 %v1830
        %v2492 = vpop.f32.mrf.mxu0
        %v2493 = vadd.f32 %v2473, %v2492
        %2494 = vdwg.mxu0
        %v2495 = vld [vmem:[#allocation6 + $0x7e0] sm:$0xff]
        %v2496 = vld [vmem:[#allocation6 + $0x7e8] sm:$0xff]
        %v2497 = vld [vmem:[#allocation6 + $0x7f0] sm:$0xff]
        %v2498 = vld [vmem:[#allocation6 + $0x7f8] sm:$0xff]
        %v2499 = vld [vmem:[#allocation6 + $0x800] sm:$0xff]
        %v2500 = vld [vmem:[#allocation6 + $0x808] sm:$0xff]
        %v2501 = vld [vmem:[#allocation6 + $0x810] sm:$0xff]
        %v2502 = vld [vmem:[#allocation6 + $0x818] sm:$0xff]
        %v2504 = vsel %vm2300, %v2422, 0
        %2506 = vmatpush.msra.mxu0 0.0
        %2507 = vmatpush.msra.mxu0 0.0
        %2508 = vmatpush.msra.mxu0 0.0
        %2509 = vmatpush.msra.mxu0 0.0
        %2510 = vmatpush.msra.mxu0 0.0
        %2511 = vmatpush.msra.mxu0 0.0
        %2512 = vmatpush.msra.mxu0 0.0
        %2513 = vmatpush.msra.mxu0 0.0
        %2514 = vmatpush.msra.mxu0 %v2502
        %2515 = vmatpush.msra.mxu0 %v2501
        %2516 = vmatpush.msra.mxu0 %v2500
        %2517 = vmatpush.msra.mxu0 %v2499
        %2518 = vmatpush.msra.mxu0 %v2498
        %2519 = vmatpush.msra.mxu0 %v2497
        %2520 = vmatpush.msra.mxu0 %v2496
        %2521 = vmatpush.msra.mxu0 %v2495
        %2522 = vmatmul.f32.gmra.mxu0 %v2504
        %v2523 = vpop.f32.mrf.mxu0
        %v2524 = vadd.f32 0.0, %v2523
        %2525 = vdwg.mxu0
        %v2526 = vadd.f32 %v2493, %v2524
        %v2527 = vld [vmem:[#allocation6 + $0x820] sm:$0x1]
        %v2528 = vperm.slane %v2527, 0
        %v2529 = vadd.f32 %v2526, %v2528
        %v2530 = vadd.f32 %v379, %v2529
        %v2531 = vsub.f32 %v381, %v380
        %v2532 = vmul.f32 %v2531, %v2531
        %vm2533 = vcmask 50176
        %v2534 = vsel %vm2533, %v2532, 0.0
        %2535 = vadd.xlane.f32.xlu0 %v2534
        %v2536 = vpop.xlane.xlu0 %2535
        %v2537 = vrsqrt.pop %v2536
        %v2538 = vmul.f32 %v2537, %v2536
        %v2539 = vmul.f32 %v2538, %v2537
        %v2540 = vmul.f32 0.5, %v2539
        %v2541 = vsub.f32 1.5, %v2540
        %v2542 = vmul.f32 %v2537, %v2541
        %v2543 = vmul.f32 %v2536, %v2542
        %vm2544 = vcmp.eq.f32.partialorder %v2536, inf
        %v2545 = vsel %vm2544, %v2536, %v2543
        %vm2546 = vcmp.eq.f32.partialorder %v2536, 0.0
        %v2547 = vand.u32 %v2536, 2147483648
        %v2548 = vsel %vm2546, %v2547, %v2545
        %v2549 = vmax.f32 %v2548, 1e-12
        %v2550 = vrcp.pop %v2549
        %v2551 = vmul.f32 %v2549, %v2550
        %v2552 = vsub.f32 1.0, %v2551
        %v2553 = vmul.f32 %v2550, %v2552
        %v2554 = vadd.f32 %v2550, %v2553
        %vm2555 = vweird.f32 %v2549
        %vm2556 = vweird.f32 %v2550
        %vm2557 = vmor %vm2555, %vm2556
        %v2558 = vsel %vm2557, %v2550, %v2554
        %v2559 = vand.u32 2147483647, %v2549
        %vm2560 = vcmp.eq.f32.partialorder %v2559, 8.507059e+37
        %v2561 = vand.u32 %v2549, 2147483648
        %v2562 = vor.u32 1.1754944e-38, %v2561
        %v2563 = vsel %vm2560, %v2562, %v2558
        %v2564 = vmul.f32 %v2531, %v2563
        %v2565 = vsub.f32 %v381, %v2530
        %v2566 = vmul.f32 %v2565, %v2565
        %v2567 = vsel %vm2533, %v2566, 0.0
        %2568 = vadd.xlane.f32.xlu0 %v2567
        %v2569 = vpop.xlane.xlu0 %2568
        %v2570 = vrsqrt.pop %v2569
        %v2571 = vmul.f32 %v2570, %v2569
        %v2572 = vmul.f32 %v2571, %v2570
        %v2573 = vmul.f32 0.5, %v2572
        %v2574 = vsub.f32 1.5, %v2573
        %v2575 = vmul.f32 %v2570, %v2574
        %v2576 = vmul.f32 %v2569, %v2575
        %vm2577 = vcmp.eq.f32.partialorder %v2569, inf
        %v2578 = vsel %vm2577, %v2569, %v2576
        %vm2579 = vcmp.eq.f32.partialorder %v2569, 0.0
        %v2580 = vand.u32 %v2569, 2147483648
        %v2581 = vsel %vm2579, %v2580, %v2578
        %v2582 = vmax.f32 %v2581, 1e-12
        %v2583 = vrcp.pop %v2582
        %v2584 = vmul.f32 %v2582, %v2583
        %v2585 = vsub.f32 1.0, %v2584
        %v2586 = vmul.f32 %v2583, %v2585
        %v2587 = vadd.f32 %v2583, %v2586
        %vm2588 = vweird.f32 %v2582
        %vm2589 = vweird.f32 %v2583
        %vm2590 = vmor %vm2588, %vm2589
        %v2591 = vsel %vm2590, %v2583, %v2587
        %v2592 = vand.u32 2147483647, %v2582
        %vm2593 = vcmp.eq.f32.partialorder %v2592, 8.507059e+37
        %v2594 = vand.u32 %v2582, 2147483648
        %v2595 = vor.u32 1.1754944e-38, %v2594
        %v2596 = vsel %vm2593, %v2595, %v2591
        %v2597 = vmul.f32 %v2565, %v2596
        %v2599 = vsub.f32 %v379, %v1909
        %v2600 = vmul.f32 %v2599, %v2599
        %v2601 = vsel %vm2533, %v2600, 0.0
        %2602 = vadd.xlane.f32.xlu0 %v2601
        %v2603 = vpop.xlane.xlu0 %2602
        %v2604 = vrsqrt.pop %v2603
        %v2605 = vmul.f32 %v2604, %v2603
        %v2606 = vmul.f32 %v2605, %v2604
        %v2607 = vmul.f32 0.5, %v2606
        %v2608 = vsub.f32 1.5, %v2607
        %v2609 = vmul.f32 %v2604, %v2608
        %v2610 = vmul.f32 %v2603, %v2609
        %vm2611 = vcmp.eq.f32.partialorder %v2603, inf
        %v2612 = vsel %vm2611, %v2603, %v2610
        %vm2613 = vcmp.eq.f32.partialorder %v2603, 0.0
        %v2614 = vand.u32 %v2603, 2147483648
        %v2615 = vsel %vm2613, %v2614, %v2612
        %v2616 = vmax.f32 %v2615, 1e-12
        %v2617 = vrcp.pop %v2616
        %v2618 = vmul.f32 %v2616, %v2617
        %v2619 = vsub.f32 1.0, %v2618
        %v2620 = vmul.f32 %v2617, %v2619
        %v2621 = vadd.f32 %v2617, %v2620
        %vm2622 = vweird.f32 %v2616
        %vm2623 = vweird.f32 %v2617
        %vm2624 = vmor %vm2622, %vm2623
        %v2625 = vsel %vm2624, %v2617, %v2621
        %v2626 = vand.u32 2147483647, %v2616
        %vm2627 = vcmp.eq.f32.partialorder %v2626, 8.507059e+37
        %v2628 = vand.u32 %v2616, 2147483648
        %v2629 = vor.u32 1.1754944e-38, %v2628
        %v2630 = vsel %vm2627, %v2629, %v2625
        %v2631 = vmul.f32 %v2599, %v2630
        %v2632 = vrot.slane %v379, 6
        %v2634 = vsub.f32 %v379, %v2632
        %v2635 = vmul.f32 %v2634, %v2634
        %v2636 = vsel %vm2533, %v2635, 0.0
        %2637 = vadd.xlane.f32.xlu0 %v2636
        %v2638 = vpop.xlane.xlu0 %2637
        %v2639 = vrsqrt.pop %v2638
        %v2640 = vmul.f32 %v2639, %v2638
        %v2641 = vmul.f32 %v2640, %v2639
        %v2642 = vmul.f32 0.5, %v2641
        %v2643 = vsub.f32 1.5, %v2642
        %v2644 = vmul.f32 %v2639, %v2643
        %v2645 = vmul.f32 %v2638, %v2644
        %vm2646 = vcmp.eq.f32.partialorder %v2638, inf
        %v2647 = vsel %vm2646, %v2638, %v2645
        %vm2648 = vcmp.eq.f32.partialorder %v2638, 0.0
        %v2649 = vand.u32 %v2638, 2147483648
        %v2650 = vsel %vm2648, %v2649, %v2647
        %v2651 = vmax.f32 %v2650, 1e-12
        %v2652 = vrcp.pop %v2651
        %v2653 = vmul.f32 %v2651, %v2652
        %v2654 = vsub.f32 1.0, %v2653
        %v2655 = vmul.f32 %v2652, %v2654
        %v2656 = vadd.f32 %v2652, %v2655
        %vm2657 = vweird.f32 %v2651
        %vm2658 = vweird.f32 %v2652
        %vm2659 = vmor %vm2657, %vm2658
        %v2660 = vsel %vm2659, %v2652, %v2656
        %v2661 = vand.u32 2147483647, %v2651
        %vm2662 = vcmp.eq.f32.partialorder %v2661, 8.507059e+37
        %v2663 = vand.u32 %v2651, 2147483648
        %v2664 = vor.u32 1.1754944e-38, %v2663
        %v2665 = vsel %vm2662, %v2664, %v2660
        %v2666 = vmul.f32 %v2634, %v2665
        %v2667 = vld [vmem:[#allocation6 + $0xa28] sm:$0x7f]
        %v2668 = vld [vmem:[#allocation6 + $0xa30] sm:$0x1]
        %v2669 = vperm.slane %v2668, 0
        %v2671 = vsel %vm422, %v2631, 0
        %v2674 = vsel %vm429, %v2667, 0
        %2676 = vmatpush.msra.mxu0 0.0
        %2677 = vmatpush.msra.mxu0 0.0
        %2678 = vmatpush.msra.mxu0 0.0
        %2679 = vmatpush.msra.mxu0 0.0
        %2680 = vmatpush.msra.mxu0 0.0
        %2681 = vmatpush.msra.mxu0 0.0
        %2682 = vmatpush.msra.mxu0 0.0
        %2683 = vmatpush.msra.mxu0 0.0
        %2684 = vmatpush.msra.mxu0 0.0
        %2685 = vmatpush.msra.mxu0 0.0
        %2686 = vmatpush.msra.mxu0 0.0
        %2687 = vmatpush.msra.mxu0 0.0
        %2688 = vmatpush.msra.mxu0 0.0
        %2689 = vmatpush.msra.mxu0 0.0
        %2690 = vmatpush.msra.mxu0 0.0
        %2691 = vmatpush.msra.mxu0 %v2674
        %2692 = vmatmul.f32.gmra.mxu0 %v2671
        %v2693 = vpop.f32.mrf.mxu0
        %v2694 = vadd.f32 %v2669, %v2693
        %2695 = vdwg.mxu0
        %v2696 = vmax.f32 %v2694, 0.0
        %v2697 = vld [vmem:[#allocation8 + $0x720] sm:$0xff]
        %v2698 = vld [vmem:[#allocation8 + $0x728] sm:$0xff]
        %v2699 = vld [vmem:[#allocation8 + $0x730] sm:$0xff]
        %v2700 = vld [vmem:[#allocation8 + $0x738] sm:$0xff]
        %v2701 = vld [vmem:[#allocation8 + $0x740] sm:$0xff]
        %v2702 = vld [vmem:[#allocation8 + $0x748] sm:$0xff]
        %v2703 = vld [vmem:[#allocation8 + $0x750] sm:$0xff]
        %v2704 = vld [vmem:[#allocation8 + $0x758] sm:$0xff]
        %v2705 = vld [vmem:[#allocation8 + $0x760] sm:$0x7]
        %v2706 = vld [vmem:[#allocation8 + $0x768] sm:$0x7]
        %s2707 = scalar_lea.vmem [#allocation8], 2016
        %v2708 = vld [vmem:[%s2707] ss:$8 sm:$0x3]
        %v2710 = vperm.slane %v2708, 0
        %v2711 = vperm.slane %v2708, 1
        %vm2714 = vcmask 285696
        %v2716 = vsel %vm2714, %v2696, 0
        %v2719 = vsel %vm1976, %v2705, 0
        %v2722 = vsel %vm1976, %v2706, 0
        %2724 = vmatpush.msra.mxu0 0.0
        %2725 = vmatpush.msra.mxu0 0.0
        %2726 = vmatpush.msra.mxu0 0.0
        %2727 = vmatpush.msra.mxu0 0.0
        %2728 = vmatpush.msra.mxu0 0.0
        %2729 = vmatpush.msra.mxu0 0.0
        %2730 = vmatpush.msra.mxu0 0.0
        %2731 = vmatpush.msra.mxu0 0.0
        %2732 = vmatpush.msra.mxu0 0.0
        %2733 = vmatpush.msra.mxu0 0.0
        %2734 = vmatpush.msra.mxu0 0.0
        %2735 = vmatpush.msra.mxu0 %v2719
        %2736 = vmatpush.msra.mxu0 %v2703
        %2737 = vmatpush.msra.mxu0 %v2701
        %2738 = vmatpush.msra.mxu0 %v2699
        %2739 = vmatpush.msra.mxu0 %v2697
        %2740 = vmatmul.f32.gmra.mxu0 %v2716
        %v2741 = vpop.f32.mrf.mxu0
        %v2742 = vadd.f32 %v2710, %v2741
        %2743 = vdwg.mxu0
        %2744 = vmatpush.msra.mxu0 0.0
        %2745 = vmatpush.msra.mxu0 0.0
        %2746 = vmatpush.msra.mxu0 0.0
        %2747 = vmatpush.msra.mxu0 0.0
        %2748 = vmatpush.msra.mxu0 0.0
        %2749 = vmatpush.msra.mxu0 0.0
        %2750 = vmatpush.msra.mxu0 0.0
        %2751 = vmatpush.msra.mxu0 0.0
        %2752 = vmatpush.msra.mxu0 0.0
        %2753 = vmatpush.msra.mxu0 0.0
        %2754 = vmatpush.msra.mxu0 0.0
        %2755 = vmatpush.msra.mxu0 %v2722
        %2756 = vmatpush.msra.mxu0 %v2704
        %2757 = vmatpush.msra.mxu0 %v2702
        %2758 = vmatpush.msra.mxu0 %v2700
        %2759 = vmatpush.msra.mxu0 %v2698
        %2760 = vmatmul.f32.gmra.mxu0 %v2716
        %v2761 = vpop.f32.mrf.mxu0
        %v2762 = vadd.f32 %v2711, %v2761
        %2763 = vdwg.mxu0
        %v2764 = vld [vmem:[#allocation8 + $0x770] sm:$0xff]
        %v2765 = vld [vmem:[#allocation8 + $0x778] sm:$0xff]
        %v2766 = vld [vmem:[#allocation8 + $0x780] sm:$0xff]
        %v2767 = vld [vmem:[#allocation8 + $0x788] sm:$0xff]
        %v2768 = vld [vmem:[#allocation8 + $0x790] sm:$0xff]
        %v2769 = vld [vmem:[#allocation8 + $0x798] sm:$0xff]
        %v2770 = vld [vmem:[#allocation8 + $0x7a0] sm:$0xff]
        %v2771 = vld [vmem:[#allocation8 + $0x7a8] sm:$0xff]
        %v2772 = vld [vmem:[#allocation8 + $0x7b0] sm:$0xff]
        %v2773 = vld [vmem:[#allocation8 + $0x7b8] sm:$0xff]
        %v2774 = vld [vmem:[#allocation8 + $0x7c0] sm:$0xff]
        %v2775 = vld [vmem:[#allocation8 + $0x7c8] sm:$0xff]
        %v2776 = vld [vmem:[#allocation8 + $0x7d0] sm:$0x1]
        %v2777 = vld [vmem:[#allocation8 + $0x7d8] sm:$0x1]
        %s2778 = scalar_lea.vmem [#allocation8], 2032
        %v2779 = vld [vmem:[%s2778] ss:$8 sm:$0x3]
        %v2781 = vperm.slane %v2779, 0
        %v2782 = vperm.slane %v2779, 1
        %vm2785 = vcmask 400384
        %v2787 = vsel %vm2785, %v382, 0
        %vm2789 = vcmask 1040384
        %v2791 = vsel %vm2789, %v2776, 0
        %v2794 = vsel %vm2789, %v2777, 0
        %2796 = vmatpush.msra.mxu0 0.0
        %2797 = vmatpush.msra.mxu0 0.0
        %2798 = vmatpush.msra.mxu0 0.0
        %2799 = vmatpush.msra.mxu0 0.0
        %2800 = vmatpush.msra.mxu0 0.0
        %2801 = vmatpush.msra.mxu0 0.0
        %2802 = vmatpush.msra.mxu0 0.0
        %2803 = vmatpush.msra.mxu0 0.0
        %2804 = vmatpush.msra.mxu0 0.0
        %2805 = vmatpush.msra.mxu0 %v2791
        %2806 = vmatpush.msra.mxu0 %v2774
        %2807 = vmatpush.msra.mxu0 %v2772
        %2808 = vmatpush.msra.mxu0 %v2770
        %2809 = vmatpush.msra.mxu0 %v2768
        %2810 = vmatpush.msra.mxu0 %v2766
        %2811 = vmatpush.msra.mxu0 %v2764
        %2812 = vmatmul.f32.gmra.mxu0 %v2787
        %v2813 = vpop.f32.mrf.mxu0
        %v2814 = vadd.f32 %v2781, %v2813
        %2815 = vdwg.mxu0
        %2816 = vmatpush.msra.mxu0 0.0
        %2817 = vmatpush.msra.mxu0 0.0
        %2818 = vmatpush.msra.mxu0 0.0
        %2819 = vmatpush.msra.mxu0 0.0
        %2820 = vmatpush.msra.mxu0 0.0
        %2821 = vmatpush.msra.mxu0 0.0
        %2822 = vmatpush.msra.mxu0 0.0
        %2823 = vmatpush.msra.mxu0 0.0
        %2824 = vmatpush.msra.mxu0 0.0
        %2825 = vmatpush.msra.mxu0 %v2794
        %2826 = vmatpush.msra.mxu0 %v2775
        %2827 = vmatpush.msra.mxu0 %v2773
        %2828 = vmatpush.msra.mxu0 %v2771
        %2829 = vmatpush.msra.mxu0 %v2769
        %2830 = vmatpush.msra.mxu0 %v2767
        %2831 = vmatpush.msra.mxu0 %v2765
        %2832 = vmatmul.f32.gmra.mxu0 %v2787
        %v2833 = vpop.f32.mrf.mxu0
        %v2834 = vadd.f32 %v2782, %v2833
        %2835 = vdwg.mxu0
        %v2836 = vadd.f32 %v2742, %v2814
        %v2837 = vxor.u32 %v2836, 2147483648
        %v2838 = vmul.f32 %v2837, 1.442695
        %v2839 = vpow.pop %v2838
        %v2840 = vadd.f32 %v2839, 1.0
        %v2841 = vrcp.pop %v2840
        %v2842 = vmul.f32 %v2840, %v2841
        %v2843 = vsub.f32 1.0, %v2842
        %v2844 = vmul.f32 %v2841, %v2843
        %v2845 = vadd.f32 %v2841, %v2844
        %vm2846 = vweird.f32 %v2840
        %vm2847 = vweird.f32 %v2841
        %vm2848 = vmor %vm2846, %vm2847
        %v2849 = vsel %vm2848, %v2841, %v2845
        %v2850 = vand.u32 2147483647, %v2840
        %vm2851 = vcmp.eq.f32.partialorder %v2850, 8.507059e+37
        %v2852 = vand.u32 %v2840, 2147483648
        %v2853 = vor.u32 1.1754944e-38, %v2852
        %v2854 = vsel %vm2851, %v2853, %v2849
        %v2855 = vmul.f32 1.0, %v2854
        %2858 = vrot.lane.b32.xlu0 %v2814, 30
        %v2859 = vpop.permute.xlu0 %2858
        %2860 = vrot.lane.b32.xlu0 %v2834, 30
        %v2861 = vpop.permute.xlu0 %2860
        %vm2862 = vcmask 244736
        %v2863 = vsel %vm2862, %v2859, %v2861
        %v2865 = vmul.f32 %v2855, %v2863
        %2867 = vrot.lane.b32.xlu0 %v2865, 98
        %v2868 = vpop.permute.xlu0 %2867
        %v2870 = vadd.f32 %v2742, %v2868
        %v2871 = vadd.f32 %v2762, %v2868
        %v2872 = vtanh.pop %v2870
        %v2873 = vtanh.pop %v2871
        %v2874 = vsub.f32 1.0, %v2855
        %2877 = vrot.lane.b32.xlu0 %v2872, 79
        %v2878 = vpop.permute.xlu0 %2877
        %2879 = vrot.lane.b32.xlu0 %v2873, 79
        %v2880 = vpop.permute.xlu0 %2879
        %vm2881 = vcmask 646144
        %v2882 = vsel %vm2881, %v2878, %v2880
        %v2884 = vmul.f32 %v2874, %v2882
        %2885 = vst [vmem:[#allocation1] ss:$4 sm:$0xff] %v382
        %v2886 = vld.sshfl [vmem:[#allocation1] sm:$0xff pattern:$0x73625140]
        %2887 = vrot.lane.b32.xlu0 %v2886, 49
        %v2888 = vpop.permute.xlu0 %2887
        %v2890 = vmul.f32 %v2855, %v2888
        %v2891 = vadd.f32 %v2884, %v2890
        %v2892 = vld [vmem:[#allocation6 + $0xa38] sm:$0x7f]
        %v2893 = vld [vmem:[#allocation6 + $0xa40] sm:$0x1]
        %v2894 = vperm.slane %v2893, 0
        %v2896 = vsel %vm422, %v2666, 0
        %v2899 = vsel %vm429, %v2892, 0
        %2901 = vmatpush.msra.mxu0 0.0
        %2902 = vmatpush.msra.mxu0 0.0
        %2903 = vmatpush.msra.mxu0 0.0
        %2904 = vmatpush.msra.mxu0 0.0
        %2905 = vmatpush.msra.mxu0 0.0
        %2906 = vmatpush.msra.mxu0 0.0
        %2907 = vmatpush.msra.mxu0 0.0
        %2908 = vmatpush.msra.mxu0 0.0
        %2909 = vmatpush.msra.mxu0 0.0
        %2910 = vmatpush.msra.mxu0 0.0
        %2911 = vmatpush.msra.mxu0 0.0
        %2912 = vmatpush.msra.mxu0 0.0
        %2913 = vmatpush.msra.mxu0 0.0
        %2914 = vmatpush.msra.mxu0 0.0
        %2915 = vmatpush.msra.mxu0 0.0
        %2916 = vmatpush.msra.mxu0 %v2899
        %2917 = vmatmul.f32.gmra.mxu0 %v2896
        %v2918 = vpop.f32.mrf.mxu0
        %v2919 = vadd.f32 %v2894, %v2918
        %2920 = vdwg.mxu0
        %v2921 = vmax.f32 %v2919, 0.0
        %v2922 = vld [vmem:[#allocation8 + $0x800] sm:$0xff]
        %v2923 = vld [vmem:[#allocation8 + $0x808] sm:$0xff]
        %v2924 = vld [vmem:[#allocation8 + $0x810] sm:$0xff]
        %v2925 = vld [vmem:[#allocation8 + $0x818] sm:$0xff]
        %v2926 = vld [vmem:[#allocation8 + $0x820] sm:$0xff]
        %v2927 = vld [vmem:[#allocation8 + $0x828] sm:$0xff]
        %v2928 = vld [vmem:[#allocation8 + $0x830] sm:$0xff]
        %v2929 = vld [vmem:[#allocation8 + $0x838] sm:$0xff]
        %v2930 = vld [vmem:[#allocation8 + $0x840] sm:$0xff]
        %v2931 = vld [vmem:[#allocation8 + $0x848] sm:$0xff]
        %v2932 = vld [vmem:[#allocation8 + $0x850] sm:$0xff]
        %v2933 = vld [vmem:[#allocation8 + $0x858] sm:$0xff]
        %v2934 = vld [vmem:[#allocation8 + $0x860] sm:$0x1]
        %v2935 = vld [vmem:[#allocation8 + $0x868] sm:$0x1]
        %v2936 = vld [vmem:[#allocation8 + $0x870] sm:$0xff]
        %v2937 = vld [vmem:[#allocation8 + $0x878] sm:$0xff]
        %v2938 = vld [vmem:[#allocation8 + $0x880] sm:$0xff]
        %v2939 = vld [vmem:[#allocation8 + $0x888] sm:$0xff]
        %v2940 = vld [vmem:[#allocation8 + $0x890] sm:$0xff]
        %v2941 = vld [vmem:[#allocation8 + $0x898] sm:$0xff]
        %v2942 = vld [vmem:[#allocation8 + $0x8a0] sm:$0xff]
        %v2943 = vld [vmem:[#allocation8 + $0x8a8] sm:$0xff]
        %v2944 = vld [vmem:[#allocation8 + $0x8b0] sm:$0x7]
        %v2945 = vld [vmem:[#allocation8 + $0x8b8] sm:$0x7]
        %v2947 = vsel %vm2714, %v2921, 0
        %v2950 = vsel %vm1976, %v2944, 0
        %v2953 = vsel %vm1976, %v2945, 0
        %2955 = vmatpush.msra.mxu0 0.0
        %2956 = vmatpush.msra.mxu0 0.0
        %2957 = vmatpush.msra.mxu0 0.0
        %2958 = vmatpush.msra.mxu0 0.0
        %2959 = vmatpush.msra.mxu0 0.0
        %2960 = vmatpush.msra.mxu0 0.0
        %2961 = vmatpush.msra.mxu0 0.0
        %2962 = vmatpush.msra.mxu0 0.0
        %2963 = vmatpush.msra.mxu0 0.0
        %2964 = vmatpush.msra.mxu0 0.0
        %2965 = vmatpush.msra.mxu0 0.0
        %2966 = vmatpush.msra.mxu0 %v2950
        %2967 = vmatpush.msra.mxu0 %v2942
        %2968 = vmatpush.msra.mxu0 %v2940
        %2969 = vmatpush.msra.mxu0 %v2938
        %2970 = vmatpush.msra.mxu0 %v2936
        %2971 = vmatmul.f32.gmra.mxu0 %v2947
        %v2972 = vpop.f32.mrf.mxu0
        %v2973 = vadd.f32 0.0, %v2972
        %2974 = vdwg.mxu0
        %2975 = vmatpush.msra.mxu0 0.0
        %2976 = vmatpush.msra.mxu0 0.0
        %2977 = vmatpush.msra.mxu0 0.0
        %2978 = vmatpush.msra.mxu0 0.0
        %2979 = vmatpush.msra.mxu0 0.0
        %2980 = vmatpush.msra.mxu0 0.0
        %2981 = vmatpush.msra.mxu0 0.0
        %2982 = vmatpush.msra.mxu0 0.0
        %2983 = vmatpush.msra.mxu0 0.0
        %2984 = vmatpush.msra.mxu0 0.0
        %2985 = vmatpush.msra.mxu0 0.0
        %2986 = vmatpush.msra.mxu0 %v2953
        %2987 = vmatpush.msra.mxu0 %v2943
        %2988 = vmatpush.msra.mxu0 %v2941
        %2989 = vmatpush.msra.mxu0 %v2939
        %2990 = vmatpush.msra.mxu0 %v2937
        %2991 = vmatmul.f32.gmra.mxu0 %v2947
        %v2992 = vpop.f32.mrf.mxu0
        %v2993 = vadd.f32 0.0, %v2992
        %2994 = vdwg.mxu0
        %2996 = vrot.lane.b32.xlu0 %v2891, 79
        %v2997 = vpop.permute.xlu0 %2996
        %v2998 = vsel %vm2785, %v2997, 0
        %v3001 = vsel %vm2789, %v2934, 0
        %v3004 = vsel %vm2789, %v2935, 0
        %3006 = vmatpush.msra.mxu0 0.0
        %3007 = vmatpush.msra.mxu0 0.0
        %3008 = vmatpush.msra.mxu0 0.0
        %3009 = vmatpush.msra.mxu0 0.0
        %3010 = vmatpush.msra.mxu0 0.0
        %3011 = vmatpush.msra.mxu0 0.0
        %3012 = vmatpush.msra.mxu0 0.0
        %3013 = vmatpush.msra.mxu0 0.0
        %3014 = vmatpush.msra.mxu0 0.0
        %3015 = vmatpush.msra.mxu0 %v3001
        %3016 = vmatpush.msra.mxu0 %v2932
        %3017 = vmatpush.msra.mxu0 %v2930
        %3018 = vmatpush.msra.mxu0 %v2928
        %3019 = vmatpush.msra.mxu0 %v2926
        %3020 = vmatpush.msra.mxu0 %v2924
        %3021 = vmatpush.msra.mxu0 %v2922
        %3022 = vmatmul.f32.gmra.mxu0 %v2998
        %v3023 = vpop.f32.mrf.mxu0
        %v3024 = vadd.f32 %v2973, %v3023
        %3025 = vdwg.mxu0
        %3026 = vmatpush.msra.mxu0 0.0
        %3027 = vmatpush.msra.mxu0 0.0
        %3028 = vmatpush.msra.mxu0 0.0
        %3029 = vmatpush.msra.mxu0 0.0
        %3030 = vmatpush.msra.mxu0 0.0
        %3031 = vmatpush.msra.mxu0 0.0
        %3032 = vmatpush.msra.mxu0 0.0
        %3033 = vmatpush.msra.mxu0 0.0
        %3034 = vmatpush.msra.mxu0 0.0
        %3035 = vmatpush.msra.mxu0 %v3004
        %3036 = vmatpush.msra.mxu0 %v2933
        %3037 = vmatpush.msra.mxu0 %v2931
        %3038 = vmatpush.msra.mxu0 %v2929
        %3039 = vmatpush.msra.mxu0 %v2927
        %3040 = vmatpush.msra.mxu0 %v2925
        %3041 = vmatpush.msra.mxu0 %v2923
        %3042 = vmatmul.f32.gmra.mxu0 %v2998
        %v3043 = vpop.f32.mrf.mxu0
        %v3044 = vadd.f32 %v2993, %v3043
        %3045 = vdwg.mxu0
        %s3046 = scalar_lea.vmem [#allocation8], 2352
        %v3047 = vld [vmem:[%s3046] ss:$8 sm:$0x3]
        %v3049 = vperm.slane %v3047, 0
        %v3050 = vperm.slane %v3047, 1
        %v3053 = vadd.f32 %v3024, %v3049
        %v3054 = vadd.f32 %v3044, %v3050
        %v3055 = vld [vmem:[#allocation8 + $0x8c0] sm:$0xff]
        %v3056 = vld [vmem:[#allocation8 + $0x8c8] sm:$0xff]
        %v3057 = vld [vmem:[#allocation8 + $0x8d0] sm:$0xff]
        %v3058 = vld [vmem:[#allocation8 + $0x8d8] sm:$0xff]
        %v3059 = vld [vmem:[#allocation8 + $0x8e0] sm:$0xff]
        %v3060 = vld [vmem:[#allocation8 + $0x8e8] sm:$0xff]
        %v3061 = vld [vmem:[#allocation8 + $0x8f0] sm:$0xff]
        %v3062 = vld [vmem:[#allocation8 + $0x8f8] sm:$0xff]
        %v3063 = vld [vmem:[#allocation8 + $0x900] sm:$0xff]
        %v3064 = vld [vmem:[#allocation8 + $0x908] sm:$0xff]
        %v3065 = vld [vmem:[#allocation8 + $0x910] sm:$0xff]
        %v3066 = vld [vmem:[#allocation8 + $0x918] sm:$0xff]
        %v3067 = vld [vmem:[#allocation8 + $0x920] sm:$0x1]
        %v3068 = vld [vmem:[#allocation8 + $0x928] sm:$0x1]
        %s3069 = scalar_lea.vmem [#allocation8], 2368
        %v3070 = vld [vmem:[%s3069] ss:$8 sm:$0x3]
        %v3072 = vperm.slane %v3070, 0
        %v3073 = vperm.slane %v3070, 1
        %3076 = vst [vmem:[#allocation1] ss:$4 sm:$0xff] %v382
        %v3077 = vld.sshfl [vmem:[#allocation1] sm:$0xff pattern:$0x73625140]
        %3078 = vrot.lane.b32.xlu0 %v3077, 79
        %v3079 = vpop.permute.xlu0 %3078
        %v3080 = vsel %vm2785, %v3079, 0
        %v3083 = vsel %vm2789, %v3067, 0
        %v3086 = vsel %vm2789, %v3068, 0
        %3088 = vmatpush.msra.mxu0 0.0
        %3089 = vmatpush.msra.mxu0 0.0
        %3090 = vmatpush.msra.mxu0 0.0
        %3091 = vmatpush.msra.mxu0 0.0
        %3092 = vmatpush.msra.mxu0 0.0
        %3093 = vmatpush.msra.mxu0 0.0
        %3094 = vmatpush.msra.mxu0 0.0
        %3095 = vmatpush.msra.mxu0 0.0
        %3096 = vmatpush.msra.mxu0 0.0
        %3097 = vmatpush.msra.mxu0 %v3083
        %3098 = vmatpush.msra.mxu0 %v3065
        %3099 = vmatpush.msra.mxu0 %v3063
        %3100 = vmatpush.msra.mxu0 %v3061
        %3101 = vmatpush.msra.mxu0 %v3059
        %3102 = vmatpush.msra.mxu0 %v3057
        %3103 = vmatpush.msra.mxu0 %v3055
        %3104 = vmatmul.f32.gmra.mxu0 %v3080
        %v3105 = vpop.f32.mrf.mxu0
        %v3106 = vadd.f32 %v3072, %v3105
        %3107 = vdwg.mxu0
        %3108 = vmatpush.msra.mxu0 0.0
        %3109 = vmatpush.msra.mxu0 0.0
        %3110 = vmatpush.msra.mxu0 0.0
        %3111 = vmatpush.msra.mxu0 0.0
        %3112 = vmatpush.msra.mxu0 0.0
        %3113 = vmatpush.msra.mxu0 0.0
        %3114 = vmatpush.msra.mxu0 0.0
        %3115 = vmatpush.msra.mxu0 0.0
        %3116 = vmatpush.msra.mxu0 0.0
        %3117 = vmatpush.msra.mxu0 %v3086
        %3118 = vmatpush.msra.mxu0 %v3066
        %3119 = vmatpush.msra.mxu0 %v3064
        %3120 = vmatpush.msra.mxu0 %v3062
        %3121 = vmatpush.msra.mxu0 %v3060
        %3122 = vmatpush.msra.mxu0 %v3058
        %3123 = vmatpush.msra.mxu0 %v3056
        %3124 = vmatmul.f32.gmra.mxu0 %v3080
        %v3125 = vpop.f32.mrf.mxu0
        %v3126 = vadd.f32 %v3073, %v3125
        %3127 = vdwg.mxu0
        %v3128 = vadd.f32 %v3053, %v3106
        %v3129 = vxor.u32 %v3128, 2147483648
        %v3130 = vmul.f32 %v3129, 1.442695
        %v3131 = vpow.pop %v3130
        %v3132 = vadd.f32 %v3131, 1.0
        %v3133 = vrcp.pop %v3132
        %v3134 = vmul.f32 %v3132, %v3133
        %v3135 = vsub.f32 1.0, %v3134
        %v3136 = vmul.f32 %v3133, %v3135
        %v3137 = vadd.f32 %v3133, %v3136
        %vm3138 = vweird.f32 %v3132
        %vm3139 = vweird.f32 %v3133
        %vm3140 = vmor %vm3138, %vm3139
        %v3141 = vsel %vm3140, %v3133, %v3137
        %v3142 = vand.u32 2147483647, %v3132
        %vm3143 = vcmp.eq.f32.partialorder %v3142, 8.507059e+37
        %v3144 = vand.u32 %v3132, 2147483648
        %v3145 = vor.u32 1.1754944e-38, %v3144
        %v3146 = vsel %vm3143, %v3145, %v3141
        %v3147 = vmul.f32 1.0, %v3146
        %3150 = vrot.lane.b32.xlu0 %v3106, 30
        %v3151 = vpop.permute.xlu0 %3150
        %3152 = vrot.lane.b32.xlu0 %v3126, 30
        %v3153 = vpop.permute.xlu0 %3152
        %v3154 = vsel %vm2862, %v3151, %v3153
        %v3156 = vmul.f32 %v3147, %v3154
        %3158 = vrot.lane.b32.xlu0 %v3156, 98
        %v3159 = vpop.permute.xlu0 %3158
        %v3161 = vadd.f32 %v3053, %v3159
        %v3162 = vadd.f32 %v3054, %v3159
        %v3163 = vtanh.pop %v3161
        %v3164 = vtanh.pop %v3162
        %v3165 = vsub.f32 1.0, %v3147
        %3168 = vrot.lane.b32.xlu0 %v3163, 79
        %v3169 = vpop.permute.xlu0 %3168
        %3170 = vrot.lane.b32.xlu0 %v3164, 79
        %v3171 = vpop.permute.xlu0 %3170
        %v3172 = vsel %vm2881, %v3169, %v3171
        %v3174 = vmul.f32 %v3165, %v3172
        %v3175 = vmul.f32 %v3147, %v382
        %v3176 = vadd.f32 %v3174, %v3175
        %v3177 = vld [vmem:[#allocation6 + $0x828] sm:$0xff]
        %v3178 = vld [vmem:[#allocation6 + $0x830] sm:$0xff]
        %v3179 = vld [vmem:[#allocation6 + $0x838] sm:$0xff]
        %v3180 = vld [vmem:[#allocation6 + $0x840] sm:$0xff]
        %v3181 = vld [vmem:[#allocation6 + $0x848] sm:$0xff]
        %v3182 = vld [vmem:[#allocation6 + $0x850] sm:$0xff]
        %v3183 = vld [vmem:[#allocation6 + $0x858] sm:$0x1]
        %v3184 = vld [vmem:[#allocation6 + $0x860] sm:$0x1]
        %v3185 = vperm.slane %v3184, 0
        %3187 = vrot.lane.b32.xlu0 %v3176, 79
        %v3188 = vpop.permute.xlu0 %3187
        %v3189 = vsel %vm2785, %v3188, 0
        %v3192 = vsel %vm2789, %v3183, 0
        %3194 = vmatpush.msra.mxu0 0.0
        %3195 = vmatpush.msra.mxu0 0.0
        %3196 = vmatpush.msra.mxu0 0.0
        %3197 = vmatpush.msra.mxu0 0.0
        %3198 = vmatpush.msra.mxu0 0.0
        %3199 = vmatpush.msra.mxu0 0.0
        %3200 = vmatpush.msra.mxu0 0.0
        %3201 = vmatpush.msra.mxu0 0.0
        %3202 = vmatpush.msra.mxu0 0.0
        %3203 = vmatpush.msra.mxu0 %v3192
        %3204 = vmatpush.msra.mxu0 %v3182
        %3205 = vmatpush.msra.mxu0 %v3181
        %3206 = vmatpush.msra.mxu0 %v3180
        %3207 = vmatpush.msra.mxu0 %v3179
        %3208 = vmatpush.msra.mxu0 %v3178
        %3209 = vmatpush.msra.mxu0 %v3177
        %3210 = vmatmul.f32.gmra.mxu0 %v3189
        %v3211 = vpop.f32.mrf.mxu0
        %v3212 = vadd.f32 %v3185, %v3211
        %3213 = vdwg.mxu0
        %v3214 = vmax.f32 %v3212, 0.0
        %v3215 = vld [vmem:[#allocation6 + $0xa48] sm:$0x7f]
        %v3216 = vld [vmem:[#allocation6 + $0xa50] sm:$0x7f]
        %v3218 = vsel %vm422, %v2597, 0
        %v3221 = vsel %vm429, %v3216, 0
        %3223 = vmatpush.msra.mxu0 0.0
        %3224 = vmatpush.msra.mxu0 0.0
        %3225 = vmatpush.msra.mxu0 0.0
        %3226 = vmatpush.msra.mxu0 0.0
        %3227 = vmatpush.msra.mxu0 0.0
        %3228 = vmatpush.msra.mxu0 0.0
        %3229 = vmatpush.msra.mxu0 0.0
        %3230 = vmatpush.msra.mxu0 0.0
        %3231 = vmatpush.msra.mxu0 0.0
        %3232 = vmatpush.msra.mxu0 0.0
        %3233 = vmatpush.msra.mxu0 0.0
        %3234 = vmatpush.msra.mxu0 0.0
        %3235 = vmatpush.msra.mxu0 0.0
        %3236 = vmatpush.msra.mxu0 0.0
        %3237 = vmatpush.msra.mxu0 0.0
        %3238 = vmatpush.msra.mxu0 %v3221
        %3239 = vmatmul.f32.gmra.mxu0 %v3218
        %v3240 = vpop.f32.mrf.mxu0
        %v3241 = vadd.f32 0.0, %v3240
        %3242 = vdwg.mxu0
        %v3244 = vsel %vm422, %v2564, 0
        %v3247 = vsel %vm429, %v3215, 0
        %3249 = vmatpush.msra.mxu0 0.0
        %3250 = vmatpush.msra.mxu0 0.0
        %3251 = vmatpush.msra.mxu0 0.0
        %3252 = vmatpush.msra.mxu0 0.0
        %3253 = vmatpush.msra.mxu0 0.0
        %3254 = vmatpush.msra.mxu0 0.0
        %3255 = vmatpush.msra.mxu0 0.0
        %3256 = vmatpush.msra.mxu0 0.0
        %3257 = vmatpush.msra.mxu0 0.0
        %3258 = vmatpush.msra.mxu0 0.0
        %3259 = vmatpush.msra.mxu0 0.0
        %3260 = vmatpush.msra.mxu0 0.0
        %3261 = vmatpush.msra.mxu0 0.0
        %3262 = vmatpush.msra.mxu0 0.0
        %3263 = vmatpush.msra.mxu0 0.0
        %3264 = vmatpush.msra.mxu0 %v3247
        %3265 = vmatmul.f32.gmra.mxu0 %v3244
        %v3266 = vpop.f32.mrf.mxu0
        %v3267 = vadd.f32 %v3241, %v3266
        %3268 = vdwg.mxu0
        %v3269 = vld [vmem:[#allocation6 + $0xa58] sm:$0x1]
        %v3270 = vperm.slane %v3269, 0
        %v3271 = vadd.f32 %v3267, %v3270
        %v3272 = vmax.f32 %v3271, 0.0
        %v3273 = vld [vmem:[#allocation8 + $0x950] sm:$0xff]
        %v3274 = vld [vmem:[#allocation8 + $0x958] sm:$0xff]
        %v3275 = vld [vmem:[#allocation8 + $0x960] sm:$0xff]
        %v3276 = vld [vmem:[#allocation8 + $0x968] sm:$0xff]
        %v3277 = vld [vmem:[#allocation8 + $0x970] sm:$0xff]
        %v3278 = vld [vmem:[#allocation8 + $0x978] sm:$0xff]
        %v3279 = vld [vmem:[#allocation8 + $0x980] sm:$0xff]
        %v3280 = vld [vmem:[#allocation8 + $0x988] sm:$0xff]
        %v3281 = vld [vmem:[#allocation8 + $0x990] sm:$0xff]
        %v3282 = vld [vmem:[#allocation8 + $0x998] sm:$0xff]
        %v3283 = vld [vmem:[#allocation8 + $0x9a0] sm:$0xff]
        %v3284 = vld [vmem:[#allocation8 + $0x9a8] sm:$0xff]
        %v3285 = vld [vmem:[#allocation8 + $0x9b0] sm:$0x1]
        %v3286 = vld [vmem:[#allocation8 + $0x9b8] sm:$0x1]
        %v3287 = vld [vmem:[#allocation8 + $0x9c0] sm:$0xff]
        %v3288 = vld [vmem:[#allocation8 + $0x9c8] sm:$0xff]
        %v3289 = vld [vmem:[#allocation8 + $0x9d0] sm:$0xff]
        %v3290 = vld [vmem:[#allocation8 + $0x9d8] sm:$0xff]
        %v3291 = vld [vmem:[#allocation8 + $0x9e0] sm:$0xff]
        %v3292 = vld [vmem:[#allocation8 + $0x9e8] sm:$0xff]
        %v3293 = vld [vmem:[#allocation8 + $0x9f0] sm:$0xff]
        %v3294 = vld [vmem:[#allocation8 + $0x9f8] sm:$0xff]
        %v3295 = vld [vmem:[#allocation8 + $0xa00] sm:$0xff]
        %v3296 = vld [vmem:[#allocation8 + $0xa08] sm:$0xff]
        %v3297 = vld [vmem:[#allocation8 + $0xa10] sm:$0xff]
        %v3298 = vld [vmem:[#allocation8 + $0xa18] sm:$0xff]
        %v3299 = vld [vmem:[#allocation8 + $0xa20] sm:$0xff]
        %v3300 = vld [vmem:[#allocation8 + $0xa28] sm:$0xff]
        %v3301 = vld [vmem:[#allocation8 + $0xa30] sm:$0xff]
        %v3302 = vld [vmem:[#allocation8 + $0xa38] sm:$0xff]
        %v3303 = vld [vmem:[#allocation8 + $0xa40] sm:$0x3f]
        %v3304 = vld [vmem:[#allocation8 + $0xa48] sm:$0x3f]
        %vm3305 = vcmask 572416
        %v3307 = vsel %vm3305, %v3272, 0
        %vm3309 = vcmask 1045504
        %v3311 = vsel %vm3309, %v3303, 0
        %v3314 = vsel %vm3309, %v3304, 0
        %3316 = vmatpush.msra.mxu0 0.0
        %3317 = vmatpush.msra.mxu0 0.0
        %3318 = vmatpush.msra.mxu0 0.0
        %3319 = vmatpush.msra.mxu0 0.0
        %3320 = vmatpush.msra.mxu0 0.0
        %3321 = vmatpush.msra.mxu0 0.0
        %3322 = vmatpush.msra.mxu0 0.0
        %3323 = vmatpush.msra.mxu0 %v3311
        %3324 = vmatpush.msra.mxu0 %v3301
        %3325 = vmatpush.msra.mxu0 %v3299
        %3326 = vmatpush.msra.mxu0 %v3297
        %3327 = vmatpush.msra.mxu0 %v3295
        %3328 = vmatpush.msra.mxu0 %v3293
        %3329 = vmatpush.msra.mxu0 %v3291
        %3330 = vmatpush.msra.mxu0 %v3289
        %3331 = vmatpush.msra.mxu0 %v3287
        %3332 = vmatmul.f32.gmra.mxu0 %v3307
        %v3333 = vpop.f32.mrf.mxu0
        %v3334 = vadd.f32 0.0, %v3333
        %3335 = vdwg.mxu0
        %3336 = vmatpush.msra.mxu0 0.0
        %3337 = vmatpush.msra.mxu0 0.0
        %3338 = vmatpush.msra.mxu0 0.0
        %3339 = vmatpush.msra.mxu0 0.0
        %3340 = vmatpush.msra.mxu0 0.0
        %3341 = vmatpush.msra.mxu0 0.0
        %3342 = vmatpush.msra.mxu0 0.0
        %3343 = vmatpush.msra.mxu0 %v3314
        %3344 = vmatpush.msra.mxu0 %v3302
        %3345 = vmatpush.msra.mxu0 %v3300
        %3346 = vmatpush.msra.mxu0 %v3298
        %3347 = vmatpush.msra.mxu0 %v3296
        %3348 = vmatpush.msra.mxu0 %v3294
        %3349 = vmatpush.msra.mxu0 %v3292
        %3350 = vmatpush.msra.mxu0 %v3290
        %3351 = vmatpush.msra.mxu0 %v3288
        %3352 = vmatmul.f32.gmra.mxu0 %v3307
        %v3353 = vpop.f32.mrf.mxu0
        %v3354 = vadd.f32 0.0, %v3353
        %3355 = vdwg.mxu0
        %v3357 = vsel %vm2785, %v3214, 0
        %v3360 = vsel %vm2789, %v3285, 0
        %v3363 = vsel %vm2789, %v3286, 0
        %3365 = vmatpush.msra.mxu0 0.0
        %3366 = vmatpush.msra.mxu0 0.0
        %3367 = vmatpush.msra.mxu0 0.0
        %3368 = vmatpush.msra.mxu0 0.0
        %3369 = vmatpush.msra.mxu0 0.0
        %3370 = vmatpush.msra.mxu0 0.0
        %3371 = vmatpush.msra.mxu0 0.0
        %3372 = vmatpush.msra.mxu0 0.0
        %3373 = vmatpush.msra.mxu0 0.0
        %3374 = vmatpush.msra.mxu0 %v3360
        %3375 = vmatpush.msra.mxu0 %v3283
        %3376 = vmatpush.msra.mxu0 %v3281
        %3377 = vmatpush.msra.mxu0 %v3279
        %3378 = vmatpush.msra.mxu0 %v3277
        %3379 = vmatpush.msra.mxu0 %v3275
        %3380 = vmatpush.msra.mxu0 %v3273
        %3381 = vmatmul.f32.gmra.mxu0 %v3357
        %v3382 = vpop.f32.mrf.mxu0
        %v3383 = vadd.f32 %v3334, %v3382
        %3384 = vdwg.mxu0
        %3385 = vmatpush.msra.mxu0 0.0
        %3386 = vmatpush.msra.mxu0 0.0
        %3387 = vmatpush.msra.mxu0 0.0
        %3388 = vmatpush.msra.mxu0 0.0
        %3389 = vmatpush.msra.mxu0 0.0
        %3390 = vmatpush.msra.mxu0 0.0
        %3391 = vmatpush.msra.mxu0 0.0
        %3392 = vmatpush.msra.mxu0 0.0
        %3393 = vmatpush.msra.mxu0 0.0
        %3394 = vmatpush.msra.mxu0 %v3363
        %3395 = vmatpush.msra.mxu0 %v3284
        %3396 = vmatpush.msra.mxu0 %v3282
        %3397 = vmatpush.msra.mxu0 %v3280
        %3398 = vmatpush.msra.mxu0 %v3278
        %3399 = vmatpush.msra.mxu0 %v3276
        %3400 = vmatpush.msra.mxu0 %v3274
        %3401 = vmatmul.f32.gmra.mxu0 %v3357
        %v3402 = vpop.f32.mrf.mxu0
        %v3403 = vadd.f32 %v3354, %v3402
        %3404 = vdwg.mxu0
        %s3405 = scalar_lea.vmem [#allocation8], 2752
        %v3406 = vld [vmem:[%s3405] ss:$8 sm:$0x3]
        %v3408 = vperm.slane %v3406, 0
        %v3409 = vperm.slane %v3406, 1
        %v3412 = vadd.f32 %v3383, %v3408
        %v3413 = vadd.f32 %v3403, %v3409
        %v3414 = vld [vmem:[#allocation8 + $0xa50] sm:$0xff]
        %v3415 = vld [vmem:[#allocation8 + $0xa58] sm:$0xff]
        %v3416 = vld [vmem:[#allocation8 + $0xa60] sm:$0xff]
        %v3417 = vld [vmem:[#allocation8 + $0xa68] sm:$0xff]
        %v3418 = vld [vmem:[#allocation8 + $0xa70] sm:$0xff]
        %v3419 = vld [vmem:[#allocation8 + $0xa78] sm:$0xff]
        %v3420 = vld [vmem:[#allocation8 + $0xa80] sm:$0xff]
        %v3421 = vld [vmem:[#allocation8 + $0xa88] sm:$0xff]
        %v3422 = vld [vmem:[#allocation8 + $0xa90] sm:$0xff]
        %v3423 = vld [vmem:[#allocation8 + $0xa98] sm:$0xff]
        %v3424 = vld [vmem:[#allocation8 + $0xaa0] sm:$0xff]
        %v3425 = vld [vmem:[#allocation8 + $0xaa8] sm:$0xff]
        %v3426 = vld [vmem:[#allocation8 + $0xab0] sm:$0x1]
        %v3427 = vld [vmem:[#allocation8 + $0xab8] sm:$0x1]
        %s3428 = scalar_lea.vmem [#allocation8], 2768
        %v3429 = vld [vmem:[%s3428] ss:$8 sm:$0x3]
        %v3431 = vperm.slane %v3429, 0
        %v3432 = vperm.slane %v3429, 1
        %3435 = vst [vmem:[#allocation1] ss:$4 sm:$0xff] %v382
        %v3436 = vld.sshfl [vmem:[#allocation1] sm:$0xff pattern:$0x73625140]
        %v3437 = vld.sshfl [vmem:[#allocation1 + $0x8] sm:$0xff pattern:$0x73625140]
        %3438 = vrot.lane.b32.xlu0 %v3436, 30
        %v3439 = vpop.permute.xlu0 %3438
        %3440 = vrot.lane.b32.xlu0 %v3437, 30
        %v3441 = vpop.permute.xlu0 %3440
        %v3442 = vsel %vm2862, %v3439, %v3441
        %v3443 = vsel %vm2785, %v3442, 0
        %v3446 = vsel %vm2789, %v3426, 0
        %v3449 = vsel %vm2789, %v3427, 0
        %3451 = vmatpush.msra.mxu0 0.0
        %3452 = vmatpush.msra.mxu0 0.0
        %3453 = vmatpush.msra.mxu0 0.0
        %3454 = vmatpush.msra.mxu0 0.0
        %3455 = vmatpush.msra.mxu0 0.0
        %3456 = vmatpush.msra.mxu0 0.0
        %3457 = vmatpush.msra.mxu0 0.0
        %3458 = vmatpush.msra.mxu0 0.0
        %3459 = vmatpush.msra.mxu0 0.0
        %3460 = vmatpush.msra.mxu0 %v3446
        %3461 = vmatpush.msra.mxu0 %v3424
        %3462 = vmatpush.msra.mxu0 %v3422
        %3463 = vmatpush.msra.mxu0 %v3420
        %3464 = vmatpush.msra.mxu0 %v3418
        %3465 = vmatpush.msra.mxu0 %v3416
        %3466 = vmatpush.msra.mxu0 %v3414
        %3467 = vmatmul.f32.gmra.mxu0 %v3443
        %v3468 = vpop.f32.mrf.mxu0
        %v3469 = vadd.f32 %v3431, %v3468
        %3470 = vdwg.mxu0
        %3471 = vmatpush.msra.mxu0 0.0
        %3472 = vmatpush.msra.mxu0 0.0
        %3473 = vmatpush.msra.mxu0 0.0
        %3474 = vmatpush.msra.mxu0 0.0
        %3475 = vmatpush.msra.mxu0 0.0
        %3476 = vmatpush.msra.mxu0 0.0
        %3477 = vmatpush.msra.mxu0 0.0
        %3478 = vmatpush.msra.mxu0 0.0
        %3479 = vmatpush.msra.mxu0 0.0
        %3480 = vmatpush.msra.mxu0 %v3449
        %3481 = vmatpush.msra.mxu0 %v3425
        %3482 = vmatpush.msra.mxu0 %v3423
        %3483 = vmatpush.msra.mxu0 %v3421
        %3484 = vmatpush.msra.mxu0 %v3419
        %3485 = vmatpush.msra.mxu0 %v3417
        %3486 = vmatpush.msra.mxu0 %v3415
        %3487 = vmatmul.f32.gmra.mxu0 %v3443
        %v3488 = vpop.f32.mrf.mxu0
        %v3489 = vadd.f32 %v3432, %v3488
        %3490 = vdwg.mxu0
        %v3491 = vadd.f32 %v3412, %v3469
        %v3492 = vxor.u32 %v3491, 2147483648
        %v3493 = vmul.f32 %v3492, 1.442695
        %v3494 = vpow.pop %v3493
        %v3495 = vadd.f32 %v3494, 1.0
        %v3496 = vrcp.pop %v3495
        %v3497 = vmul.f32 %v3495, %v3496
        %v3498 = vsub.f32 1.0, %v3497
        %v3499 = vmul.f32 %v3496, %v3498
        %v3500 = vadd.f32 %v3496, %v3499
        %vm3501 = vweird.f32 %v3495
        %vm3502 = vweird.f32 %v3496
        %vm3503 = vmor %vm3501, %vm3502
        %v3504 = vsel %vm3503, %v3496, %v3500
        %v3505 = vand.u32 2147483647, %v3495
        %vm3506 = vcmp.eq.f32.partialorder %v3505, 8.507059e+37
        %v3507 = vand.u32 %v3495, 2147483648
        %v3508 = vor.u32 1.1754944e-38, %v3507
        %v3509 = vsel %vm3506, %v3508, %v3504
        %v3510 = vmul.f32 1.0, %v3509
        %3513 = vrot.lane.b32.xlu0 %v3469, 30
        %v3514 = vpop.permute.xlu0 %3513
        %3515 = vrot.lane.b32.xlu0 %v3489, 30
        %v3516 = vpop.permute.xlu0 %3515
        %v3517 = vsel %vm2862, %v3514, %v3516
        %v3519 = vmul.f32 %v3510, %v3517
        %3521 = vrot.lane.b32.xlu0 %v3519, 98
        %v3522 = vpop.permute.xlu0 %3521
        %v3524 = vadd.f32 %v3412, %v3522
        %v3525 = vadd.f32 %v3413, %v3522
        %v3526 = vtanh.pop %v3524
        %v3527 = vtanh.pop %v3525
        %v3528 = vsub.f32 1.0, %v3510
        %3531 = vrot.lane.b32.xlu0 %v3526, 79
        %v3532 = vpop.permute.xlu0 %3531
        %3533 = vrot.lane.b32.xlu0 %v3527, 79
        %v3534 = vpop.permute.xlu0 %3533
        %v3535 = vsel %vm2881, %v3532, %v3534
        %v3537 = vmul.f32 %v3528, %v3535
        %3538 = vst [vmem:[#allocation1] ss:$4 sm:$0xff] %v382
        %v3539 = vld.sshfl [vmem:[#allocation1] sm:$0xff pattern:$0x73625140]
        %v3540 = vld.sshfl [vmem:[#allocation1 + $0x8] sm:$0xff pattern:$0x73625140]
        %3541 = vrot.lane.b32.xlu0 %v3539, 79
        %v3542 = vpop.permute.xlu0 %3541
        %3543 = vrot.lane.b32.xlu0 %v3540, 79
        %v3544 = vpop.permute.xlu0 %3543
        %v3545 = vsel %vm2881, %v3542, %v3544
        %v3547 = vmul.f32 %v3510, %v3545
        %v3548 = vadd.f32 %v3537, %v3547
        %v3549 = vld [vmem:[#allocation8 + $0xae0] sm:$0xff]
        %v3550 = vld [vmem:[#allocation8 + $0xae8] sm:$0xff]
        %v3551 = vld [vmem:[#allocation8 + $0xaf0] sm:$0xff]
        %v3552 = vld [vmem:[#allocation8 + $0xaf8] sm:$0xff]
        %v3553 = vld [vmem:[#allocation8 + $0xb00] sm:$0xff]
        %v3554 = vld [vmem:[#allocation8 + $0xb08] sm:$0xff]
        %v3555 = vld [vmem:[#allocation8 + $0xb10] sm:$0xff]
        %v3556 = vld [vmem:[#allocation8 + $0xb18] sm:$0xff]
        %v3557 = vld [vmem:[#allocation8 + $0xb20] sm:$0xff]
        %v3558 = vld [vmem:[#allocation8 + $0xb28] sm:$0xff]
        %v3559 = vld [vmem:[#allocation8 + $0xb30] sm:$0xff]
        %v3560 = vld [vmem:[#allocation8 + $0xb38] sm:$0xff]
        %v3561 = vld [vmem:[#allocation8 + $0xb40] sm:$0x1]
        %v3562 = vld [vmem:[#allocation8 + $0xb48] sm:$0x1]
        %v3563 = vld [vmem:[#allocation8 + $0xb50] sm:$0xff]
        %v3564 = vld [vmem:[#allocation8 + $0xb58] sm:$0xff]
        %v3565 = vld [vmem:[#allocation8 + $0xb60] sm:$0xff]
        %v3566 = vld [vmem:[#allocation8 + $0xb68] sm:$0xff]
        %v3567 = vld [vmem:[#allocation8 + $0xb70] sm:$0xff]
        %v3568 = vld [vmem:[#allocation8 + $0xb78] sm:$0xff]
        %v3569 = vld [vmem:[#allocation8 + $0xb80] sm:$0xff]
        %v3570 = vld [vmem:[#allocation8 + $0xb88] sm:$0xff]
        %v3571 = vld [vmem:[#allocation8 + $0xb90] sm:$0xff]
        %v3572 = vld [vmem:[#allocation8 + $0xb98] sm:$0xff]
        %v3573 = vld [vmem:[#allocation8 + $0xba0] sm:$0xff]
        %v3574 = vld [vmem:[#allocation8 + $0xba8] sm:$0xff]
        %v3575 = vld [vmem:[#allocation8 + $0xbb0] sm:$0x1]
        %v3576 = vld [vmem:[#allocation8 + $0xbb8] sm:$0x1]
        %3578 = vrot.lane.b32.xlu0 %v3548, 79
        %v3579 = vpop.permute.xlu0 %3578
        %v3580 = vsel %vm2785, %v3579, 0
        %v3583 = vsel %vm2789, %v3575, 0
        %v3586 = vsel %vm2789, %v3576, 0
        %3588 = vmatpush.msra.mxu0 0.0
        %3589 = vmatpush.msra.mxu0 0.0
        %3590 = vmatpush.msra.mxu0 0.0
        %3591 = vmatpush.msra.mxu0 0.0
        %3592 = vmatpush.msra.mxu0 0.0
        %3593 = vmatpush.msra.mxu0 0.0
        %3594 = vmatpush.msra.mxu0 0.0
        %3595 = vmatpush.msra.mxu0 0.0
        %3596 = vmatpush.msra.mxu0 0.0
        %3597 = vmatpush.msra.mxu0 %v3583
        %3598 = vmatpush.msra.mxu0 %v3573
        %3599 = vmatpush.msra.mxu0 %v3571
        %3600 = vmatpush.msra.mxu0 %v3569
        %3601 = vmatpush.msra.mxu0 %v3567
        %3602 = vmatpush.msra.mxu0 %v3565
        %3603 = vmatpush.msra.mxu0 %v3563
        %3604 = vmatmul.f32.gmra.mxu0 %v3580
        %v3605 = vpop.f32.mrf.mxu0
        %v3606 = vadd.f32 0.0, %v3605
        %3607 = vdwg.mxu0
        %3608 = vmatpush.msra.mxu0 0.0
        %3609 = vmatpush.msra.mxu0 0.0
        %3610 = vmatpush.msra.mxu0 0.0
        %3611 = vmatpush.msra.mxu0 0.0
        %3612 = vmatpush.msra.mxu0 0.0
        %3613 = vmatpush.msra.mxu0 0.0
        %3614 = vmatpush.msra.mxu0 0.0
        %3615 = vmatpush.msra.mxu0 0.0
        %3616 = vmatpush.msra.mxu0 0.0
        %3617 = vmatpush.msra.mxu0 %v3586
        %3618 = vmatpush.msra.mxu0 %v3574
        %3619 = vmatpush.msra.mxu0 %v3572
        %3620 = vmatpush.msra.mxu0 %v3570
        %3621 = vmatpush.msra.mxu0 %v3568
        %3622 = vmatpush.msra.mxu0 %v3566
        %3623 = vmatpush.msra.mxu0 %v3564
        %3624 = vmatmul.f32.gmra.mxu0 %v3580
        %v3625 = vpop.f32.mrf.mxu0
        %v3626 = vadd.f32 0.0, %v3625
        %3627 = vdwg.mxu0
        %v3629 = vsel %vm2789, %v3561, 0
        %v3632 = vsel %vm2789, %v3562, 0
        %3634 = vmatpush.msra.mxu0 0.0
        %3635 = vmatpush.msra.mxu0 0.0
        %3636 = vmatpush.msra.mxu0 0.0
        %3637 = vmatpush.msra.mxu0 0.0
        %3638 = vmatpush.msra.mxu0 0.0
        %3639 = vmatpush.msra.mxu0 0.0
        %3640 = vmatpush.msra.mxu0 0.0
        %3641 = vmatpush.msra.mxu0 0.0
        %3642 = vmatpush.msra.mxu0 0.0
        %3643 = vmatpush.msra.mxu0 %v3629
        %3644 = vmatpush.msra.mxu0 %v3559
        %3645 = vmatpush.msra.mxu0 %v3557
        %3646 = vmatpush.msra.mxu0 %v3555
        %3647 = vmatpush.msra.mxu0 %v3553
        %3648 = vmatpush.msra.mxu0 %v3551
        %3649 = vmatpush.msra.mxu0 %v3549
        %3650 = vmatmul.f32.gmra.mxu0 %v3189
        %v3651 = vpop.f32.mrf.mxu0
        %v3652 = vadd.f32 %v3606, %v3651
        %3653 = vdwg.mxu0
        %3654 = vmatpush.msra.mxu0 0.0
        %3655 = vmatpush.msra.mxu0 0.0
        %3656 = vmatpush.msra.mxu0 0.0
        %3657 = vmatpush.msra.mxu0 0.0
        %3658 = vmatpush.msra.mxu0 0.0
        %3659 = vmatpush.msra.mxu0 0.0
        %3660 = vmatpush.msra.mxu0 0.0
        %3661 = vmatpush.msra.mxu0 0.0
        %3662 = vmatpush.msra.mxu0 0.0
        %3663 = vmatpush.msra.mxu0 %v3632
        %3664 = vmatpush.msra.mxu0 %v3560
        %3665 = vmatpush.msra.mxu0 %v3558
        %3666 = vmatpush.msra.mxu0 %v3556
        %3667 = vmatpush.msra.mxu0 %v3554
        %3668 = vmatpush.msra.mxu0 %v3552
        %3669 = vmatpush.msra.mxu0 %v3550
        %3670 = vmatmul.f32.gmra.mxu0 %v3189
        %v3671 = vpop.f32.mrf.mxu0
        %v3672 = vadd.f32 %v3626, %v3671
        %3673 = vdwg.mxu0
        %s3674 = scalar_lea.vmem [#allocation8], 3008
        %v3675 = vld [vmem:[%s3674] ss:$8 sm:$0x3]
        %v3677 = vperm.slane %v3675, 0
        %v3678 = vperm.slane %v3675, 1
        %v3681 = vadd.f32 %v3652, %v3677
        %v3682 = vadd.f32 %v3672, %v3678
        %v3683 = vmax.f32 %v3681, 0.0
        %v3684 = vmax.f32 %v3682, 0.0
        %v3685 = vld [vmem:[#allocation6 + $0x868] sm:$0xff]
        %v3686 = vld [vmem:[#allocation6 + $0x870] sm:$0xff]
        %v3687 = vld [vmem:[#allocation6 + $0x878] sm:$0xff]
        %v3688 = vld [vmem:[#allocation6 + $0x880] sm:$0xff]
        %v3689 = vld [vmem:[#allocation6 + $0x888] sm:$0xff]
        %v3690 = vld [vmem:[#allocation6 + $0x890] sm:$0xff]
        %v3691 = vld [vmem:[#allocation6 + $0x898] sm:$0xff]
        %v3692 = vld [vmem:[#allocation6 + $0x8a0] sm:$0xff]
        %v3693 = vld [vmem:[#allocation6 + $0x8a8] sm:$0xff]
        %v3694 = vld [vmem:[#allocation6 + $0x8b0] sm:$0xff]
        %v3695 = vld [vmem:[#allocation6 + $0x8b8] sm:$0xff]
        %v3696 = vld [vmem:[#allocation6 + $0x8c0] sm:$0xff]
        %v3697 = vld [vmem:[#allocation6 + $0x8c8] sm:$0xff]
        %v3698 = vld [vmem:[#allocation6 + $0x8d0] sm:$0xff]
        %v3699 = vld [vmem:[#allocation6 + $0x8d8] sm:$0xff]
        %v3700 = vld [vmem:[#allocation6 + $0x8e0] sm:$0xff]
        %v3701 = vld [vmem:[#allocation6 + $0x8e8] sm:$0xff]
        %v3702 = vld [vmem:[#allocation6 + $0x8f0] sm:$0xff]
        %v3703 = vld [vmem:[#allocation6 + $0x8f8] sm:$0xff]
        %v3704 = vld [vmem:[#allocation6 + $0x900] sm:$0xff]
        %v3705 = vld [vmem:[#allocation6 + $0x908] sm:$0xff]
        %v3706 = vld [vmem:[#allocation6 + $0x910] sm:$0xff]
        %v3707 = vld [vmem:[#allocation6 + $0x918] sm:$0xff]
        %v3708 = vld [vmem:[#allocation6 + $0x920] sm:$0xff]
        %v3709 = vld [vmem:[#allocation6 + $0x928] sm:$0xf]
        %v3710 = vld [vmem:[#allocation6 + $0x930] sm:$0x1]
        %v3711 = vperm.slane %v3710, 0
        %vm3712 = vcmask 556032
        %v3714 = vsel %vm3712, %v3684, 0
        %vm3716 = vcmask 1043456
        %v3718 = vsel %vm3716, %v3709, 0
        %3720 = vmatpush.msra.mxu0 %v3700
        %3721 = vmatpush.msra.mxu0 %v3699
        %3722 = vmatpush.msra.mxu0 %v3698
        %3723 = vmatpush.msra.mxu0 %v3697
        %3724 = vmatpush.msra.mxu0 %v3696
        %3725 = vmatpush.msra.mxu0 %v3695
        %3726 = vmatpush.msra.mxu0 %v3694
        %3727 = vmatpush.msra.mxu0 %v3693
        %3728 = vmatpush.msra.mxu0 %v3692
        %3729 = vmatpush.msra.mxu0 %v3691
        %3730 = vmatpush.msra.mxu0 %v3690
        %3731 = vmatpush.msra.mxu0 %v3689
        %3732 = vmatpush.msra.mxu0 %v3688
        %3733 = vmatpush.msra.mxu0 %v3687
        %3734 = vmatpush.msra.mxu0 %v3686
        %3735 = vmatpush.msra.mxu0 %v3685
        %3736 = vmatmul.f32.gmra.mxu0 %v3683
        %v3737 = vpop.f32.mrf.mxu0
        %v3738 = vadd.f32 %v3711, %v3737
        %3739 = vdwg.mxu0
        %3740 = vmatpush.msra.mxu0 0.0
        %3741 = vmatpush.msra.mxu0 0.0
        %3742 = vmatpush.msra.mxu0 0.0
        %3743 = vmatpush.msra.mxu0 0.0
        %3744 = vmatpush.msra.mxu0 0.0
        %3745 = vmatpush.msra.mxu0 0.0
        %3746 = vmatpush.msra.mxu0 0.0
        %3747 = vmatpush.msra.mxu0 %v3718
        %3748 = vmatpush.msra.mxu0 %v3708
        %3749 = vmatpush.msra.mxu0 %v3707
        %3750 = vmatpush.msra.mxu0 %v3706
        %3751 = vmatpush.msra.mxu0 %v3705
        %3752 = vmatpush.msra.mxu0 %v3704
        %3753 = vmatpush.msra.mxu0 %v3703
        %3754 = vmatpush.msra.mxu0 %v3702
        %3755 = vmatpush.msra.mxu0 %v3701
        %3756 = vmatmul.f32.gmra.mxu0 %v3714
        %v3757 = vpop.f32.mrf.mxu0
        %v3758 = vadd.f32 %v3738, %v3757
        %3759 = vdwg.mxu0
        %v3760 = vmax.f32 %v3758, 0.0
        %v3761 = vld [vmem:[#allocation6 + $0xa60] sm:$0x1]
        %s3763 = vtos %v3761
        %v3764 = vstv %s3763
        %v3766 = vmul.f32 %v3760, %v3764
        %v3767 = vld [vmem:[#allocation6 + $0x938] sm:$0xff]
        %v3768 = vld [vmem:[#allocation6 + $0x940] sm:$0xff]
        %v3769 = vld [vmem:[#allocation6 + $0x948] sm:$0xff]
        %v3770 = vld [vmem:[#allocation6 + $0x950] sm:$0xff]
        %v3771 = vld [vmem:[#allocation6 + $0x958] sm:$0xff]
        %v3772 = vld [vmem:[#allocation6 + $0x960] sm:$0xff]
        %v3773 = vld [vmem:[#allocation6 + $0x968] sm:$0x1]
        %v3774 = vld [vmem:[#allocation6 + $0x970] sm:$0xff]
        %v3775 = vld [vmem:[#allocation6 + $0x978] sm:$0xff]
        %v3776 = vld [vmem:[#allocation6 + $0x980] sm:$0xff]
        %v3777 = vld [vmem:[#allocation6 + $0x988] sm:$0xff]
        %v3778 = vld [vmem:[#allocation6 + $0x990] sm:$0xff]
        %v3779 = vld [vmem:[#allocation6 + $0x998] sm:$0xff]
        %v3780 = vld [vmem:[#allocation6 + $0x9a0] sm:$0x1]
        %v3782 = vsel %vm2785, %v3766, 0
        %v3785 = vsel %vm2789, %v3780, 0
        %3787 = vmatpush.msra.mxu0 0.0
        %3788 = vmatpush.msra.mxu0 0.0
        %3789 = vmatpush.msra.mxu0 0.0
        %3790 = vmatpush.msra.mxu0 0.0
        %3791 = vmatpush.msra.mxu0 0.0
        %3792 = vmatpush.msra.mxu0 0.0
        %3793 = vmatpush.msra.mxu0 0.0
        %3794 = vmatpush.msra.mxu0 0.0
        %3795 = vmatpush.msra.mxu0 0.0
        %3796 = vmatpush.msra.mxu0 %v3785
        %3797 = vmatpush.msra.mxu0 %v3779
        %3798 = vmatpush.msra.mxu0 %v3778
        %3799 = vmatpush.msra.mxu0 %v3777
        %3800 = vmatpush.msra.mxu0 %v3776
        %3801 = vmatpush.msra.mxu0 %v3775
        %3802 = vmatpush.msra.mxu0 %v3774
        %3803 = vmatmul.f32.gmra.mxu0 %v3782
        %v3804 = vpop.f32.mrf.mxu0
        %v3805 = vadd.f32 0.0, %v3804
        %3806 = vdwg.mxu0
        %v3808 = vsel %vm2789, %v3773, 0
        %3810 = vmatpush.msra.mxu0 0.0
        %3811 = vmatpush.msra.mxu0 0.0
        %3812 = vmatpush.msra.mxu0 0.0
        %3813 = vmatpush.msra.mxu0 0.0
        %3814 = vmatpush.msra.mxu0 0.0
        %3815 = vmatpush.msra.mxu0 0.0
        %3816 = vmatpush.msra.mxu0 0.0
        %3817 = vmatpush.msra.mxu0 0.0
        %3818 = vmatpush.msra.mxu0 0.0
        %3819 = vmatpush.msra.mxu0 %v3808
        %3820 = vmatpush.msra.mxu0 %v3772
        %3821 = vmatpush.msra.mxu0 %v3771
        %3822 = vmatpush.msra.mxu0 %v3770
        %3823 = vmatpush.msra.mxu0 %v3769
        %3824 = vmatpush.msra.mxu0 %v3768
        %3825 = vmatpush.msra.mxu0 %v3767
        %3826 = vmatmul.f32.gmra.mxu0 %v3580
        %v3827 = vpop.f32.mrf.mxu0
        %v3828 = vadd.f32 %v3805, %v3827
        %3829 = vdwg.mxu0
        %v3830 = vld [vmem:[#allocation6 + $0x9a8] sm:$0x1]
        %v3831 = vperm.slane %v3830, 0
        %v3832 = vadd.f32 %v3828, %v3831
        %v3833 = vmax.f32 %v3832, 0.0
        %v3834 = vld [vmem:[#allocation6 + $0x9b0] sm:$0xff]
        %v3835 = vld [vmem:[#allocation6 + $0x9b8] sm:$0xff]
        %v3836 = vld [vmem:[#allocation6 + $0x9c0] sm:$0xff]
        %v3837 = vld [vmem:[#allocation6 + $0x9c8] sm:$0xff]
        %v3838 = vld [vmem:[#allocation6 + $0x9d0] sm:$0xff]
        %v3839 = vld [vmem:[#allocation6 + $0x9d8] sm:$0xff]
        %v3840 = vld [vmem:[#allocation6 + $0x9e0] sm:$0x1]
        %v3841 = vld [vmem:[#allocation6 + $0x9e8] sm:$0xff]
        %v3842 = vld [vmem:[#allocation6 + $0x9f0] sm:$0xff]
        %v3843 = vld [vmem:[#allocation6 + $0x9f8] sm:$0xff]
        %v3844 = vld [vmem:[#allocation6 + $0xa00] sm:$0xff]
        %v3845 = vld [vmem:[#allocation6 + $0xa08] sm:$0xff]
        %v3846 = vld [vmem:[#allocation6 + $0xa10] sm:$0xff]
        %v3847 = vld [vmem:[#allocation6 + $0xa18] sm:$0x1]
        %v3849 = vsel %vm2785, %v3833, 0
        %v3852 = vsel %vm2789, %v3847, 0
        %3854 = vmatpush.msra.mxu0 0.0
        %3855 = vmatpush.msra.mxu0 0.0
        %3856 = vmatpush.msra.mxu0 0.0
        %3857 = vmatpush.msra.mxu0 0.0
        %3858 = vmatpush.msra.mxu0 0.0
        %3859 = vmatpush.msra.mxu0 0.0
        %3860 = vmatpush.msra.mxu0 0.0
        %3861 = vmatpush.msra.mxu0 0.0
        %3862 = vmatpush.msra.mxu0 0.0
        %3863 = vmatpush.msra.mxu0 %v3852
        %3864 = vmatpush.msra.mxu0 %v3846
        %3865 = vmatpush.msra.mxu0 %v3845
        %3866 = vmatpush.msra.mxu0 %v3844
        %3867 = vmatpush.msra.mxu0 %v3843
        %3868 = vmatpush.msra.mxu0 %v3842
        %3869 = vmatpush.msra.mxu0 %v3841
        %3870 = vmatmul.f32.gmra.mxu0 %v3849
        %v3871 = vpop.f32.mrf.mxu0
        %v3872 = vadd.f32 0.0, %v3871
        %3873 = vdwg.mxu0
        %v3875 = vsel %vm2789, %v3840, 0
        %3877 = vmatpush.msra.mxu0 0.0
        %3878 = vmatpush.msra.mxu0 0.0
        %3879 = vmatpush.msra.mxu0 0.0
        %3880 = vmatpush.msra.mxu0 0.0
        %3881 = vmatpush.msra.mxu0 0.0
        %3882 = vmatpush.msra.mxu0 0.0
        %3883 = vmatpush.msra.mxu0 0.0
        %3884 = vmatpush.msra.mxu0 0.0
        %3885 = vmatpush.msra.mxu0 0.0
        %3886 = vmatpush.msra.mxu0 %v3875
        %3887 = vmatpush.msra.mxu0 %v3839
        %3888 = vmatpush.msra.mxu0 %v3838
        %3889 = vmatpush.msra.mxu0 %v3837
        %3890 = vmatpush.msra.mxu0 %v3836
        %3891 = vmatpush.msra.mxu0 %v3835
        %3892 = vmatpush.msra.mxu0 %v3834
        %3893 = vmatmul.f32.gmra.mxu0 %v3189
        %v3894 = vpop.f32.mrf.mxu0
        %v3895 = vadd.f32 %v3872, %v3894
        %3896 = vdwg.mxu0
        %v3897 = vld [vmem:[#allocation6 + $0xa20] sm:$0x1]
        %v3898 = vperm.slane %v3897, 0
        %v3899 = vadd.f32 %v3895, %v3898
        %v3900 = vmax.f32 %v3899, 0.0
        %v3901 = vld [vmem:[#allocation6 + $0xa90] sm:$0x7f]
        %v3903 = vsel %vm422, %v2565, 0
        %v3906 = vsel %vm429, %v3901, 0
        %3908 = vmatpush.msra.mxu0 0.0
        %3909 = vmatpush.msra.mxu0 0.0
        %3910 = vmatpush.msra.mxu0 0.0
        %3911 = vmatpush.msra.mxu0 0.0
        %3912 = vmatpush.msra.mxu0 0.0
        %3913 = vmatpush.msra.mxu0 0.0
        %3914 = vmatpush.msra.mxu0 0.0
        %3915 = vmatpush.msra.mxu0 0.0
        %3916 = vmatpush.msra.mxu0 0.0
        %3917 = vmatpush.msra.mxu0 0.0
        %3918 = vmatpush.msra.mxu0 0.0
        %3919 = vmatpush.msra.mxu0 0.0
        %3920 = vmatpush.msra.mxu0 0.0
        %3921 = vmatpush.msra.mxu0 0.0
        %3922 = vmatpush.msra.mxu0 0.0
        %3923 = vmatpush.msra.mxu0 %v3906
        %3924 = vmatmul.f32.gmra.mxu0 %v3903
        %v3925 = vpop.f32.mrf.mxu0
        %v3926 = vadd.f32 0.0, %v3925
        %3927 = vdwg.mxu0
        %v3928 = vmul.f32 %v3766, %v3926
        %v3929 = vld [vmem:[#allocation6 + $0xa98] sm:$0xff]
        %v3930 = vld [vmem:[#allocation6 + $0xaa0] sm:$0xff]
        %v3931 = vld [vmem:[#allocation6 + $0xaa8] sm:$0xff]
        %v3932 = vld [vmem:[#allocation6 + $0xab0] sm:$0xff]
        %v3933 = vld [vmem:[#allocation6 + $0xab8] sm:$0xff]
        %v3934 = vld [vmem:[#allocation6 + $0xac0] sm:$0xff]
        %v3935 = vld [vmem:[#allocation6 + $0xac8] sm:$0x1]
        %v3937 = vsel %vm2785, %v3928, 0
        %v3940 = vsel %vm2789, %v3935, 0
        %3942 = vmatpush.msra.mxu0 0.0
        %3943 = vmatpush.msra.mxu0 0.0
        %3944 = vmatpush.msra.mxu0 0.0
        %3945 = vmatpush.msra.mxu0 0.0
        %3946 = vmatpush.msra.mxu0 0.0
        %3947 = vmatpush.msra.mxu0 0.0
        %3948 = vmatpush.msra.mxu0 0.0
        %3949 = vmatpush.msra.mxu0 0.0
        %3950 = vmatpush.msra.mxu0 0.0
        %3951 = vmatpush.msra.mxu0 %v3940
        %3952 = vmatpush.msra.mxu0 %v3934
        %3953 = vmatpush.msra.mxu0 %v3933
        %3954 = vmatpush.msra.mxu0 %v3932
        %3955 = vmatpush.msra.mxu0 %v3931
        %3956 = vmatpush.msra.mxu0 %v3930
        %3957 = vmatpush.msra.mxu0 %v3929
        %3958 = vmatmul.f32.gmra.mxu0 %v3937
        %v3959 = vpop.f32.mrf.mxu0
        %v3960 = vadd.f32 0.0, %v3959
        %3961 = vdwg.mxu0
        %v3962 = vadd.f32 %v2530, %v3960
        %3963 = vst.msk [vmem:[%s363] sm:$0x3] %vm2533, %v3962
        %3965 = vrot.lane.b32.xlu0 %v2530, 7
        %v3966 = vpop.permute.xlu0 %3965
        %vm3968 = vcmask 107576
        %3969 = vst.msk [vmem:[%s363] sm:$0x3] %vm3968, %v3966
        %3971 = vrot.lane.b32.xlu0 %v3900, 14
        %v3972 = vpop.permute.xlu0 %3971
        %vm3974 = vcmask 509040
        %3975 = vst.msk [vmem:[%s363] sm:$0x3] %vm3974, %v3972
        %3976 = vrot.lane.b32.xlu0 %v2891, 14
        %v3977 = vpop.permute.xlu0 %3976
        %vm3979 = vcmask 910840
        %3980 = vst.msk [vmem:[%s363] sm:$0x3] %vm3979, %v3977
        %3981 = vrot.lane.b32.xlu0 %v3548, 63
        %v3982 = vpop.permute.xlu0 %3981
        %v3983 = vrot.slane %v3982, 6
        %vm3984 = vcmask 515072
        %v3985 = vsel %vm3984, %v3983, %v3982
        %vm3987 = vcmask 1042304
        %vm3988 = vcmask 265218
        %vm3989 = vmor %vm3988, %vm3987
        %3990 = vst.msk [vmem:[%s363] sm:$0xf] %vm3989, %v3985
        %3991 = vrot.lane.b32.xlu0 %v379, 33
        %v3992 = vpop.permute.xlu0 %3991
        %vm3994 = vcmask 320776
        %3995 = vst.msk [vmem:[%s363 + $0x2] sm:$0x3] %vm3994, %v3992
        %3996 = vst.sshfl [vmem:[#allocation1] sm:$0xff pattern:$0x73625140] %v379
        %s3997 = scalar_lea.vmem [#allocation1], 1
        %v3998 = vld [vmem:[%s3997] ss:$4 sm:$0xff]
        %3999 = vrot.lane.b32.xlu0 %v3998, 40
        %v4000 = vpop.permute.xlu0 %3999
        %vm4002 = vcmask 378176
        %4003 = vst.msk [vmem:[%s363 + $0x2] sm:$0x3] %vm4002, %v4000
        %vm4004 = vcmask 1041784
        %4005 = vst.msk [vmem:[%s363 + $0x2] sm:$0x3] %vm4004, 0.0
        %v4006 = vrot.slane %v2530, 2
        %v4008 = vsel %vm392, %v3962, %v2632
        %v4009 = vsel %vm3716, %v4008, %v2632
        %v4010 = vsel %vm3309, %v4009, %v4006
        %4011 = vst.msk [vmem:[#allocation2] sm:$0xff] %vm422, %v4010
        %4012 = vst.msk [vmem:[#allocation2 + $0x8] sm:$0x3] %vm2533, %v381
        %4014 = vrot.lane.b32.xlu0 %v3900, 49
        %v4015 = vpop.permute.xlu0 %4014
        %4017 = vrot.lane.b32.xlu0 %v3548, 49
        %v4018 = vpop.permute.xlu0 %4017
        %v4020 = vsel %vm2785, %v2997, %v4015
        %vm4021 = vcmask 801792
        %v4022 = vsel %vm4021, %v4020, %v4018
        %v4024 = vrot.slane %v4018, 6
        %v4025 = vsel %vm392, %v4022, %v4024
        %vm4027 = vcmask 150530
        %vm4028 = vmor %vm4027, %vm392
        %4029 = vst.msk [vmem:[#allocation3] sm:$0xf] %vm4028, %v4025
        %p4030 = scmp.lt.s32.totalorder %s23, 3
        %s4031 = scalar_select %p4030, %s23, 3
        %s4032 = smul.addr %s4031, 2
        %s4033 = smul.addr %s4032, 2
        %s4034 = scalar_lea.vmem %s7, %s4033
        // Predicated region
        $region73: #{forward.1} parent=47 // pred_check
          %p4035 = pneg %p193
        $region74: #{forward.1} parent=47 // pred_check_branch
          %4037 = sbr.rel (%p4035) target = $region76
        $region75: #{forward.1} parent=47 // pred_region
          _
        $region76: #{forward.1} parent=47 // pred_fallthru
          _
      $region48: #{forward.1} parent=5 // pred_fallthru
        _
      %p4038 = scmp.le.s32.totalorder 2, %s18
      // Predicated region
      $region77: #{forward.1} parent=5 // pred_check
        %p4039 = pneg %p4038
      $region78: #{forward.1} parent=5 // pred_check_branch
        %4041 = sbr.rel (%p4039) target = $region80
      $region79: #{forward.1} parent=5 // pred_region
        %s4042 = ssub.s32 %s18, 2
        // Predicated region
        $region81: #{forward.1} parent=79 // pred_check
          %p4043 = pneg %p199
        $region82: #{forward.1} parent=79 // pred_check_branch
          %4045 = sbr.rel (%p4043) target = $region84
        $region83: #{forward.1} parent=79 // pred_region
          %p4046 = scmp.lt.s32.totalorder %s24, 3
          %s4047 = scalar_select %p4046, %s24, 3
          %s4048 = smul.addr %s4047, 2
          %s4049 = smul.addr %s4048, 2
          %s4050 = scalar_lea.vmem %s7, %s4049
        $region84: #{forward.1} parent=79 // pred_fallthru
          _
      $region80: #{forward.1} parent=5 // pred_fallthru
        _
    $region6: #{forward.1} parent=1 // loop_footer
      %s22 = sadd.s32 1, %s18
    $region7: #{forward.1} parent=1 // loop_footer_branch
      %17 = sbr.rel target = $region3
    $region8: #{forward.1} parent=1 // loop_exit
      _
    %4051 = vsyncpa [#allocation5], 1
    %s4052 = scalar_lea.sflag [#allocation5], 1
    %4053 = vsyncpa %s4052, 1
    %4054 = vsyncpa [#allocation7], 1
    %4055 = vsyncpa [#allocation10], 1

</llo_original>
